<compile_context>
chip_gen: v7x
topology: tpu7x:2x2x1
jax: 0.10.0
libtpu: 0.0.40
codegen_flags: <defaults>
</compile_context>

<pallas_src>
import jax
import jax.numpy as jnp
from jax.experimental import pallas as pl
from jax.experimental.pallas import tpu as pltpu

# ----------------------------- sizes (small) -----------------------------
V = 50          # vocab size (dicts.size())
W = 32          # opt.word_vec_size
E = 32          # opt.enc_rnn_size
H = 32          # opt.dec_rnn_size
A = 32          # opt.att_vec_size
L = 2           # opt.layers  (kernel is written for L == 2)
P = 2           # opt.maxout_pool_size
B = 8           # batch (multiple of 8 sublanes)
T = 6           # target length
S = 8           # source length
PAD = 0         # S2S.Constants.PAD

LANE = 128      # vreg lane width / output-slab width


# ------------------------------- wrapper ----------------------------------
def decoder_forward(input_ids, hidden, context, src_pad_mask, init_att, prm,
                    *, maxout_pool=P):
    """Mirrors Decoder.forward (evaluate=True, nlu=False path).

    input_ids:    (T, B) int32
    hidden:       (L, B, H)
    context:      (B, S, E)   (already batch-major, i.e. context.transpose(0,1))
    src_pad_mask: (B, S) float (1.0 at padded source positions)
    init_att:     (B, E)
    Returns (g_outputs, c_outputs, copyGateOutputs, hidden, attn, cur_context,
             g_hiddens).
    """
    f32 = jnp.float32

    # embedding lookup (nn.Embedding with padding row already zeroed)
    emb = jnp.take(prm["emb_table"], input_ids, axis=0)        # (T, B, W)
    Tn, Bn, Wn = emb.shape
    _, Sn, En = context.shape
    Ln, _, Hn = hidden.shape
    An = prm["wq_t"].shape[1]
    Pn = maxout_pool
    HPn = Hn // Pn

    G3 = 3 * Hn                         # GRU gate width
    TAIL_W = 2 * HPn + 1                # [maxout pool0 | maxout pool1 | copy]
    TAIL_OFF = LANE + An                # tail column start inside 2-vreg slabs
    FUSED_W = LANE + G3                 # width of each fused weight matrix
    OH0 = 32                            # output-slab lane offsets
    OH1 = OH0 + Hn
    OCTX = OH1 + Hn

    assert Ln == 2 and Hn == En == An and Sn <= Hn, "packing assumes these sizes"
    assert G3 <= LANE and An + TAIL_W <= LANE
    assert HPn + Sn + 1 <= OH0 and OCTX + En == LANE

    # ---------------- weight packing (once, plain XLA) ----------------
    wih0_t = prm["w_ih0_t"]                 # (W+E, 3H), rows: [emb | cur_ctx]
    wih0_e, wih0_c = wih0_t[:Wn], wih0_t[Wn:]

    wr = prm["wr_full_t"]                   # (W+H+E, H), rows: [emb | out | ctx]
    def pool_cols(w):                       # split readout cols by maxout pool
        return jnp.concatenate([w[:, p::Pn] for p in range(Pn)], axis=1)
    wr_e = pool_cols(wr[:Wn])               # (W, 2*HP)
    wr_o = pool_cols(wr[Wn:Wn + Hn])        # (H, 2*HP)
    wr_c = pool_cols(wr[Wn + Hn:])          # (E, 2*HP)
    br_pool = jnp.concatenate([prm["br_full"][p::Pn] for p in range(Pn)])  # (2HP,)
    wc_o = prm["wc_t"][:Hn]                 # (H, 1)  copySwitch: output rows
    wc_c = prm["wc_t"][Hn:]                 # (E, 1)  copySwitch: context rows

    z = lambda r, c: jnp.zeros((r, c), f32)
    # Fusion A: h0_new -> [gi1 (0:96) | pad | gh0_next (128:224)]
    W_A = jnp.concatenate([prm["w_ih1_t"], z(Hn, LANE - G3), prm["w_hh0_t"]],
                          axis=1)
    # Fusion B: h1_new -> [q (0:A) | out tail (A:A+33) | pad | gh1_next (128:224)]
    W_B = jnp.concatenate([prm["wq_t"], wr_o, wc_o,
                           z(Hn, LANE - An - TAIL_W), prm["w_hh1_t"]], axis=1)
    # Fusion C: wctx -> [ctx gates_next (0:96) | pad | ctx tail (160:193) | pad]
    W_C = jnp.concatenate([wih0_c, z(En, TAIL_OFF - G3), wr_c, wc_c,
                           z(En, FUSED_W - TAIL_OFF - TAIL_W)], axis=1)
    w_slab = jnp.stack([W_A, W_B, W_C])     # (3, H, FUSED_W)

    # bias / constant slab (4, 1, LANE): [b_hh0; b_ih1; b_hh1; wv]
    def bias_row(v):
        v = jnp.asarray(v, f32).reshape(1, -1)
        return jnp.pad(v, ((0, 0), (0, LANE - v.shape[1])))
    bias_slab = jnp.stack([bias_row(prm["b_hh0"]), bias_row(prm["b_ih1"]),
                           bias_row(prm["b_hh1"]), bias_row(prm["wv"])])

    # ---------- hoisted, non-recurrent precompute (plain XLA) ----------
    # per-token activation slab: [emb_gi+b_ih0 (0:96) | 0 | emb_tail+b_tail (160:193) | 0]
    b_ih0 = prm["b_ih0"].reshape(-1)
    b_tail = jnp.concatenate([br_pool, prm["bc"].reshape(-1)])          # (33,)
    w_emb_tail = jnp.concatenate([wr_e, z(Wn, 1)], axis=1)              # (W, 33)
    emb_gi = jnp.einsum("tbw,wk->tbk", emb, wih0_e) + b_ih0             # (T,B,3H)
    emb_tail = jnp.einsum("tbw,wk->tbk", emb, w_emb_tail) + b_tail      # (T,B,33)
    act_slab = jnp.concatenate(
        [emb_gi,
         jnp.zeros((Tn, Bn, TAIL_OFF - G3), f32),
         emb_tail,
         jnp.zeros((Tn, Bn, 2 * LANE - TAIL_OFF - TAIL_W), f32)], axis=-1)

    # attention precompute slab: [linear_pre(context); context]
    pre = jnp.einsum("bse,ea->bsa", context, prm["wpre_t"]) \
        + prm["bpre"].reshape(1, 1, -1)                                 # (B,S,A)
    att_slab = jnp.stack([pre, context])                                # (2,B,S,A)

    # initial-state slab: [h0; h1; init_att; additive mask (padded)]
    neg = src_pad_mask * (-1000000.0)
    neg_p = jnp.pad(neg, ((0, 0), (0, Hn - Sn)))
    state_slab = jnp.stack([hidden[0], hidden[1], init_att, neg_p])     # (4,B,H)

    # ------------------------------- kernel --------------------------------
    def kernel(act_ref, w_ref, bias_ref, att_ref, state_ref, out_ref):
        # loop-invariant loads (held in vregs across the unrolled time loop)
        wA = w_ref[0]
        wB = w_ref[1]
        wC = w_ref[2]
        b_hh0 = bias_ref[0][:, :G3]
        b_ih1 = bias_ref[1][:, :G3]
        b_hh1 = bias_ref[2][:, :G3]
        wv = bias_ref[3][:, :An]                     # (1, A)
        pre_v = att_ref[0]                           # (B, S, A)
        ctx_v = att_ref[1]                           # (B, S, E)
        neg_v = state_ref[3][:, :Sn]                 # (B, S) additive mask
        h0 = state_ref[0][...]                       # (B, H)
        h1 = state_ref[1][...]
        cur_ctx = state_ref[2][...]                  # (B, E)
        pad_blk = jnp.zeros((Bn, OH0 - (HPn + Sn + 1)), f32)

        def gru(gi, gh, hprev):
            r = jax.nn.sigmoid(gi[:, :Hn] + gh[:, :Hn])
            u = jax.nn.sigmoid(gi[:, Hn:2 * Hn] + gh[:, Hn:2 * Hn])
            n = jnp.tanh(gi[:, 2 * Hn:] + r * gh[:, 2 * Hn:])
            return (1.0 - u) * n + u * hprev

        # prologue: step-0 carried partial products from the initial state
        gh0_c = jnp.dot(h0, wA, preferred_element_type=f32)[:, LANE:LANE + G3]
        gh1_c = jnp.dot(h1, wB, preferred_element_type=f32)[:, LANE:LANE + G3]
        cgate_c = jnp.dot(cur_ctx, wC, preferred_element_type=f32)[:, :G3]

        for t in range(Tn):
            act_t = act_ref[t]                       # (B, 2*LANE)

            # --- StackedGRU layer 0 (emb part + bias hoisted into act_slab) ---
            gi0 = act_t[:, :G3] + cgate_c
            gh0 = gh0_c + b_hh0
            h0 = gru(gi0, gh0, h0)
            # TODO(synk): inter-layer nn.Dropout treated as identity (eval / p=0).

            # --- fused: gi1 (this step) + gh0 (next step) ---
            fusA = jnp.dot(h0, wA, preferred_element_type=f32)
            gh0_c = fusA[:, LANE:LANE + G3]
            gi1 = fusA[:, :G3] + b_ih1
            gh1 = gh1_c + b_hh1
            h1 = gru(gi1, gh1, h1)

            # --- fused: attention query + readout/copy (this step) + gh1 (next) ---
            fusB = jnp.dot(h1, wB, preferred_element_type=f32)
            gh1_c = fusB[:, LANE:LANE + G3]
            q = fusB[:, :An]

            # --- ConcatAttention with hand-rolled softmax ---
            # no max-subtraction: |energy| <= sum|wv| (post-tanh), masked entries
            # are -1e6 so exp underflows to 0.  Assumes no row is fully masked.
            tmp = jnp.tanh(pre_v + q[:, None, :])                  # (B, S, A)
            energy = jnp.sum(tmp * wv, axis=-1) + neg_v            # (B, S)
            e = jnp.exp(energy)
            denom = jnp.sum(e, axis=-1, keepdims=True)
            score = e * pl.reciprocal(denom, approx=True)          # (B, S)
            wctx = jnp.sum(score[:, :, None] * ctx_v, axis=1)      # (B, E)

            # --- fused: next-step layer-0 ctx gates + this step's ctx tail ---
            fusC = jnp.dot(wctx, wC, preferred_element_type=f32)
            cgate_c = fusC[:, :G3]

            # fused copy switch + readout + maxout (all operands at lane offset A)
            tail = (act_t[:, TAIL_OFF:TAIL_OFF + TAIL_W]
                    + fusB[:, An:An + TAIL_W]
                    + fusC[:, TAIL_OFF:TAIL_OFF + TAIL_W])         # (B, 2HP+1)
            g_out = jnp.maximum(tail[:, :HPn], tail[:, HPn:2 * HPn])
            copy_p = jax.nn.sigmoid(tail[:, 2 * HPn:])
            # TODO(synk): output nn.Dropout treated as identity (eval / p=0).

            # single lane-dense per-step store:
            # [g_out | score | copy | pad | h0 | h1 | wctx] = LANE columns
            out_ref[t] = jnp.concatenate(
                [g_out, score, copy_p, pad_blk, h0, h1, wctx], axis=1)

    vmem = pl.BlockSpec(memory_space=pltpu.MemorySpace.VMEM)
    out = pl.pallas_call(
        kernel,
        out_shape=jax.ShapeDtypeStruct((Tn, Bn, LANE), f32),
        in_specs=[vmem] * 5,
        out_specs=vmem,
    )(act_slab, w_slab, bias_slab, att_slab, state_slab)

    # -------- split the packed output slab back into the module outputs --------
    g_outputs = out[:, :, :HPn]                                  # (T, B, HP)
    c_outputs = out[:, :, HPn:HPn + Sn]                          # (T, B, S)
    copy_out = out[:, :, HPn + Sn:HPn + Sn + 1]                  # (T, B, 1)
    g_hiddens = jnp.stack([out[:, :, OH0:OH0 + Hn],
                           out[:, :, OH1:OH1 + Hn]], axis=1)     # (T, L, B, H)
    hidden_fin = g_hiddens[-1]                                   # (L, B, H)
    cur_context = out[-1, :, OCTX:OCTX + En]                     # (B, E)
    attn = c_outputs[-1]                                         # (B, S)
    return g_outputs, c_outputs, copy_out, hidden_fin, attn, cur_context, g_hiddens


# --------------------------- pure-JAX reference ----------------------------
def reference_forward(input_ids, hidden, context, mask, init_att, prm,
                      *, maxout_pool=P):
    emb = jnp.take(prm["emb_table"], input_ids, axis=0)
    Tn, Bn, _ = emb.shape
    Hn = hidden.shape[2]
    Pn = maxout_pool
    pre = jnp.einsum("bse,ea->bsa", context, prm["wpre_t"]) \
        + prm["bpre"].reshape(1, 1, -1)
    h0, h1 = hidden[0], hidden[1]
    cur_ctx = init_att
    g_outs, c_outs, copy_outs, ghids = [], [], [], []

    def gru(x, hp, w_ih, w_hh, b_ih, b_hh):
        gi = x @ w_ih + b_ih
        gh = hp @ w_hh + b_hh
        r = jax.nn.sigmoid(gi[:, :Hn] + gh[:, :Hn])
        z = jax.nn.sigmoid(gi[:, Hn:2 * Hn] + gh[:, Hn:2 * Hn])
        n = jnp.tanh(gi[:, 2 * Hn:] + r * gh[:, 2 * Hn:])
        return (1.0 - z) * n + z * hp

    for t in range(Tn):
        emb_t = emb[t]
        x = jnp.concatenate([emb_t, cur_ctx], axis=1)
        h0 = gru(x, h0, prm["w_ih0_t"], prm["w_hh0_t"], prm["b_ih0"], prm["b_hh0"])
        h1 = gru(h0, h1, prm["w_ih1_t"], prm["w_hh1_t"], prm["b_ih1"], prm["b_hh1"])
        out = h1
        q = out @ prm["wq_t"]
        tmp = jnp.tanh(pre + q[:, None, :])
        energy = jnp.sum(tmp * prm["wv"].reshape(1, 1, -1), axis=-1)
        energy = energy * (1.0 - mask) + mask * (-1000000.0)
        score = jax.nn.softmax(energy, axis=1)
        wctx = jnp.sum(score[:, :, None] * context, axis=1)
        cp = jax.nn.sigmoid(jnp.concatenate([out, wctx], 1) @ prm["wc_t"]
                            + prm["bc"])
        ro = jnp.concatenate([emb_t, out, wctx], 1) @ prm["wr_full_t"] \
            + prm["br_full"]
        g = ro.reshape(Bn, Hn // Pn, Pn).max(axis=-1)
        g_outs.append(g); c_outs.append(score); copy_outs.append(cp)
        ghids.append(jnp.stack([h0, h1]))
        cur_ctx = wctx
    return (jnp.stack(g_outs), jnp.stack(c_outs), jnp.stack(copy_outs),
            jnp.stack([h0, h1]), c_outs[-1], cur_ctx, jnp.stack(ghids))


# --------------------------------- main ------------------------------------
if __name__ == "__main__":
    key = jax.random.PRNGKey(0)
    ks = jax.random.split(key, 24)

    def nrm(k, shape, scale=0.1):
        return (scale * jax.random.normal(k, shape)).astype(jnp.float32)

    emb_table = nrm(ks[0], (V, W)).at[PAD].set(0.0)   # padding_idx=PAD

    prm = dict(
        emb_table=emb_table,
        w_ih0_t=nrm(ks[1], (W + E, 3 * H)), w_hh0_t=nrm(ks[2], (H, 3 * H)),
        b_ih0=nrm(ks[3], (1, 3 * H)), b_hh0=nrm(ks[4], (1, 3 * H)),
        w_ih1_t=nrm(ks[5], (H, 3 * H)), w_hh1_t=nrm(ks[6], (H, 3 * H)),
        b_ih1=nrm(ks[7], (1, 3 * H)), b_hh1=nrm(ks[8], (1, 3 * H)),
        wpre_t=nrm(ks[9], (E, A)), bpre=nrm(ks[10], (1, A)),
        wq_t=nrm(ks[11], (H, A)), wv=nrm(ks[12], (1, A)),
        wc_t=nrm(ks[13], (H + E, 1)), bc=nrm(ks[16], (1, 1)),
        wr_full_t=nrm(ks[14], (W + H + E, H)), br_full=nrm(ks[15], (H,)),
    )
    # TODO(synk): self.nextEnt_gate, the nextEnt_embs / wordEmb / nextCounts host
    # loops, the training-mode mod_input rewrite and the nlu / reverse_rnn
    # branch are host-side data-dependent or dead on this forward path.

    input_ids = jax.random.randint(ks[17], (T, B), 1, V).astype(jnp.int32)
    hidden0 = nrm(ks[18], (L, B, H))
    context = nrm(ks[19], (B, S, E))        # == enc context.transpose(0, 1)
    init_att = nrm(ks[20], (B, E))
    src_lens = jnp.array([S, S - 2, S - 1, S, S - 3, S, S - 1, S - 4])
    src_pad_mask = (jnp.arange(S)[None, :] >= src_lens[:, None]).astype(jnp.float32)

    fwd = jax.jit(decoder_forward)
    outs = fwd(input_ids, hidden0, context, src_pad_mask, init_att, prm)
    outs = jax.block_until_ready(outs)

    refs = reference_forward(input_ids, hidden0, context, src_pad_mask,
                             init_att, prm)
    names = ["g_outputs", "c_outputs", "copyGateOutputs", "hidden", "attn",
             "cur_context", "g_hiddens"]
    # default TPU dot precision (bf16 operands) + approximate reciprocal in the
    # softmax -> compare with a loose-ish tolerance against the f32 reference.
    for name, a, b in zip(names, outs, refs):
        assert a.shape == b.shape, (name, a.shape, b.shape)
        if not jnp.allclose(a, b, atol=2e-2, rtol=2e-2):
            err = float(jnp.max(jnp.abs(a - b)))
            raise AssertionError(f"mismatch in {name}: max abs err {err}")

    print("KERNEL_OK")
</pallas_src>

<mosaic_0001>
module attributes {stable_mosaic.version = 11 : i64} {
  func.func @kernel(%arg0: memref<6x8x256xf32, #tpu.memory_space<vmem>>, %arg1: memref<3x32x224xf32, #tpu.memory_space<vmem>>, %arg2: memref<4x1x128xf32, #tpu.memory_space<vmem>>, %arg3: memref<2x8x8x32xf32, #tpu.memory_space<vmem>>, %arg4: memref<4x8x32xf32, #tpu.memory_space<vmem>>, %arg5: memref<6x8x128xf32, #tpu.memory_space<vmem>>) attributes {dimension_semantics = [], scalar_prefetch = 0 : i64, scratch_operands = 0 : i64, tpu.core_type = #tpu.core_type<tc>} {
    %c0 = arith.constant 0 : index
    %c0_0 = arith.constant 0 : index
    %c0_1 = arith.constant 0 : index
    %0 = vector.load %arg1[%c0, %c0_0, %c0_1] : memref<3x32x224xf32, #tpu.memory_space<vmem>>, vector<1x32x224xf32>
    %1 = vector.shape_cast %0 : vector<1x32x224xf32> to vector<32x224xf32>
    %c1 = arith.constant 1 : index
    %c0_2 = arith.constant 0 : index
    %c0_3 = arith.constant 0 : index
    %2 = vector.load %arg1[%c1, %c0_2, %c0_3] : memref<3x32x224xf32, #tpu.memory_space<vmem>>, vector<1x32x224xf32>
    %3 = vector.shape_cast %2 : vector<1x32x224xf32> to vector<32x224xf32>
    %c2 = arith.constant 2 : index
    %c0_4 = arith.constant 0 : index
    %c0_5 = arith.constant 0 : index
    %4 = vector.load %arg1[%c2, %c0_4, %c0_5] : memref<3x32x224xf32, #tpu.memory_space<vmem>>, vector<1x32x224xf32>
    %5 = vector.shape_cast %4 : vector<1x32x224xf32> to vector<32x224xf32>
    %c0_6 = arith.constant 0 : index
    %c0_7 = arith.constant 0 : index
    %c0_8 = arith.constant 0 : index
    %6 = vector.load %arg2[%c0_6, %c0_7, %c0_8] : memref<4x1x128xf32, #tpu.memory_space<vmem>>, vector<1x1x128xf32>
    %7 = vector.shape_cast %6 : vector<1x1x128xf32> to vector<1x128xf32>
    %8 = vector.extract_strided_slice %7 {offsets = [0, 0], sizes = [1, 96], strides = [1, 1]} : vector<1x128xf32> to vector<1x96xf32>
    %c1_9 = arith.constant 1 : index
    %c0_10 = arith.constant 0 : index
    %c0_11 = arith.constant 0 : index
    %9 = vector.load %arg2[%c1_9, %c0_10, %c0_11] : memref<4x1x128xf32, #tpu.memory_space<vmem>>, vector<1x1x128xf32>
    %10 = vector.shape_cast %9 : vector<1x1x128xf32> to vector<1x128xf32>
    %11 = vector.extract_strided_slice %10 {offsets = [0, 0], sizes = [1, 96], strides = [1, 1]} : vector<1x128xf32> to vector<1x96xf32>
    %c2_12 = arith.constant 2 : index
    %c0_13 = arith.constant 0 : index
    %c0_14 = arith.constant 0 : index
    %12 = vector.load %arg2[%c2_12, %c0_13, %c0_14] : memref<4x1x128xf32, #tpu.memory_space<vmem>>, vector<1x1x128xf32>
    %13 = vector.shape_cast %12 : vector<1x1x128xf32> to vector<1x128xf32>
    %14 = vector.extract_strided_slice %13 {offsets = [0, 0], sizes = [1, 96], strides = [1, 1]} : vector<1x128xf32> to vector<1x96xf32>
    %c3 = arith.constant 3 : index
    %c0_15 = arith.constant 0 : index
    %c0_16 = arith.constant 0 : index
    %15 = vector.load %arg2[%c3, %c0_15, %c0_16] : memref<4x1x128xf32, #tpu.memory_space<vmem>>, vector<1x1x128xf32>
    %16 = vector.shape_cast %15 : vector<1x1x128xf32> to vector<1x128xf32>
    %17 = vector.extract_strided_slice %16 {offsets = [0, 0], sizes = [1, 32], strides = [1, 1]} : vector<1x128xf32> to vector<1x32xf32>
    %c0_17 = arith.constant 0 : index
    %c0_18 = arith.constant 0 : index
    %c0_19 = arith.constant 0 : index
    %c0_20 = arith.constant 0 : index
    %18 = vector.load %arg3[%c0_17, %c0_18, %c0_19, %c0_20] : memref<2x8x8x32xf32, #tpu.memory_space<vmem>>, vector<1x8x8x32xf32>
    %19 = vector.shape_cast %18 : vector<1x8x8x32xf32> to vector<8x8x32xf32>
    %c1_21 = arith.constant 1 : index
    %c0_22 = arith.constant 0 : index
    %c0_23 = arith.constant 0 : index
    %c0_24 = arith.constant 0 : index
    %20 = vector.load %arg3[%c1_21, %c0_22, %c0_23, %c0_24] : memref<2x8x8x32xf32, #tpu.memory_space<vmem>>, vector<1x8x8x32xf32>
    %21 = vector.shape_cast %20 : vector<1x8x8x32xf32> to vector<8x8x32xf32>
    %c3_25 = arith.constant 3 : index
    %c0_26 = arith.constant 0 : index
    %c0_27 = arith.constant 0 : index
    %22 = vector.load %arg4[%c3_25, %c0_26, %c0_27] : memref<4x8x32xf32, #tpu.memory_space<vmem>>, vector<1x8x32xf32>
    %23 = vector.shape_cast %22 : vector<1x8x32xf32> to vector<8x32xf32>
    %24 = vector.extract_strided_slice %23 {offsets = [0, 0], sizes = [8, 8], strides = [1, 1]} : vector<8x32xf32> to vector<8x8xf32>
    %c0_28 = arith.constant 0 : index
    %c0_29 = arith.constant 0 : index
    %c0_30 = arith.constant 0 : index
    %25 = vector.load %arg4[%c0_28, %c0_29, %c0_30] : memref<4x8x32xf32, #tpu.memory_space<vmem>>, vector<1x8x32xf32>
    %26 = vector.shape_cast %25 : vector<1x8x32xf32> to vector<8x32xf32>
    %c1_31 = arith.constant 1 : index
    %c0_32 = arith.constant 0 : index
    %c0_33 = arith.constant 0 : index
    %27 = vector.load %arg4[%c1_31, %c0_32, %c0_33] : memref<4x8x32xf32, #tpu.memory_space<vmem>>, vector<1x8x32xf32>
    %28 = vector.shape_cast %27 : vector<1x8x32xf32> to vector<8x32xf32>
    %c2_34 = arith.constant 2 : index
    %c0_35 = arith.constant 0 : index
    %c0_36 = arith.constant 0 : index
    %29 = vector.load %arg4[%c2_34, %c0_35, %c0_36] : memref<4x8x32xf32, #tpu.memory_space<vmem>>, vector<1x8x32xf32>
    %30 = vector.shape_cast %29 : vector<1x8x32xf32> to vector<8x32xf32>
    %cst = arith.constant 0.000000e+00 : f32
    %31 = vector.broadcast %cst : f32 to vector<8x7xf32>
    %cst_37 = arith.constant dense<0.000000e+00> : vector<8x224xf32>
    %32 = tpu.matmul %26, %1, %cst_37 {dimension_numbers = #tpu.dot_dimension_numbers<[1], [0], [0], [1], [0, 0, 1, 1], [], []>} : vector<8x32xf32>, vector<32x224xf32>, vector<8x224xf32> -> vector<8x224xf32>
    %33 = vector.extract_strided_slice %32 {offsets = [0, 128], sizes = [8, 96], strides = [1, 1]} : vector<8x224xf32> to vector<8x96xf32>
    %cst_38 = arith.constant dense<0.000000e+00> : vector<8x224xf32>
    %34 = tpu.matmul %28, %3, %cst_38 {dimension_numbers = #tpu.dot_dimension_numbers<[1], [0], [0], [1], [0, 0, 1, 1], [], []>} : vector<8x32xf32>, vector<32x224xf32>, vector<8x224xf32> -> vector<8x224xf32>
    %35 = vector.extract_strided_slice %34 {offsets = [0, 128], sizes = [8, 96], strides = [1, 1]} : vector<8x224xf32> to vector<8x96xf32>
    %cst_39 = arith.constant dense<0.000000e+00> : vector<8x224xf32>
    %36 = tpu.matmul %30, %5, %cst_39 {dimension_numbers = #tpu.dot_dimension_numbers<[1], [0], [0], [1], [0, 0, 1, 1], [], []>} : vector<8x32xf32>, vector<32x224xf32>, vector<8x224xf32> -> vector<8x224xf32>
    %37 = vector.extract_strided_slice %36 {offsets = [0, 0], sizes = [8, 96], strides = [1, 1]} : vector<8x224xf32> to vector<8x96xf32>
    %c0_40 = arith.constant 0 : index
    %c0_41 = arith.constant 0 : index
    %c0_42 = arith.constant 0 : index
    %38 = vector.load %arg0[%c0_40, %c0_41, %c0_42] : memref<6x8x256xf32, #tpu.memory_space<vmem>>, vector<1x8x256xf32>
    %39 = vector.shape_cast %38 : vector<1x8x256xf32> to vector<8x256xf32>
    %40 = vector.extract_strided_slice %39 {offsets = [0, 0], sizes = [8, 96], strides = [1, 1]} : vector<8x256xf32> to vector<8x96xf32>
    %41 = arith.addf %40, %37 : vector<8x96xf32>
    %42 = vector.broadcast %8 : vector<1x96xf32> to vector<8x96xf32>
    %43 = arith.addf %33, %42 : vector<8x96xf32>
    %44 = vector.extract_strided_slice %41 {offsets = [0, 0], sizes = [8, 32], strides = [1, 1]} : vector<8x96xf32> to vector<8x32xf32>
    %45 = vector.extract_strided_slice %43 {offsets = [0, 0], sizes = [8, 32], strides = [1, 1]} : vector<8x96xf32> to vector<8x32xf32>
    %46 = arith.addf %44, %45 : vector<8x32xf32>
    %47 = arith.negf %46 : vector<8x32xf32>
    %48 = math.exp %47 : vector<8x32xf32>
    %cst_43 = arith.constant 1.000000e+00 : f32
    %49 = vector.broadcast %cst_43 : f32 to vector<8x32xf32>
    %50 = arith.addf %49, %48 : vector<8x32xf32>
    %51 = arith.divf %49, %50 : vector<8x32xf32>
    %52 = vector.extract_strided_slice %41 {offsets = [0, 32], sizes = [8, 32], strides = [1, 1]} : vector<8x96xf32> to vector<8x32xf32>
    %53 = vector.extract_strided_slice %43 {offsets = [0, 32], sizes = [8, 32], strides = [1, 1]} : vector<8x96xf32> to vector<8x32xf32>
    %54 = arith.addf %52, %53 : vector<8x32xf32>
    %55 = arith.negf %54 : vector<8x32xf32>
    %56 = math.exp %55 : vector<8x32xf32>
    %cst_44 = arith.constant 1.000000e+00 : f32
    %57 = vector.broadcast %cst_44 : f32 to vector<8x32xf32>
    %58 = arith.addf %57, %56 : vector<8x32xf32>
    %59 = arith.divf %57, %58 : vector<8x32xf32>
    %60 = vector.extract_strided_slice %41 {offsets = [0, 64], sizes = [8, 32], strides = [1, 1]} : vector<8x96xf32> to vector<8x32xf32>
    %61 = vector.extract_strided_slice %43 {offsets = [0, 64], sizes = [8, 32], strides = [1, 1]} : vector<8x96xf32> to vector<8x32xf32>
    %62 = arith.mulf %51, %61 : vector<8x32xf32>
    %63 = arith.addf %60, %62 : vector<8x32xf32>
    %64 = math.tanh %63 : vector<8x32xf32>
    %cst_45 = arith.constant 1.000000e+00 : f32
    %65 = vector.broadcast %cst_45 : f32 to vector<8x32xf32>
    %66 = arith.subf %65, %59 : vector<8x32xf32>
    %67 = arith.mulf %66, %64 : vector<8x32xf32>
    %68 = arith.mulf %59, %26 : vector<8x32xf32>
    %69 = arith.addf %67, %68 : vector<8x32xf32>
    %cst_46 = arith.constant dense<0.000000e+00> : vector<8x224xf32>
    %70 = tpu.matmul %69, %1, %cst_46 {dimension_numbers = #tpu.dot_dimension_numbers<[1], [0], [0], [1], [0, 0, 1, 1], [], []>} : vector<8x32xf32>, vector<32x224xf32>, vector<8x224xf32> -> vector<8x224xf32>
    %71 = vector.extract_strided_slice %70 {offsets = [0, 128], sizes = [8, 96], strides = [1, 1]} : vector<8x224xf32> to vector<8x96xf32>
    %72 = vector.extract_strided_slice %70 {offsets = [0, 0], sizes = [8, 96], strides = [1, 1]} : vector<8x224xf32> to vector<8x96xf32>
    %73 = vector.broadcast %11 : vector<1x96xf32> to vector<8x96xf32>
    %74 = arith.addf %72, %73 : vector<8x96xf32>
    %75 = vector.broadcast %14 : vector<1x96xf32> to vector<8x96xf32>
    %76 = arith.addf %35, %75 : vector<8x96xf32>
    %77 = vector.extract_strided_slice %74 {offsets = [0, 0], sizes = [8, 32], strides = [1, 1]} : vector<8x96xf32> to vector<8x32xf32>
    %78 = vector.extract_strided_slice %76 {offsets = [0, 0], sizes = [8, 32], strides = [1, 1]} : vector<8x96xf32> to vector<8x32xf32>
    %79 = arith.addf %77, %78 : vector<8x32xf32>
    %80 = arith.negf %79 : vector<8x32xf32>
    %81 = math.exp %80 : vector<8x32xf32>
    %cst_47 = arith.constant 1.000000e+00 : f32
    %82 = vector.broadcast %cst_47 : f32 to vector<8x32xf32>
    %83 = arith.addf %82, %81 : vector<8x32xf32>
    %84 = arith.divf %82, %83 : vector<8x32xf32>
    %85 = vector.extract_strided_slice %74 {offsets = [0, 32], sizes = [8, 32], strides = [1, 1]} : vector<8x96xf32> to vector<8x32xf32>
    %86 = vector.extract_strided_slice %76 {offsets = [0, 32], sizes = [8, 32], strides = [1, 1]} : vector<8x96xf32> to vector<8x32xf32>
    %87 = arith.addf %85, %86 : vector<8x32xf32>
    %88 = arith.negf %87 : vector<8x32xf32>
    %89 = math.exp %88 : vector<8x32xf32>
    %cst_48 = arith.constant 1.000000e+00 : f32
    %90 = vector.broadcast %cst_48 : f32 to vector<8x32xf32>
    %91 = arith.addf %90, %89 : vector<8x32xf32>
    %92 = arith.divf %90, %91 : vector<8x32xf32>
    %93 = vector.extract_strided_slice %74 {offsets = [0, 64], sizes = [8, 32], strides = [1, 1]} : vector<8x96xf32> to vector<8x32xf32>
    %94 = vector.extract_strided_slice %76 {offsets = [0, 64], sizes = [8, 32], strides = [1, 1]} : vector<8x96xf32> to vector<8x32xf32>
    %95 = arith.mulf %84, %94 : vector<8x32xf32>
    %96 = arith.addf %93, %95 : vector<8x32xf32>
    %97 = math.tanh %96 : vector<8x32xf32>
    %cst_49 = arith.constant 1.000000e+00 : f32
    %98 = vector.broadcast %cst_49 : f32 to vector<8x32xf32>
    %99 = arith.subf %98, %92 : vector<8x32xf32>
    %100 = arith.mulf %99, %97 : vector<8x32xf32>
    %101 = arith.mulf %92, %28 : vector<8x32xf32>
    %102 = arith.addf %100, %101 : vector<8x32xf32>
    %cst_50 = arith.constant dense<0.000000e+00> : vector<8x224xf32>
    %103 = tpu.matmul %102, %3, %cst_50 {dimension_numbers = #tpu.dot_dimension_numbers<[1], [0], [0], [1], [0, 0, 1, 1], [], []>} : vector<8x32xf32>, vector<32x224xf32>, vector<8x224xf32> -> vector<8x224xf32>
    %104 = vector.extract_strided_slice %103 {offsets = [0, 128], sizes = [8, 96], strides = [1, 1]} : vector<8x224xf32> to vector<8x96xf32>
    %105 = vector.extract_strided_slice %103 {offsets = [0, 0], sizes = [8, 32], strides = [1, 1]} : vector<8x224xf32> to vector<8x32xf32>
    %106 = vector.shape_cast %105 : vector<8x32xf32> to vector<8x1x32xf32>
    %107 = vector.broadcast %106 : vector<8x1x32xf32> to vector<8x8x32xf32>
    %108 = arith.addf %19, %107 : vector<8x8x32xf32>
    %109 = math.tanh %108 : vector<8x8x32xf32>
    %110 = vector.shape_cast %17 : vector<1x32xf32> to vector<1x1x32xf32>
    %111 = vector.broadcast %110 : vector<1x1x32xf32> to vector<8x8x32xf32>
    %112 = arith.mulf %109, %111 : vector<8x8x32xf32>
    %cst_51 = arith.constant dense<0.000000e+00> : vector<8x8xf32>
    %113 = vector.multi_reduction <add>, %112, %cst_51 [2] : vector<8x8x32xf32> to vector<8x8xf32>
    %114 = arith.addf %113, %24 : vector<8x8xf32>
    %115 = math.exp %114 : vector<8x8xf32>
    %cst_52 = arith.constant dense<0.000000e+00> : vector<8xf32>
    %116 = vector.multi_reduction <add>, %115, %cst_52 [1] : vector<8x8xf32> to vector<8xf32>
    %117 = vector.shape_cast %116 : vector<8xf32> to vector<8x1xf32>
    %118 = tpu.reciprocal %117 {approx = true} : vector<8x1xf32> -> vector<8x1xf32>
    %119 = vector.broadcast %118 : vector<8x1xf32> to vector<8x8xf32>
    %120 = arith.mulf %115, %119 : vector<8x8xf32>
    %121 = vector.shape_cast %120 : vector<8x8xf32> to vector<8x8x1xf32>
    %122 = vector.broadcast %121 : vector<8x8x1xf32> to vector<8x8x32xf32>
    %123 = arith.mulf %122, %21 : vector<8x8x32xf32>
    %cst_53 = arith.constant dense<0.000000e+00> : vector<8x32xf32>
    %124 = vector.multi_reduction <add>, %123, %cst_53 [1] : vector<8x8x32xf32> to vector<8x32xf32>
    %cst_54 = arith.constant dense<0.000000e+00> : vector<8x224xf32>
    %125 = tpu.matmul %124, %5, %cst_54 {dimension_numbers = #tpu.dot_dimension_numbers<[1], [0], [0], [1], [0, 0, 1, 1], [], []>} : vector<8x32xf32>, vector<32x224xf32>, vector<8x224xf32> -> vector<8x224xf32>
    %126 = vector.extract_strided_slice %125 {offsets = [0, 0], sizes = [8, 96], strides = [1, 1]} : vector<8x224xf32> to vector<8x96xf32>
    %127 = vector.extract_strided_slice %39 {offsets = [0, 160], sizes = [8, 33], strides = [1, 1]} : vector<8x256xf32> to vector<8x33xf32>
    %128 = vector.extract_strided_slice %103 {offsets = [0, 32], sizes = [8, 33], strides = [1, 1]} : vector<8x224xf32> to vector<8x33xf32>
    %129 = arith.addf %127, %128 : vector<8x33xf32>
    %130 = vector.extract_strided_slice %125 {offsets = [0, 160], sizes = [8, 33], strides = [1, 1]} : vector<8x224xf32> to vector<8x33xf32>
    %131 = arith.addf %129, %130 : vector<8x33xf32>
    %132 = vector.extract_strided_slice %131 {offsets = [0, 0], sizes = [8, 16], strides = [1, 1]} : vector<8x33xf32> to vector<8x16xf32>
    %133 = vector.extract_strided_slice %131 {offsets = [0, 16], sizes = [8, 16], strides = [1, 1]} : vector<8x33xf32> to vector<8x16xf32>
    %134 = arith.maximumf %132, %133 : vector<8x16xf32>
    %135 = vector.extract_strided_slice %131 {offsets = [0, 32], sizes = [8, 1], strides = [1, 1]} : vector<8x33xf32> to vector<8x1xf32>
    %136 = arith.negf %135 : vector<8x1xf32>
    %137 = math.exp %136 : vector<8x1xf32>
    %cst_55 = arith.constant 1.000000e+00 : f32
    %138 = vector.broadcast %cst_55 : f32 to vector<8x1xf32>
    %139 = arith.addf %138, %137 : vector<8x1xf32>
    %140 = arith.divf %138, %139 : vector<8x1xf32>
    %141 = tpu.concatenate %134, %120, %140, %31, %69, %102, %124 in 1 : vector<8x16xf32>, vector<8x8xf32>, vector<8x1xf32>, vector<8x7xf32>, vector<8x32xf32>, vector<8x32xf32>, vector<8x32xf32> -> vector<8x128xf32>
    %c0_56 = arith.constant 0 : index
    %c0_57 = arith.constant 0 : index
    %c0_58 = arith.constant 0 : index
    %142 = vector.load %arg5[%c0_56, %c0_57, %c0_58] : memref<6x8x128xf32, #tpu.memory_space<vmem>>, vector<1x8x128xf32>
    %143 = vector.shape_cast %142 : vector<1x8x128xf32> to vector<8x128xf32>
    %144 = vector.shape_cast %141 : vector<8x128xf32> to vector<1x8x128xf32>
    tpu.vector_store %arg5[%c0_56, %c0_57, %c0_58], %144 {strides = array<i32>} : memref<6x8x128xf32, #tpu.memory_space<vmem>>, vector<1x8x128xf32>,
    %c1_59 = arith.constant 1 : index
    %c0_60 = arith.constant 0 : index
    %c0_61 = arith.constant 0 : index
    %145 = vector.load %arg0[%c1_59, %c0_60, %c0_61] : memref<6x8x256xf32, #tpu.memory_space<vmem>>, vector<1x8x256xf32>
    %146 = vector.shape_cast %145 : vector<1x8x256xf32> to vector<8x256xf32>
    %147 = vector.extract_strided_slice %146 {offsets = [0, 0], sizes = [8, 96], strides = [1, 1]} : vector<8x256xf32> to vector<8x96xf32>
    %148 = arith.addf %147, %126 : vector<8x96xf32>
    %149 = vector.broadcast %8 : vector<1x96xf32> to vector<8x96xf32>
    %150 = arith.addf %71, %149 : vector<8x96xf32>
    %151 = vector.extract_strided_slice %148 {offsets = [0, 0], sizes = [8, 32], strides = [1, 1]} : vector<8x96xf32> to vector<8x32xf32>
    %152 = vector.extract_strided_slice %150 {offsets = [0, 0], sizes = [8, 32], strides = [1, 1]} : vector<8x96xf32> to vector<8x32xf32>
    %153 = arith.addf %151, %152 : vector<8x32xf32>
    %154 = arith.negf %153 : vector<8x32xf32>
    %155 = math.exp %154 : vector<8x32xf32>
    %cst_62 = arith.constant 1.000000e+00 : f32
    %156 = vector.broadcast %cst_62 : f32 to vector<8x32xf32>
    %157 = arith.addf %156, %155 : vector<8x32xf32>
    %158 = arith.divf %156, %157 : vector<8x32xf32>
    %159 = vector.extract_strided_slice %148 {offsets = [0, 32], sizes = [8, 32], strides = [1, 1]} : vector<8x96xf32> to vector<8x32xf32>
    %160 = vector.extract_strided_slice %150 {offsets = [0, 32], sizes = [8, 32], strides = [1, 1]} : vector<8x96xf32> to vector<8x32xf32>
    %161 = arith.addf %159, %160 : vector<8x32xf32>
    %162 = arith.negf %161 : vector<8x32xf32>
    %163 = math.exp %162 : vector<8x32xf32>
    %cst_63 = arith.constant 1.000000e+00 : f32
    %164 = vector.broadcast %cst_63 : f32 to vector<8x32xf32>
    %165 = arith.addf %164, %163 : vector<8x32xf32>
    %166 = arith.divf %164, %165 : vector<8x32xf32>
    %167 = vector.extract_strided_slice %148 {offsets = [0, 64], sizes = [8, 32], strides = [1, 1]} : vector<8x96xf32> to vector<8x32xf32>
    %168 = vector.extract_strided_slice %150 {offsets = [0, 64], sizes = [8, 32], strides = [1, 1]} : vector<8x96xf32> to vector<8x32xf32>
    %169 = arith.mulf %158, %168 : vector<8x32xf32>
    %170 = arith.addf %167, %169 : vector<8x32xf32>
    %171 = math.tanh %170 : vector<8x32xf32>
    %cst_64 = arith.constant 1.000000e+00 : f32
    %172 = vector.broadcast %cst_64 : f32 to vector<8x32xf32>
    %173 = arith.subf %172, %166 : vector<8x32xf32>
    %174 = arith.mulf %173, %171 : vector<8x32xf32>
    %175 = arith.mulf %166, %69 : vector<8x32xf32>
    %176 = arith.addf %174, %175 : vector<8x32xf32>
    %cst_65 = arith.constant dense<0.000000e+00> : vector<8x224xf32>
    %177 = tpu.matmul %176, %1, %cst_65 {dimension_numbers = #tpu.dot_dimension_numbers<[1], [0], [0], [1], [0, 0, 1, 1], [], []>} : vector<8x32xf32>, vector<32x224xf32>, vector<8x224xf32> -> vector<8x224xf32>
    %178 = vector.extract_strided_slice %177 {offsets = [0, 128], sizes = [8, 96], strides = [1, 1]} : vector<8x224xf32> to vector<8x96xf32>
    %179 = vector.extract_strided_slice %177 {offsets = [0, 0], sizes = [8, 96], strides = [1, 1]} : vector<8x224xf32> to vector<8x96xf32>
    %180 = vector.broadcast %11 : vector<1x96xf32> to vector<8x96xf32>
    %181 = arith.addf %179, %180 : vector<8x96xf32>
    %182 = vector.broadcast %14 : vector<1x96xf32> to vector<8x96xf32>
    %183 = arith.addf %104, %182 : vector<8x96xf32>
    %184 = vector.extract_strided_slice %181 {offsets = [0, 0], sizes = [8, 32], strides = [1, 1]} : vector<8x96xf32> to vector<8x32xf32>
    %185 = vector.extract_strided_slice %183 {offsets = [0, 0], sizes = [8, 32], strides = [1, 1]} : vector<8x96xf32> to vector<8x32xf32>
    %186 = arith.addf %184, %185 : vector<8x32xf32>
    %187 = arith.negf %186 : vector<8x32xf32>
    %188 = math.exp %187 : vector<8x32xf32>
    %cst_66 = arith.constant 1.000000e+00 : f32
    %189 = vector.broadcast %cst_66 : f32 to vector<8x32xf32>
    %190 = arith.addf %189, %188 : vector<8x32xf32>
    %191 = arith.divf %189, %190 : vector<8x32xf32>
    %192 = vector.extract_strided_slice %181 {offsets = [0, 32], sizes = [8, 32], strides = [1, 1]} : vector<8x96xf32> to vector<8x32xf32>
    %193 = vector.extract_strided_slice %183 {offsets = [0, 32], sizes = [8, 32], strides = [1, 1]} : vector<8x96xf32> to vector<8x32xf32>
    %194 = arith.addf %192, %193 : vector<8x32xf32>
    %195 = arith.negf %194 : vector<8x32xf32>
    %196 = math.exp %195 : vector<8x32xf32>
    %cst_67 = arith.constant 1.000000e+00 : f32
    %197 = vector.broadcast %cst_67 : f32 to vector<8x32xf32>
    %198 = arith.addf %197, %196 : vector<8x32xf32>
    %199 = arith.divf %197, %198 : vector<8x32xf32>
    %200 = vector.extract_strided_slice %181 {offsets = [0, 64], sizes = [8, 32], strides = [1, 1]} : vector<8x96xf32> to vector<8x32xf32>
    %201 = vector.extract_strided_slice %183 {offsets = [0, 64], sizes = [8, 32], strides = [1, 1]} : vector<8x96xf32> to vector<8x32xf32>
    %202 = arith.mulf %191, %201 : vector<8x32xf32>
    %203 = arith.addf %200, %202 : vector<8x32xf32>
    %204 = math.tanh %203 : vector<8x32xf32>
    %cst_68 = arith.constant 1.000000e+00 : f32
    %205 = vector.broadcast %cst_68 : f32 to vector<8x32xf32>
    %206 = arith.subf %205, %199 : vector<8x32xf32>
    %207 = arith.mulf %206, %204 : vector<8x32xf32>
    %208 = arith.mulf %199, %102 : vector<8x32xf32>
    %209 = arith.addf %207, %208 : vector<8x32xf32>
    %cst_69 = arith.constant dense<0.000000e+00> : vector<8x224xf32>
    %210 = tpu.matmul %209, %3, %cst_69 {dimension_numbers = #tpu.dot_dimension_numbers<[1], [0], [0], [1], [0, 0, 1, 1], [], []>} : vector<8x32xf32>, vector<32x224xf32>, vector<8x224xf32> -> vector<8x224xf32>
    %211 = vector.extract_strided_slice %210 {offsets = [0, 128], sizes = [8, 96], strides = [1, 1]} : vector<8x224xf32> to vector<8x96xf32>
    %212 = vector.extract_strided_slice %210 {offsets = [0, 0], sizes = [8, 32], strides = [1, 1]} : vector<8x224xf32> to vector<8x32xf32>
    %213 = vector.shape_cast %212 : vector<8x32xf32> to vector<8x1x32xf32>
    %214 = vector.broadcast %213 : vector<8x1x32xf32> to vector<8x8x32xf32>
    %215 = arith.addf %19, %214 : vector<8x8x32xf32>
    %216 = math.tanh %215 : vector<8x8x32xf32>
    %217 = vector.shape_cast %17 : vector<1x32xf32> to vector<1x1x32xf32>
    %218 = vector.broadcast %217 : vector<1x1x32xf32> to vector<8x8x32xf32>
    %219 = arith.mulf %216, %218 : vector<8x8x32xf32>
    %cst_70 = arith.constant dense<0.000000e+00> : vector<8x8xf32>
    %220 = vector.multi_reduction <add>, %219, %cst_70 [2] : vector<8x8x32xf32> to vector<8x8xf32>
    %221 = arith.addf %220, %24 : vector<8x8xf32>
    %222 = math.exp %221 : vector<8x8xf32>
    %cst_71 = arith.constant dense<0.000000e+00> : vector<8xf32>
    %223 = vector.multi_reduction <add>, %222, %cst_71 [1] : vector<8x8xf32> to vector<8xf32>
    %224 = vector.shape_cast %223 : vector<8xf32> to vector<8x1xf32>
    %225 = tpu.reciprocal %224 {approx = true} : vector<8x1xf32> -> vector<8x1xf32>
    %226 = vector.broadcast %225 : vector<8x1xf32> to vector<8x8xf32>
    %227 = arith.mulf %222, %226 : vector<8x8xf32>
    %228 = vector.shape_cast %227 : vector<8x8xf32> to vector<8x8x1xf32>
    %229 = vector.broadcast %228 : vector<8x8x1xf32> to vector<8x8x32xf32>
    %230 = arith.mulf %229, %21 : vector<8x8x32xf32>
    %cst_72 = arith.constant dense<0.000000e+00> : vector<8x32xf32>
    %231 = vector.multi_reduction <add>, %230, %cst_72 [1] : vector<8x8x32xf32> to vector<8x32xf32>
    %cst_73 = arith.constant dense<0.000000e+00> : vector<8x224xf32>
    %232 = tpu.matmul %231, %5, %cst_73 {dimension_numbers = #tpu.dot_dimension_numbers<[1], [0], [0], [1], [0, 0, 1, 1], [], []>} : vector<8x32xf32>, vector<32x224xf32>, vector<8x224xf32> -> vector<8x224xf32>
    %233 = vector.extract_strided_slice %232 {offsets = [0, 0], sizes = [8, 96], strides = [1, 1]} : vector<8x224xf32> to vector<8x96xf32>
    %234 = vector.extract_strided_slice %146 {offsets = [0, 160], sizes = [8, 33], strides = [1, 1]} : vector<8x256xf32> to vector<8x33xf32>
    %235 = vector.extract_strided_slice %210 {offsets = [0, 32], sizes = [8, 33], strides = [1, 1]} : vector<8x224xf32> to vector<8x33xf32>
    %236 = arith.addf %234, %235 : vector<8x33xf32>
    %237 = vector.extract_strided_slice %232 {offsets = [0, 160], sizes = [8, 33], strides = [1, 1]} : vector<8x224xf32> to vector<8x33xf32>
    %238 = arith.addf %236, %237 : vector<8x33xf32>
    %239 = vector.extract_strided_slice %238 {offsets = [0, 0], sizes = [8, 16], strides = [1, 1]} : vector<8x33xf32> to vector<8x16xf32>
    %240 = vector.extract_strided_slice %238 {offsets = [0, 16], sizes = [8, 16], strides = [1, 1]} : vector<8x33xf32> to vector<8x16xf32>
    %241 = arith.maximumf %239, %240 : vector<8x16xf32>
    %242 = vector.extract_strided_slice %238 {offsets = [0, 32], sizes = [8, 1], strides = [1, 1]} : vector<8x33xf32> to vector<8x1xf32>
    %243 = arith.negf %242 : vector<8x1xf32>
    %244 = math.exp %243 : vector<8x1xf32>
    %cst_74 = arith.constant 1.000000e+00 : f32
    %245 = vector.broadcast %cst_74 : f32 to vector<8x1xf32>
    %246 = arith.addf %245, %244 : vector<8x1xf32>
    %247 = arith.divf %245, %246 : vector<8x1xf32>
    %248 = tpu.concatenate %241, %227, %247, %31, %176, %209, %231 in 1 : vector<8x16xf32>, vector<8x8xf32>, vector<8x1xf32>, vector<8x7xf32>, vector<8x32xf32>, vector<8x32xf32>, vector<8x32xf32> -> vector<8x128xf32>
    %c1_75 = arith.constant 1 : index
    %c0_76 = arith.constant 0 : index
    %c0_77 = arith.constant 0 : index
    %249 = vector.load %arg5[%c1_75, %c0_76, %c0_77] : memref<6x8x128xf32, #tpu.memory_space<vmem>>, vector<1x8x128xf32>
    %250 = vector.shape_cast %249 : vector<1x8x128xf32> to vector<8x128xf32>
    %251 = vector.shape_cast %248 : vector<8x128xf32> to vector<1x8x128xf32>
    tpu.vector_store %arg5[%c1_75, %c0_76, %c0_77], %251 {strides = array<i32>} : memref<6x8x128xf32, #tpu.memory_space<vmem>>, vector<1x8x128xf32>,
    %c2_78 = arith.constant 2 : index
    %c0_79 = arith.constant 0 : index
    %c0_80 = arith.constant 0 : index
    %252 = vector.load %arg0[%c2_78, %c0_79, %c0_80] : memref<6x8x256xf32, #tpu.memory_space<vmem>>, vector<1x8x256xf32>
    %253 = vector.shape_cast %252 : vector<1x8x256xf32> to vector<8x256xf32>
    %254 = vector.extract_strided_slice %253 {offsets = [0, 0], sizes = [8, 96], strides = [1, 1]} : vector<8x256xf32> to vector<8x96xf32>
    %255 = arith.addf %254, %233 : vector<8x96xf32>
    %256 = vector.broadcast %8 : vector<1x96xf32> to vector<8x96xf32>
    %257 = arith.addf %178, %256 : vector<8x96xf32>
    %258 = vector.extract_strided_slice %255 {offsets = [0, 0], sizes = [8, 32], strides = [1, 1]} : vector<8x96xf32> to vector<8x32xf32>
    %259 = vector.extract_strided_slice %257 {offsets = [0, 0], sizes = [8, 32], strides = [1, 1]} : vector<8x96xf32> to vector<8x32xf32>
    %260 = arith.addf %258, %259 : vector<8x32xf32>
    %261 = arith.negf %260 : vector<8x32xf32>
    %262 = math.exp %261 : vector<8x32xf32>
    %cst_81 = arith.constant 1.000000e+00 : f32
    %263 = vector.broadcast %cst_81 : f32 to vector<8x32xf32>
    %264 = arith.addf %263, %262 : vector<8x32xf32>
    %265 = arith.divf %263, %264 : vector<8x32xf32>
    %266 = vector.extract_strided_slice %255 {offsets = [0, 32], sizes = [8, 32], strides = [1, 1]} : vector<8x96xf32> to vector<8x32xf32>
    %267 = vector.extract_strided_slice %257 {offsets = [0, 32], sizes = [8, 32], strides = [1, 1]} : vector<8x96xf32> to vector<8x32xf32>
    %268 = arith.addf %266, %267 : vector<8x32xf32>
    %269 = arith.negf %268 : vector<8x32xf32>
    %270 = math.exp %269 : vector<8x32xf32>
    %cst_82 = arith.constant 1.000000e+00 : f32
    %271 = vector.broadcast %cst_82 : f32 to vector<8x32xf32>
    %272 = arith.addf %271, %270 : vector<8x32xf32>
    %273 = arith.divf %271, %272 : vector<8x32xf32>
    %274 = vector.extract_strided_slice %255 {offsets = [0, 64], sizes = [8, 32], strides = [1, 1]} : vector<8x96xf32> to vector<8x32xf32>
    %275 = vector.extract_strided_slice %257 {offsets = [0, 64], sizes = [8, 32], strides = [1, 1]} : vector<8x96xf32> to vector<8x32xf32>
    %276 = arith.mulf %265, %275 : vector<8x32xf32>
    %277 = arith.addf %274, %276 : vector<8x32xf32>
    %278 = math.tanh %277 : vector<8x32xf32>
    %cst_83 = arith.constant 1.000000e+00 : f32
    %279 = vector.broadcast %cst_83 : f32 to vector<8x32xf32>
    %280 = arith.subf %279, %273 : vector<8x32xf32>
    %281 = arith.mulf %280, %278 : vector<8x32xf32>
    %282 = arith.mulf %273, %176 : vector<8x32xf32>
    %283 = arith.addf %281, %282 : vector<8x32xf32>
    %cst_84 = arith.constant dense<0.000000e+00> : vector<8x224xf32>
    %284 = tpu.matmul %283, %1, %cst_84 {dimension_numbers = #tpu.dot_dimension_numbers<[1], [0], [0], [1], [0, 0, 1, 1], [], []>} : vector<8x32xf32>, vector<32x224xf32>, vector<8x224xf32> -> vector<8x224xf32>
    %285 = vector.extract_strided_slice %284 {offsets = [0, 128], sizes = [8, 96], strides = [1, 1]} : vector<8x224xf32> to vector<8x96xf32>
    %286 = vector.extract_strided_slice %284 {offsets = [0, 0], sizes = [8, 96], strides = [1, 1]} : vector<8x224xf32> to vector<8x96xf32>
    %287 = vector.broadcast %11 : vector<1x96xf32> to vector<8x96xf32>
    %288 = arith.addf %286, %287 : vector<8x96xf32>
    %289 = vector.broadcast %14 : vector<1x96xf32> to vector<8x96xf32>
    %290 = arith.addf %211, %289 : vector<8x96xf32>
    %291 = vector.extract_strided_slice %288 {offsets = [0, 0], sizes = [8, 32], strides = [1, 1]} : vector<8x96xf32> to vector<8x32xf32>
    %292 = vector.extract_strided_slice %290 {offsets = [0, 0], sizes = [8, 32], strides = [1, 1]} : vector<8x96xf32> to vector<8x32xf32>
    %293 = arith.addf %291, %292 : vector<8x32xf32>
    %294 = arith.negf %293 : vector<8x32xf32>
    %295 = math.exp %294 : vector<8x32xf32>
    %cst_85 = arith.constant 1.000000e+00 : f32
    %296 = vector.broadcast %cst_85 : f32 to vector<8x32xf32>
    %297 = arith.addf %296, %295 : vector<8x32xf32>
    %298 = arith.divf %296, %297 : vector<8x32xf32>
    %299 = vector.extract_strided_slice %288 {offsets = [0, 32], sizes = [8, 32], strides = [1, 1]} : vector<8x96xf32> to vector<8x32xf32>
    %300 = vector.extract_strided_slice %290 {offsets = [0, 32], sizes = [8, 32], strides = [1, 1]} : vector<8x96xf32> to vector<8x32xf32>
    %301 = arith.addf %299, %300 : vector<8x32xf32>
    %302 = arith.negf %301 : vector<8x32xf32>
    %303 = math.exp %302 : vector<8x32xf32>
    %cst_86 = arith.constant 1.000000e+00 : f32
    %304 = vector.broadcast %cst_86 : f32 to vector<8x32xf32>
    %305 = arith.addf %304, %303 : vector<8x32xf32>
    %306 = arith.divf %304, %305 : vector<8x32xf32>
    %307 = vector.extract_strided_slice %288 {offsets = [0, 64], sizes = [8, 32], strides = [1, 1]} : vector<8x96xf32> to vector<8x32xf32>
    %308 = vector.extract_strided_slice %290 {offsets = [0, 64], sizes = [8, 32], strides = [1, 1]} : vector<8x96xf32> to vector<8x32xf32>
    %309 = arith.mulf %298, %308 : vector<8x32xf32>
    %310 = arith.addf %307, %309 : vector<8x32xf32>
    %311 = math.tanh %310 : vector<8x32xf32>
    %cst_87 = arith.constant 1.000000e+00 : f32
    %312 = vector.broadcast %cst_87 : f32 to vector<8x32xf32>
    %313 = arith.subf %312, %306 : vector<8x32xf32>
    %314 = arith.mulf %313, %311 : vector<8x32xf32>
    %315 = arith.mulf %306, %209 : vector<8x32xf32>
    %316 = arith.addf %314, %315 : vector<8x32xf32>
    %cst_88 = arith.constant dense<0.000000e+00> : vector<8x224xf32>
    %317 = tpu.matmul %316, %3, %cst_88 {dimension_numbers = #tpu.dot_dimension_numbers<[1], [0], [0], [1], [0, 0, 1, 1], [], []>} : vector<8x32xf32>, vector<32x224xf32>, vector<8x224xf32> -> vector<8x224xf32>
    %318 = vector.extract_strided_slice %317 {offsets = [0, 128], sizes = [8, 96], strides = [1, 1]} : vector<8x224xf32> to vector<8x96xf32>
    %319 = vector.extract_strided_slice %317 {offsets = [0, 0], sizes = [8, 32], strides = [1, 1]} : vector<8x224xf32> to vector<8x32xf32>
    %320 = vector.shape_cast %319 : vector<8x32xf32> to vector<8x1x32xf32>
    %321 = vector.broadcast %320 : vector<8x1x32xf32> to vector<8x8x32xf32>
    %322 = arith.addf %19, %321 : vector<8x8x32xf32>
    %323 = math.tanh %322 : vector<8x8x32xf32>
    %324 = vector.shape_cast %17 : vector<1x32xf32> to vector<1x1x32xf32>
    %325 = vector.broadcast %324 : vector<1x1x32xf32> to vector<8x8x32xf32>
    %326 = arith.mulf %323, %325 : vector<8x8x32xf32>
    %cst_89 = arith.constant dense<0.000000e+00> : vector<8x8xf32>
    %327 = vector.multi_reduction <add>, %326, %cst_89 [2] : vector<8x8x32xf32> to vector<8x8xf32>
    %328 = arith.addf %327, %24 : vector<8x8xf32>
    %329 = math.exp %328 : vector<8x8xf32>
    %cst_90 = arith.constant dense<0.000000e+00> : vector<8xf32>
    %330 = vector.multi_reduction <add>, %329, %cst_90 [1] : vector<8x8xf32> to vector<8xf32>
    %331 = vector.shape_cast %330 : vector<8xf32> to vector<8x1xf32>
    %332 = tpu.reciprocal %331 {approx = true} : vector<8x1xf32> -> vector<8x1xf32>
    %333 = vector.broadcast %332 : vector<8x1xf32> to vector<8x8xf32>
    %334 = arith.mulf %329, %333 : vector<8x8xf32>
    %335 = vector.shape_cast %334 : vector<8x8xf32> to vector<8x8x1xf32>
    %336 = vector.broadcast %335 : vector<8x8x1xf32> to vector<8x8x32xf32>
    %337 = arith.mulf %336, %21 : vector<8x8x32xf32>
    %cst_91 = arith.constant dense<0.000000e+00> : vector<8x32xf32>
    %338 = vector.multi_reduction <add>, %337, %cst_91 [1] : vector<8x8x32xf32> to vector<8x32xf32>
    %cst_92 = arith.constant dense<0.000000e+00> : vector<8x224xf32>
    %339 = tpu.matmul %338, %5, %cst_92 {dimension_numbers = #tpu.dot_dimension_numbers<[1], [0], [0], [1], [0, 0, 1, 1], [], []>} : vector<8x32xf32>, vector<32x224xf32>, vector<8x224xf32> -> vector<8x224xf32>
    %340 = vector.extract_strided_slice %339 {offsets = [0, 0], sizes = [8, 96], strides = [1, 1]} : vector<8x224xf32> to vector<8x96xf32>
    %341 = vector.extract_strided_slice %253 {offsets = [0, 160], sizes = [8, 33], strides = [1, 1]} : vector<8x256xf32> to vector<8x33xf32>
    %342 = vector.extract_strided_slice %317 {offsets = [0, 32], sizes = [8, 33], strides = [1, 1]} : vector<8x224xf32> to vector<8x33xf32>
    %343 = arith.addf %341, %342 : vector<8x33xf32>
    %344 = vector.extract_strided_slice %339 {offsets = [0, 160], sizes = [8, 33], strides = [1, 1]} : vector<8x224xf32> to vector<8x33xf32>
    %345 = arith.addf %343, %344 : vector<8x33xf32>
    %346 = vector.extract_strided_slice %345 {offsets = [0, 0], sizes = [8, 16], strides = [1, 1]} : vector<8x33xf32> to vector<8x16xf32>
    %347 = vector.extract_strided_slice %345 {offsets = [0, 16], sizes = [8, 16], strides = [1, 1]} : vector<8x33xf32> to vector<8x16xf32>
    %348 = arith.maximumf %346, %347 : vector<8x16xf32>
    %349 = vector.extract_strided_slice %345 {offsets = [0, 32], sizes = [8, 1], strides = [1, 1]} : vector<8x33xf32> to vector<8x1xf32>
    %350 = arith.negf %349 : vector<8x1xf32>
    %351 = math.exp %350 : vector<8x1xf32>
    %cst_93 = arith.constant 1.000000e+00 : f32
    %352 = vector.broadcast %cst_93 : f32 to vector<8x1xf32>
    %353 = arith.addf %352, %351 : vector<8x1xf32>
    %354 = arith.divf %352, %353 : vector<8x1xf32>
    %355 = tpu.concatenate %348, %334, %354, %31, %283, %316, %338 in 1 : vector<8x16xf32>, vector<8x8xf32>, vector<8x1xf32>, vector<8x7xf32>, vector<8x32xf32>, vector<8x32xf32>, vector<8x32xf32> -> vector<8x128xf32>
    %c2_94 = arith.constant 2 : index
    %c0_95 = arith.constant 0 : index
    %c0_96 = arith.constant 0 : index
    %356 = vector.load %arg5[%c2_94, %c0_95, %c0_96] : memref<6x8x128xf32, #tpu.memory_space<vmem>>, vector<1x8x128xf32>
    %357 = vector.shape_cast %356 : vector<1x8x128xf32> to vector<8x128xf32>
    %358 = vector.shape_cast %355 : vector<8x128xf32> to vector<1x8x128xf32>
    tpu.vector_store %arg5[%c2_94, %c0_95, %c0_96], %358 {strides = array<i32>} : memref<6x8x128xf32, #tpu.memory_space<vmem>>, vector<1x8x128xf32>,
    %c3_97 = arith.constant 3 : index
    %c0_98 = arith.constant 0 : index
    %c0_99 = arith.constant 0 : index
    %359 = vector.load %arg0[%c3_97, %c0_98, %c0_99] : memref<6x8x256xf32, #tpu.memory_space<vmem>>, vector<1x8x256xf32>
    %360 = vector.shape_cast %359 : vector<1x8x256xf32> to vector<8x256xf32>
    %361 = vector.extract_strided_slice %360 {offsets = [0, 0], sizes = [8, 96], strides = [1, 1]} : vector<8x256xf32> to vector<8x96xf32>
    %362 = arith.addf %361, %340 : vector<8x96xf32>
    %363 = vector.broadcast %8 : vector<1x96xf32> to vector<8x96xf32>
    %364 = arith.addf %285, %363 : vector<8x96xf32>
    %365 = vector.extract_strided_slice %362 {offsets = [0, 0], sizes = [8, 32], strides = [1, 1]} : vector<8x96xf32> to vector<8x32xf32>
    %366 = vector.extract_strided_slice %364 {offsets = [0, 0], sizes = [8, 32], strides = [1, 1]} : vector<8x96xf32> to vector<8x32xf32>
    %367 = arith.addf %365, %366 : vector<8x32xf32>
    %368 = arith.negf %367 : vector<8x32xf32>
    %369 = math.exp %368 : vector<8x32xf32>
    %cst_100 = arith.constant 1.000000e+00 : f32
    %370 = vector.broadcast %cst_100 : f32 to vector<8x32xf32>
    %371 = arith.addf %370, %369 : vector<8x32xf32>
    %372 = arith.divf %370, %371 : vector<8x32xf32>
    %373 = vector.extract_strided_slice %362 {offsets = [0, 32], sizes = [8, 32], strides = [1, 1]} : vector<8x96xf32> to vector<8x32xf32>
    %374 = vector.extract_strided_slice %364 {offsets = [0, 32], sizes = [8, 32], strides = [1, 1]} : vector<8x96xf32> to vector<8x32xf32>
    %375 = arith.addf %373, %374 : vector<8x32xf32>
    %376 = arith.negf %375 : vector<8x32xf32>
    %377 = math.exp %376 : vector<8x32xf32>
    %cst_101 = arith.constant 1.000000e+00 : f32
    %378 = vector.broadcast %cst_101 : f32 to vector<8x32xf32>
    %379 = arith.addf %378, %377 : vector<8x32xf32>
    %380 = arith.divf %378, %379 : vector<8x32xf32>
    %381 = vector.extract_strided_slice %362 {offsets = [0, 64], sizes = [8, 32], strides = [1, 1]} : vector<8x96xf32> to vector<8x32xf32>
    %382 = vector.extract_strided_slice %364 {offsets = [0, 64], sizes = [8, 32], strides = [1, 1]} : vector<8x96xf32> to vector<8x32xf32>
    %383 = arith.mulf %372, %382 : vector<8x32xf32>
    %384 = arith.addf %381, %383 : vector<8x32xf32>
    %385 = math.tanh %384 : vector<8x32xf32>
    %cst_102 = arith.constant 1.000000e+00 : f32
    %386 = vector.broadcast %cst_102 : f32 to vector<8x32xf32>
    %387 = arith.subf %386, %380 : vector<8x32xf32>
    %388 = arith.mulf %387, %385 : vector<8x32xf32>
    %389 = arith.mulf %380, %283 : vector<8x32xf32>
    %390 = arith.addf %388, %389 : vector<8x32xf32>
    %cst_103 = arith.constant dense<0.000000e+00> : vector<8x224xf32>
    %391 = tpu.matmul %390, %1, %cst_103 {dimension_numbers = #tpu.dot_dimension_numbers<[1], [0], [0], [1], [0, 0, 1, 1], [], []>} : vector<8x32xf32>, vector<32x224xf32>, vector<8x224xf32> -> vector<8x224xf32>
    %392 = vector.extract_strided_slice %391 {offsets = [0, 128], sizes = [8, 96], strides = [1, 1]} : vector<8x224xf32> to vector<8x96xf32>
    %393 = vector.extract_strided_slice %391 {offsets = [0, 0], sizes = [8, 96], strides = [1, 1]} : vector<8x224xf32> to vector<8x96xf32>
    %394 = vector.broadcast %11 : vector<1x96xf32> to vector<8x96xf32>
    %395 = arith.addf %393, %394 : vector<8x96xf32>
    %396 = vector.broadcast %14 : vector<1x96xf32> to vector<8x96xf32>
    %397 = arith.addf %318, %396 : vector<8x96xf32>
    %398 = vector.extract_strided_slice %395 {offsets = [0, 0], sizes = [8, 32], strides = [1, 1]} : vector<8x96xf32> to vector<8x32xf32>
    %399 = vector.extract_strided_slice %397 {offsets = [0, 0], sizes = [8, 32], strides = [1, 1]} : vector<8x96xf32> to vector<8x32xf32>
    %400 = arith.addf %398, %399 : vector<8x32xf32>
    %401 = arith.negf %400 : vector<8x32xf32>
    %402 = math.exp %401 : vector<8x32xf32>
    %cst_104 = arith.constant 1.000000e+00 : f32
    %403 = vector.broadcast %cst_104 : f32 to vector<8x32xf32>
    %404 = arith.addf %403, %402 : vector<8x32xf32>
    %405 = arith.divf %403, %404 : vector<8x32xf32>
    %406 = vector.extract_strided_slice %395 {offsets = [0, 32], sizes = [8, 32], strides = [1, 1]} : vector<8x96xf32> to vector<8x32xf32>
    %407 = vector.extract_strided_slice %397 {offsets = [0, 32], sizes = [8, 32], strides = [1, 1]} : vector<8x96xf32> to vector<8x32xf32>
    %408 = arith.addf %406, %407 : vector<8x32xf32>
    %409 = arith.negf %408 : vector<8x32xf32>
    %410 = math.exp %409 : vector<8x32xf32>
    %cst_105 = arith.constant 1.000000e+00 : f32
    %411 = vector.broadcast %cst_105 : f32 to vector<8x32xf32>
    %412 = arith.addf %411, %410 : vector<8x32xf32>
    %413 = arith.divf %411, %412 : vector<8x32xf32>
    %414 = vector.extract_strided_slice %395 {offsets = [0, 64], sizes = [8, 32], strides = [1, 1]} : vector<8x96xf32> to vector<8x32xf32>
    %415 = vector.extract_strided_slice %397 {offsets = [0, 64], sizes = [8, 32], strides = [1, 1]} : vector<8x96xf32> to vector<8x32xf32>
    %416 = arith.mulf %405, %415 : vector<8x32xf32>
    %417 = arith.addf %414, %416 : vector<8x32xf32>
    %418 = math.tanh %417 : vector<8x32xf32>
    %cst_106 = arith.constant 1.000000e+00 : f32
    %419 = vector.broadcast %cst_106 : f32 to vector<8x32xf32>
    %420 = arith.subf %419, %413 : vector<8x32xf32>
    %421 = arith.mulf %420, %418 : vector<8x32xf32>
    %422 = arith.mulf %413, %316 : vector<8x32xf32>
    %423 = arith.addf %421, %422 : vector<8x32xf32>
    %cst_107 = arith.constant dense<0.000000e+00> : vector<8x224xf32>
    %424 = tpu.matmul %423, %3, %cst_107 {dimension_numbers = #tpu.dot_dimension_numbers<[1], [0], [0], [1], [0, 0, 1, 1], [], []>} : vector<8x32xf32>, vector<32x224xf32>, vector<8x224xf32> -> vector<8x224xf32>
    %425 = vector.extract_strided_slice %424 {offsets = [0, 128], sizes = [8, 96], strides = [1, 1]} : vector<8x224xf32> to vector<8x96xf32>
    %426 = vector.extract_strided_slice %424 {offsets = [0, 0], sizes = [8, 32], strides = [1, 1]} : vector<8x224xf32> to vector<8x32xf32>
    %427 = vector.shape_cast %426 : vector<8x32xf32> to vector<8x1x32xf32>
    %428 = vector.broadcast %427 : vector<8x1x32xf32> to vector<8x8x32xf32>
    %429 = arith.addf %19, %428 : vector<8x8x32xf32>
    %430 = math.tanh %429 : vector<8x8x32xf32>
    %431 = vector.shape_cast %17 : vector<1x32xf32> to vector<1x1x32xf32>
    %432 = vector.broadcast %431 : vector<1x1x32xf32> to vector<8x8x32xf32>
    %433 = arith.mulf %430, %432 : vector<8x8x32xf32>
    %cst_108 = arith.constant dense<0.000000e+00> : vector<8x8xf32>
    %434 = vector.multi_reduction <add>, %433, %cst_108 [2] : vector<8x8x32xf32> to vector<8x8xf32>
    %435 = arith.addf %434, %24 : vector<8x8xf32>
    %436 = math.exp %435 : vector<8x8xf32>
    %cst_109 = arith.constant dense<0.000000e+00> : vector<8xf32>
    %437 = vector.multi_reduction <add>, %436, %cst_109 [1] : vector<8x8xf32> to vector<8xf32>
    %438 = vector.shape_cast %437 : vector<8xf32> to vector<8x1xf32>
    %439 = tpu.reciprocal %438 {approx = true} : vector<8x1xf32> -> vector<8x1xf32>
    %440 = vector.broadcast %439 : vector<8x1xf32> to vector<8x8xf32>
    %441 = arith.mulf %436, %440 : vector<8x8xf32>
    %442 = vector.shape_cast %441 : vector<8x8xf32> to vector<8x8x1xf32>
    %443 = vector.broadcast %442 : vector<8x8x1xf32> to vector<8x8x32xf32>
    %444 = arith.mulf %443, %21 : vector<8x8x32xf32>
    %cst_110 = arith.constant dense<0.000000e+00> : vector<8x32xf32>
    %445 = vector.multi_reduction <add>, %444, %cst_110 [1] : vector<8x8x32xf32> to vector<8x32xf32>
    %cst_111 = arith.constant dense<0.000000e+00> : vector<8x224xf32>
    %446 = tpu.matmul %445, %5, %cst_111 {dimension_numbers = #tpu.dot_dimension_numbers<[1], [0], [0], [1], [0, 0, 1, 1], [], []>} : vector<8x32xf32>, vector<32x224xf32>, vector<8x224xf32> -> vector<8x224xf32>
    %447 = vector.extract_strided_slice %446 {offsets = [0, 0], sizes = [8, 96], strides = [1, 1]} : vector<8x224xf32> to vector<8x96xf32>
    %448 = vector.extract_strided_slice %360 {offsets = [0, 160], sizes = [8, 33], strides = [1, 1]} : vector<8x256xf32> to vector<8x33xf32>
    %449 = vector.extract_strided_slice %424 {offsets = [0, 32], sizes = [8, 33], strides = [1, 1]} : vector<8x224xf32> to vector<8x33xf32>
    %450 = arith.addf %448, %449 : vector<8x33xf32>
    %451 = vector.extract_strided_slice %446 {offsets = [0, 160], sizes = [8, 33], strides = [1, 1]} : vector<8x224xf32> to vector<8x33xf32>
    %452 = arith.addf %450, %451 : vector<8x33xf32>
    %453 = vector.extract_strided_slice %452 {offsets = [0, 0], sizes = [8, 16], strides = [1, 1]} : vector<8x33xf32> to vector<8x16xf32>
    %454 = vector.extract_strided_slice %452 {offsets = [0, 16], sizes = [8, 16], strides = [1, 1]} : vector<8x33xf32> to vector<8x16xf32>
    %455 = arith.maximumf %453, %454 : vector<8x16xf32>
    %456 = vector.extract_strided_slice %452 {offsets = [0, 32], sizes = [8, 1], strides = [1, 1]} : vector<8x33xf32> to vector<8x1xf32>
    %457 = arith.negf %456 : vector<8x1xf32>
    %458 = math.exp %457 : vector<8x1xf32>
    %cst_112 = arith.constant 1.000000e+00 : f32
    %459 = vector.broadcast %cst_112 : f32 to vector<8x1xf32>
    %460 = arith.addf %459, %458 : vector<8x1xf32>
    %461 = arith.divf %459, %460 : vector<8x1xf32>
    %462 = tpu.concatenate %455, %441, %461, %31, %390, %423, %445 in 1 : vector<8x16xf32>, vector<8x8xf32>, vector<8x1xf32>, vector<8x7xf32>, vector<8x32xf32>, vector<8x32xf32>, vector<8x32xf32> -> vector<8x128xf32>
    %c3_113 = arith.constant 3 : index
    %c0_114 = arith.constant 0 : index
    %c0_115 = arith.constant 0 : index
    %463 = vector.load %arg5[%c3_113, %c0_114, %c0_115] : memref<6x8x128xf32, #tpu.memory_space<vmem>>, vector<1x8x128xf32>
    %464 = vector.shape_cast %463 : vector<1x8x128xf32> to vector<8x128xf32>
    %465 = vector.shape_cast %462 : vector<8x128xf32> to vector<1x8x128xf32>
    tpu.vector_store %arg5[%c3_113, %c0_114, %c0_115], %465 {strides = array<i32>} : memref<6x8x128xf32, #tpu.memory_space<vmem>>, vector<1x8x128xf32>,
    %c4 = arith.constant 4 : index
    %c0_116 = arith.constant 0 : index
    %c0_117 = arith.constant 0 : index
    %466 = vector.load %arg0[%c4, %c0_116, %c0_117] : memref<6x8x256xf32, #tpu.memory_space<vmem>>, vector<1x8x256xf32>
    %467 = vector.shape_cast %466 : vector<1x8x256xf32> to vector<8x256xf32>
    %468 = vector.extract_strided_slice %467 {offsets = [0, 0], sizes = [8, 96], strides = [1, 1]} : vector<8x256xf32> to vector<8x96xf32>
    %469 = arith.addf %468, %447 : vector<8x96xf32>
    %470 = vector.broadcast %8 : vector<1x96xf32> to vector<8x96xf32>
    %471 = arith.addf %392, %470 : vector<8x96xf32>
    %472 = vector.extract_strided_slice %469 {offsets = [0, 0], sizes = [8, 32], strides = [1, 1]} : vector<8x96xf32> to vector<8x32xf32>
    %473 = vector.extract_strided_slice %471 {offsets = [0, 0], sizes = [8, 32], strides = [1, 1]} : vector<8x96xf32> to vector<8x32xf32>
    %474 = arith.addf %472, %473 : vector<8x32xf32>
    %475 = arith.negf %474 : vector<8x32xf32>
    %476 = math.exp %475 : vector<8x32xf32>
    %cst_118 = arith.constant 1.000000e+00 : f32
    %477 = vector.broadcast %cst_118 : f32 to vector<8x32xf32>
    %478 = arith.addf %477, %476 : vector<8x32xf32>
    %479 = arith.divf %477, %478 : vector<8x32xf32>
    %480 = vector.extract_strided_slice %469 {offsets = [0, 32], sizes = [8, 32], strides = [1, 1]} : vector<8x96xf32> to vector<8x32xf32>
    %481 = vector.extract_strided_slice %471 {offsets = [0, 32], sizes = [8, 32], strides = [1, 1]} : vector<8x96xf32> to vector<8x32xf32>
    %482 = arith.addf %480, %481 : vector<8x32xf32>
    %483 = arith.negf %482 : vector<8x32xf32>
    %484 = math.exp %483 : vector<8x32xf32>
    %cst_119 = arith.constant 1.000000e+00 : f32
    %485 = vector.broadcast %cst_119 : f32 to vector<8x32xf32>
    %486 = arith.addf %485, %484 : vector<8x32xf32>
    %487 = arith.divf %485, %486 : vector<8x32xf32>
    %488 = vector.extract_strided_slice %469 {offsets = [0, 64], sizes = [8, 32], strides = [1, 1]} : vector<8x96xf32> to vector<8x32xf32>
    %489 = vector.extract_strided_slice %471 {offsets = [0, 64], sizes = [8, 32], strides = [1, 1]} : vector<8x96xf32> to vector<8x32xf32>
    %490 = arith.mulf %479, %489 : vector<8x32xf32>
    %491 = arith.addf %488, %490 : vector<8x32xf32>
    %492 = math.tanh %491 : vector<8x32xf32>
    %cst_120 = arith.constant 1.000000e+00 : f32
    %493 = vector.broadcast %cst_120 : f32 to vector<8x32xf32>
    %494 = arith.subf %493, %487 : vector<8x32xf32>
    %495 = arith.mulf %494, %492 : vector<8x32xf32>
    %496 = arith.mulf %487, %390 : vector<8x32xf32>
    %497 = arith.addf %495, %496 : vector<8x32xf32>
    %cst_121 = arith.constant dense<0.000000e+00> : vector<8x224xf32>
    %498 = tpu.matmul %497, %1, %cst_121 {dimension_numbers = #tpu.dot_dimension_numbers<[1], [0], [0], [1], [0, 0, 1, 1], [], []>} : vector<8x32xf32>, vector<32x224xf32>, vector<8x224xf32> -> vector<8x224xf32>
    %499 = vector.extract_strided_slice %498 {offsets = [0, 128], sizes = [8, 96], strides = [1, 1]} : vector<8x224xf32> to vector<8x96xf32>
    %500 = vector.extract_strided_slice %498 {offsets = [0, 0], sizes = [8, 96], strides = [1, 1]} : vector<8x224xf32> to vector<8x96xf32>
    %501 = vector.broadcast %11 : vector<1x96xf32> to vector<8x96xf32>
    %502 = arith.addf %500, %501 : vector<8x96xf32>
    %503 = vector.broadcast %14 : vector<1x96xf32> to vector<8x96xf32>
    %504 = arith.addf %425, %503 : vector<8x96xf32>
    %505 = vector.extract_strided_slice %502 {offsets = [0, 0], sizes = [8, 32], strides = [1, 1]} : vector<8x96xf32> to vector<8x32xf32>
    %506 = vector.extract_strided_slice %504 {offsets = [0, 0], sizes = [8, 32], strides = [1, 1]} : vector<8x96xf32> to vector<8x32xf32>
    %507 = arith.addf %505, %506 : vector<8x32xf32>
    %508 = arith.negf %507 : vector<8x32xf32>
    %509 = math.exp %508 : vector<8x32xf32>
    %cst_122 = arith.constant 1.000000e+00 : f32
    %510 = vector.broadcast %cst_122 : f32 to vector<8x32xf32>
    %511 = arith.addf %510, %509 : vector<8x32xf32>
    %512 = arith.divf %510, %511 : vector<8x32xf32>
    %513 = vector.extract_strided_slice %502 {offsets = [0, 32], sizes = [8, 32], strides = [1, 1]} : vector<8x96xf32> to vector<8x32xf32>
    %514 = vector.extract_strided_slice %504 {offsets = [0, 32], sizes = [8, 32], strides = [1, 1]} : vector<8x96xf32> to vector<8x32xf32>
    %515 = arith.addf %513, %514 : vector<8x32xf32>
    %516 = arith.negf %515 : vector<8x32xf32>
    %517 = math.exp %516 : vector<8x32xf32>
    %cst_123 = arith.constant 1.000000e+00 : f32
    %518 = vector.broadcast %cst_123 : f32 to vector<8x32xf32>
    %519 = arith.addf %518, %517 : vector<8x32xf32>
    %520 = arith.divf %518, %519 : vector<8x32xf32>
    %521 = vector.extract_strided_slice %502 {offsets = [0, 64], sizes = [8, 32], strides = [1, 1]} : vector<8x96xf32> to vector<8x32xf32>
    %522 = vector.extract_strided_slice %504 {offsets = [0, 64], sizes = [8, 32], strides = [1, 1]} : vector<8x96xf32> to vector<8x32xf32>
    %523 = arith.mulf %512, %522 : vector<8x32xf32>
    %524 = arith.addf %521, %523 : vector<8x32xf32>
    %525 = math.tanh %524 : vector<8x32xf32>
    %cst_124 = arith.constant 1.000000e+00 : f32
    %526 = vector.broadcast %cst_124 : f32 to vector<8x32xf32>
    %527 = arith.subf %526, %520 : vector<8x32xf32>
    %528 = arith.mulf %527, %525 : vector<8x32xf32>
    %529 = arith.mulf %520, %423 : vector<8x32xf32>
    %530 = arith.addf %528, %529 : vector<8x32xf32>
    %cst_125 = arith.constant dense<0.000000e+00> : vector<8x224xf32>
    %531 = tpu.matmul %530, %3, %cst_125 {dimension_numbers = #tpu.dot_dimension_numbers<[1], [0], [0], [1], [0, 0, 1, 1], [], []>} : vector<8x32xf32>, vector<32x224xf32>, vector<8x224xf32> -> vector<8x224xf32>
    %532 = vector.extract_strided_slice %531 {offsets = [0, 128], sizes = [8, 96], strides = [1, 1]} : vector<8x224xf32> to vector<8x96xf32>
    %533 = vector.extract_strided_slice %531 {offsets = [0, 0], sizes = [8, 32], strides = [1, 1]} : vector<8x224xf32> to vector<8x32xf32>
    %534 = vector.shape_cast %533 : vector<8x32xf32> to vector<8x1x32xf32>
    %535 = vector.broadcast %534 : vector<8x1x32xf32> to vector<8x8x32xf32>
    %536 = arith.addf %19, %535 : vector<8x8x32xf32>
    %537 = math.tanh %536 : vector<8x8x32xf32>
    %538 = vector.shape_cast %17 : vector<1x32xf32> to vector<1x1x32xf32>
    %539 = vector.broadcast %538 : vector<1x1x32xf32> to vector<8x8x32xf32>
    %540 = arith.mulf %537, %539 : vector<8x8x32xf32>
    %cst_126 = arith.constant dense<0.000000e+00> : vector<8x8xf32>
    %541 = vector.multi_reduction <add>, %540, %cst_126 [2] : vector<8x8x32xf32> to vector<8x8xf32>
    %542 = arith.addf %541, %24 : vector<8x8xf32>
    %543 = math.exp %542 : vector<8x8xf32>
    %cst_127 = arith.constant dense<0.000000e+00> : vector<8xf32>
    %544 = vector.multi_reduction <add>, %543, %cst_127 [1] : vector<8x8xf32> to vector<8xf32>
    %545 = vector.shape_cast %544 : vector<8xf32> to vector<8x1xf32>
    %546 = tpu.reciprocal %545 {approx = true} : vector<8x1xf32> -> vector<8x1xf32>
    %547 = vector.broadcast %546 : vector<8x1xf32> to vector<8x8xf32>
    %548 = arith.mulf %543, %547 : vector<8x8xf32>
    %549 = vector.shape_cast %548 : vector<8x8xf32> to vector<8x8x1xf32>
    %550 = vector.broadcast %549 : vector<8x8x1xf32> to vector<8x8x32xf32>
    %551 = arith.mulf %550, %21 : vector<8x8x32xf32>
    %cst_128 = arith.constant dense<0.000000e+00> : vector<8x32xf32>
    %552 = vector.multi_reduction <add>, %551, %cst_128 [1] : vector<8x8x32xf32> to vector<8x32xf32>
    %cst_129 = arith.constant dense<0.000000e+00> : vector<8x224xf32>
    %553 = tpu.matmul %552, %5, %cst_129 {dimension_numbers = #tpu.dot_dimension_numbers<[1], [0], [0], [1], [0, 0, 1, 1], [], []>} : vector<8x32xf32>, vector<32x224xf32>, vector<8x224xf32> -> vector<8x224xf32>
    %554 = vector.extract_strided_slice %553 {offsets = [0, 0], sizes = [8, 96], strides = [1, 1]} : vector<8x224xf32> to vector<8x96xf32>
    %555 = vector.extract_strided_slice %467 {offsets = [0, 160], sizes = [8, 33], strides = [1, 1]} : vector<8x256xf32> to vector<8x33xf32>
    %556 = vector.extract_strided_slice %531 {offsets = [0, 32], sizes = [8, 33], strides = [1, 1]} : vector<8x224xf32> to vector<8x33xf32>
    %557 = arith.addf %555, %556 : vector<8x33xf32>
    %558 = vector.extract_strided_slice %553 {offsets = [0, 160], sizes = [8, 33], strides = [1, 1]} : vector<8x224xf32> to vector<8x33xf32>
    %559 = arith.addf %557, %558 : vector<8x33xf32>
    %560 = vector.extract_strided_slice %559 {offsets = [0, 0], sizes = [8, 16], strides = [1, 1]} : vector<8x33xf32> to vector<8x16xf32>
    %561 = vector.extract_strided_slice %559 {offsets = [0, 16], sizes = [8, 16], strides = [1, 1]} : vector<8x33xf32> to vector<8x16xf32>
    %562 = arith.maximumf %560, %561 : vector<8x16xf32>
    %563 = vector.extract_strided_slice %559 {offsets = [0, 32], sizes = [8, 1], strides = [1, 1]} : vector<8x33xf32> to vector<8x1xf32>
    %564 = arith.negf %563 : vector<8x1xf32>
    %565 = math.exp %564 : vector<8x1xf32>
    %cst_130 = arith.constant 1.000000e+00 : f32
    %566 = vector.broadcast %cst_130 : f32 to vector<8x1xf32>
    %567 = arith.addf %566, %565 : vector<8x1xf32>
    %568 = arith.divf %566, %567 : vector<8x1xf32>
    %569 = tpu.concatenate %562, %548, %568, %31, %497, %530, %552 in 1 : vector<8x16xf32>, vector<8x8xf32>, vector<8x1xf32>, vector<8x7xf32>, vector<8x32xf32>, vector<8x32xf32>, vector<8x32xf32> -> vector<8x128xf32>
    %c4_131 = arith.constant 4 : index
    %c0_132 = arith.constant 0 : index
    %c0_133 = arith.constant 0 : index
    %570 = vector.load %arg5[%c4_131, %c0_132, %c0_133] : memref<6x8x128xf32, #tpu.memory_space<vmem>>, vector<1x8x128xf32>
    %571 = vector.shape_cast %570 : vector<1x8x128xf32> to vector<8x128xf32>
    %572 = vector.shape_cast %569 : vector<8x128xf32> to vector<1x8x128xf32>
    tpu.vector_store %arg5[%c4_131, %c0_132, %c0_133], %572 {strides = array<i32>} : memref<6x8x128xf32, #tpu.memory_space<vmem>>, vector<1x8x128xf32>,
    %c5 = arith.constant 5 : index
    %c0_134 = arith.constant 0 : index
    %c0_135 = arith.constant 0 : index
    %573 = vector.load %arg0[%c5, %c0_134, %c0_135] : memref<6x8x256xf32, #tpu.memory_space<vmem>>, vector<1x8x256xf32>
    %574 = vector.shape_cast %573 : vector<1x8x256xf32> to vector<8x256xf32>
    %575 = vector.extract_strided_slice %574 {offsets = [0, 0], sizes = [8, 96], strides = [1, 1]} : vector<8x256xf32> to vector<8x96xf32>
    %576 = arith.addf %575, %554 : vector<8x96xf32>
    %577 = vector.broadcast %8 : vector<1x96xf32> to vector<8x96xf32>
    %578 = arith.addf %499, %577 : vector<8x96xf32>
    %579 = vector.extract_strided_slice %576 {offsets = [0, 0], sizes = [8, 32], strides = [1, 1]} : vector<8x96xf32> to vector<8x32xf32>
    %580 = vector.extract_strided_slice %578 {offsets = [0, 0], sizes = [8, 32], strides = [1, 1]} : vector<8x96xf32> to vector<8x32xf32>
    %581 = arith.addf %579, %580 : vector<8x32xf32>
    %582 = arith.negf %581 : vector<8x32xf32>
    %583 = math.exp %582 : vector<8x32xf32>
    %cst_136 = arith.constant 1.000000e+00 : f32
    %584 = vector.broadcast %cst_136 : f32 to vector<8x32xf32>
    %585 = arith.addf %584, %583 : vector<8x32xf32>
    %586 = arith.divf %584, %585 : vector<8x32xf32>
    %587 = vector.extract_strided_slice %576 {offsets = [0, 32], sizes = [8, 32], strides = [1, 1]} : vector<8x96xf32> to vector<8x32xf32>
    %588 = vector.extract_strided_slice %578 {offsets = [0, 32], sizes = [8, 32], strides = [1, 1]} : vector<8x96xf32> to vector<8x32xf32>
    %589 = arith.addf %587, %588 : vector<8x32xf32>
    %590 = arith.negf %589 : vector<8x32xf32>
    %591 = math.exp %590 : vector<8x32xf32>
    %cst_137 = arith.constant 1.000000e+00 : f32
    %592 = vector.broadcast %cst_137 : f32 to vector<8x32xf32>
    %593 = arith.addf %592, %591 : vector<8x32xf32>
    %594 = arith.divf %592, %593 : vector<8x32xf32>
    %595 = vector.extract_strided_slice %576 {offsets = [0, 64], sizes = [8, 32], strides = [1, 1]} : vector<8x96xf32> to vector<8x32xf32>
    %596 = vector.extract_strided_slice %578 {offsets = [0, 64], sizes = [8, 32], strides = [1, 1]} : vector<8x96xf32> to vector<8x32xf32>
    %597 = arith.mulf %586, %596 : vector<8x32xf32>
    %598 = arith.addf %595, %597 : vector<8x32xf32>
    %599 = math.tanh %598 : vector<8x32xf32>
    %cst_138 = arith.constant 1.000000e+00 : f32
    %600 = vector.broadcast %cst_138 : f32 to vector<8x32xf32>
    %601 = arith.subf %600, %594 : vector<8x32xf32>
    %602 = arith.mulf %601, %599 : vector<8x32xf32>
    %603 = arith.mulf %594, %497 : vector<8x32xf32>
    %604 = arith.addf %602, %603 : vector<8x32xf32>
    %cst_139 = arith.constant dense<0.000000e+00> : vector<8x224xf32>
    %605 = tpu.matmul %604, %1, %cst_139 {dimension_numbers = #tpu.dot_dimension_numbers<[1], [0], [0], [1], [0, 0, 1, 1], [], []>} : vector<8x32xf32>, vector<32x224xf32>, vector<8x224xf32> -> vector<8x224xf32>
    %606 = vector.extract_strided_slice %605 {offsets = [0, 0], sizes = [8, 96], strides = [1, 1]} : vector<8x224xf32> to vector<8x96xf32>
    %607 = vector.broadcast %11 : vector<1x96xf32> to vector<8x96xf32>
    %608 = arith.addf %606, %607 : vector<8x96xf32>
    %609 = vector.broadcast %14 : vector<1x96xf32> to vector<8x96xf32>
    %610 = arith.addf %532, %609 : vector<8x96xf32>
    %611 = vector.extract_strided_slice %608 {offsets = [0, 0], sizes = [8, 32], strides = [1, 1]} : vector<8x96xf32> to vector<8x32xf32>
    %612 = vector.extract_strided_slice %610 {offsets = [0, 0], sizes = [8, 32], strides = [1, 1]} : vector<8x96xf32> to vector<8x32xf32>
    %613 = arith.addf %611, %612 : vector<8x32xf32>
    %614 = arith.negf %613 : vector<8x32xf32>
    %615 = math.exp %614 : vector<8x32xf32>
    %cst_140 = arith.constant 1.000000e+00 : f32
    %616 = vector.broadcast %cst_140 : f32 to vector<8x32xf32>
    %617 = arith.addf %616, %615 : vector<8x32xf32>
    %618 = arith.divf %616, %617 : vector<8x32xf32>
    %619 = vector.extract_strided_slice %608 {offsets = [0, 32], sizes = [8, 32], strides = [1, 1]} : vector<8x96xf32> to vector<8x32xf32>
    %620 = vector.extract_strided_slice %610 {offsets = [0, 32], sizes = [8, 32], strides = [1, 1]} : vector<8x96xf32> to vector<8x32xf32>
    %621 = arith.addf %619, %620 : vector<8x32xf32>
    %622 = arith.negf %621 : vector<8x32xf32>
    %623 = math.exp %622 : vector<8x32xf32>
    %cst_141 = arith.constant 1.000000e+00 : f32
    %624 = vector.broadcast %cst_141 : f32 to vector<8x32xf32>
    %625 = arith.addf %624, %623 : vector<8x32xf32>
    %626 = arith.divf %624, %625 : vector<8x32xf32>
    %627 = vector.extract_strided_slice %608 {offsets = [0, 64], sizes = [8, 32], strides = [1, 1]} : vector<8x96xf32> to vector<8x32xf32>
    %628 = vector.extract_strided_slice %610 {offsets = [0, 64], sizes = [8, 32], strides = [1, 1]} : vector<8x96xf32> to vector<8x32xf32>
    %629 = arith.mulf %618, %628 : vector<8x32xf32>
    %630 = arith.addf %627, %629 : vector<8x32xf32>
    %631 = math.tanh %630 : vector<8x32xf32>
    %cst_142 = arith.constant 1.000000e+00 : f32
    %632 = vector.broadcast %cst_142 : f32 to vector<8x32xf32>
    %633 = arith.subf %632, %626 : vector<8x32xf32>
    %634 = arith.mulf %633, %631 : vector<8x32xf32>
    %635 = arith.mulf %626, %530 : vector<8x32xf32>
    %636 = arith.addf %634, %635 : vector<8x32xf32>
    %cst_143 = arith.constant dense<0.000000e+00> : vector<8x224xf32>
    %637 = tpu.matmul %636, %3, %cst_143 {dimension_numbers = #tpu.dot_dimension_numbers<[1], [0], [0], [1], [0, 0, 1, 1], [], []>} : vector<8x32xf32>, vector<32x224xf32>, vector<8x224xf32> -> vector<8x224xf32>
    %638 = vector.extract_strided_slice %637 {offsets = [0, 0], sizes = [8, 32], strides = [1, 1]} : vector<8x224xf32> to vector<8x32xf32>
    %639 = vector.shape_cast %638 : vector<8x32xf32> to vector<8x1x32xf32>
    %640 = vector.broadcast %639 : vector<8x1x32xf32> to vector<8x8x32xf32>
    %641 = arith.addf %19, %640 : vector<8x8x32xf32>
    %642 = math.tanh %641 : vector<8x8x32xf32>
    %643 = vector.shape_cast %17 : vector<1x32xf32> to vector<1x1x32xf32>
    %644 = vector.broadcast %643 : vector<1x1x32xf32> to vector<8x8x32xf32>
    %645 = arith.mulf %642, %644 : vector<8x8x32xf32>
    %cst_144 = arith.constant dense<0.000000e+00> : vector<8x8xf32>
    %646 = vector.multi_reduction <add>, %645, %cst_144 [2] : vector<8x8x32xf32> to vector<8x8xf32>
    %647 = arith.addf %646, %24 : vector<8x8xf32>
    %648 = math.exp %647 : vector<8x8xf32>
    %cst_145 = arith.constant dense<0.000000e+00> : vector<8xf32>
    %649 = vector.multi_reduction <add>, %648, %cst_145 [1] : vector<8x8xf32> to vector<8xf32>
    %650 = vector.shape_cast %649 : vector<8xf32> to vector<8x1xf32>
    %651 = tpu.reciprocal %650 {approx = true} : vector<8x1xf32> -> vector<8x1xf32>
    %652 = vector.broadcast %651 : vector<8x1xf32> to vector<8x8xf32>
    %653 = arith.mulf %648, %652 : vector<8x8xf32>
    %654 = vector.shape_cast %653 : vector<8x8xf32> to vector<8x8x1xf32>
    %655 = vector.broadcast %654 : vector<8x8x1xf32> to vector<8x8x32xf32>
    %656 = arith.mulf %655, %21 : vector<8x8x32xf32>
    %cst_146 = arith.constant dense<0.000000e+00> : vector<8x32xf32>
    %657 = vector.multi_reduction <add>, %656, %cst_146 [1] : vector<8x8x32xf32> to vector<8x32xf32>
    %cst_147 = arith.constant dense<0.000000e+00> : vector<8x224xf32>
    %658 = tpu.matmul %657, %5, %cst_147 {dimension_numbers = #tpu.dot_dimension_numbers<[1], [0], [0], [1], [0, 0, 1, 1], [], []>} : vector<8x32xf32>, vector<32x224xf32>, vector<8x224xf32> -> vector<8x224xf32>
    %659 = vector.extract_strided_slice %574 {offsets = [0, 160], sizes = [8, 33], strides = [1, 1]} : vector<8x256xf32> to vector<8x33xf32>
    %660 = vector.extract_strided_slice %637 {offsets = [0, 32], sizes = [8, 33], strides = [1, 1]} : vector<8x224xf32> to vector<8x33xf32>
    %661 = arith.addf %659, %660 : vector<8x33xf32>
    %662 = vector.extract_strided_slice %658 {offsets = [0, 160], sizes = [8, 33], strides = [1, 1]} : vector<8x224xf32> to vector<8x33xf32>
    %663 = arith.addf %661, %662 : vector<8x33xf32>
    %664 = vector.extract_strided_slice %663 {offsets = [0, 0], sizes = [8, 16], strides = [1, 1]} : vector<8x33xf32> to vector<8x16xf32>
    %665 = vector.extract_strided_slice %663 {offsets = [0, 16], sizes = [8, 16], strides = [1, 1]} : vector<8x33xf32> to vector<8x16xf32>
    %666 = arith.maximumf %664, %665 : vector<8x16xf32>
    %667 = vector.extract_strided_slice %663 {offsets = [0, 32], sizes = [8, 1], strides = [1, 1]} : vector<8x33xf32> to vector<8x1xf32>
    %668 = arith.negf %667 : vector<8x1xf32>
    %669 = math.exp %668 : vector<8x1xf32>
    %cst_148 = arith.constant 1.000000e+00 : f32
    %670 = vector.broadcast %cst_148 : f32 to vector<8x1xf32>
    %671 = arith.addf %670, %669 : vector<8x1xf32>
    %672 = arith.divf %670, %671 : vector<8x1xf32>
    %673 = tpu.concatenate %666, %653, %672, %31, %604, %636, %657 in 1 : vector<8x16xf32>, vector<8x8xf32>, vector<8x1xf32>, vector<8x7xf32>, vector<8x32xf32>, vector<8x32xf32>, vector<8x32xf32> -> vector<8x128xf32>
    %c5_149 = arith.constant 5 : index
    %c0_150 = arith.constant 0 : index
    %c0_151 = arith.constant 0 : index
    %674 = vector.load %arg5[%c5_149, %c0_150, %c0_151] : memref<6x8x128xf32, #tpu.memory_space<vmem>>, vector<1x8x128xf32>
    %675 = vector.shape_cast %674 : vector<1x8x128xf32> to vector<8x128xf32>
    %676 = vector.shape_cast %673 : vector<8x128xf32> to vector<1x8x128xf32>
    tpu.vector_store %arg5[%c5_149, %c0_150, %c0_151], %676 {strides = array<i32>} : memref<6x8x128xf32, #tpu.memory_space<vmem>>, vector<1x8x128xf32>,
    return
  }
}

</mosaic_0001>

<llo_original>
// kernel: decoder_forward.1
$region0: #{decoder_forward.1}
  #allocation0 [shape = 'u32[]', space=smem, size = 0x4, offset = 0x4, fixed_abs, tag = 'smem constant byte address 0x4 - core index']
  #allocation1 [shape = 'u32[144,128]{1,0:T(1,128)}', space=vmem, size = 0x12000, scoped, tag = 'internal scratch']
  %s0 = inlined_call_operand.vmem [shape: f32[6,8,256], index: 0, kind: input, shape index: {}]
  %s1 = inlined_call_operand.vmem [shape: f32[3,32,224], index: 1, kind: input, shape index: {}]
  %s2 = inlined_call_operand.vmem [shape: f32[4,1,128], index: 2, kind: input, shape index: {}]
  %s3 = inlined_call_operand.vmem [shape: f32[2,8,8,32], index: 3, kind: input, shape index: {}]
  %s4 = inlined_call_operand.vmem [shape: f32[4,8,32], index: 4, kind: input, shape index: {}]
  %s5 = inlined_call_operand.vmem [shape: f32[6,8,128], index: 5, kind: output, shape index: {}]
  %s6 = sld [smem:[#allocation0]]
  $region30: #{decoder_forward.1} parent=0
    _
  %s8 = ssub.s32 1, %s6
  %s9 = scalar_select 0, %s8, %s6
  // Predicated region
  $region2: #{decoder_forward.1} parent=0 // pred_check
    _
  $region3: #{decoder_forward.1} parent=0 // pred_check_branch
    %11 = sbr.rel (0) target = $region5
  $region4: #{decoder_forward.1} parent=0 // pred_region
    _
  $region5: #{decoder_forward.1} parent=0 // pred_fallthru
    _
  // Predicated region
  $region6: #{decoder_forward.1} parent=0 // pred_check
    _
  $region7: #{decoder_forward.1} parent=0 // pred_check_branch
    %13 = sbr.rel (0) target = $region9
  $region8: #{decoder_forward.1} parent=0 // pred_region
    _
  $region9: #{decoder_forward.1} parent=0 // pred_fallthru
    _
  // Predicated region
  $region10: #{decoder_forward.1} parent=0 // pred_check
    _
  $region11: #{decoder_forward.1} parent=0 // pred_check_branch
    %15 = sbr.rel (0) target = $region13
  $region12: #{decoder_forward.1} parent=0 // pred_region
    _
  $region13: #{decoder_forward.1} parent=0 // pred_fallthru
    _
  // Predicated region
  $region14: #{decoder_forward.1} parent=0 // pred_check
    _
  $region15: #{decoder_forward.1} parent=0 // pred_check_branch
    %17 = sbr.rel (0) target = $region17
  $region16: #{decoder_forward.1} parent=0 // pred_region
    _
  $region17: #{decoder_forward.1} parent=0 // pred_fallthru
    _
  // Predicated region
  $region18: #{decoder_forward.1} parent=0 // pred_check
    _
  $region19: #{decoder_forward.1} parent=0 // pred_check_branch
    %19 = sbr.rel (0) target = $region21
  $region20: #{decoder_forward.1} parent=0 // pred_region
    _
  $region21: #{decoder_forward.1} parent=0 // pred_fallthru
    _
  %v20 = vld [vmem:[%s1] sm:$0xff]
  %v21 = vld [vmem:[%s1 + $0x8] sm:$0xff]
  %v22 = vld [vmem:[%s1 + $0x10] sm:$0xff]
  %v23 = vld [vmem:[%s1 + $0x18] sm:$0xff]
  %v24 = vld [vmem:[%s1 + $0x20] sm:$0xff]
  %v25 = vld [vmem:[%s1 + $0x28] sm:$0xff]
  %v26 = vld [vmem:[%s1 + $0x30] sm:$0xff]
  %v27 = vld [vmem:[%s1 + $0x38] sm:$0xff]
  %s28 = scalar_lea.vmem %s1, 64
  %v29 = vld [vmem:[%s28] sm:$0xff]
  %v30 = vld [vmem:[%s28 + $0x8] sm:$0xff]
  %v31 = vld [vmem:[%s28 + $0x10] sm:$0xff]
  %v32 = vld [vmem:[%s28 + $0x18] sm:$0xff]
  %v33 = vld [vmem:[%s28 + $0x20] sm:$0xff]
  %v34 = vld [vmem:[%s28 + $0x28] sm:$0xff]
  %v35 = vld [vmem:[%s28 + $0x30] sm:$0xff]
  %v36 = vld [vmem:[%s28 + $0x38] sm:$0xff]
  %s37 = scalar_lea.vmem %s1, 128
  %v38 = vld [vmem:[%s37] sm:$0xff]
  %v39 = vld [vmem:[%s37 + $0x8] sm:$0xff]
  %v40 = vld [vmem:[%s37 + $0x10] sm:$0xff]
  %v41 = vld [vmem:[%s37 + $0x18] sm:$0xff]
  %v42 = vld [vmem:[%s37 + $0x20] sm:$0xff]
  %v43 = vld [vmem:[%s37 + $0x28] sm:$0xff]
  %v44 = vld [vmem:[%s37 + $0x30] sm:$0xff]
  %v45 = vld [vmem:[%s37 + $0x38] sm:$0xff]
  %v46 = vld [vmem:[%s2] sm:$0x1]
  %s47 = scalar_lea.vmem %s2, 1
  %v48 = vld [vmem:[%s47] sm:$0x1]
  %s49 = scalar_lea.vmem %s2, 2
  %v50 = vld [vmem:[%s49] sm:$0x1]
  %s51 = scalar_lea.vmem %s2, 3
  %v52 = vld [vmem:[%s51] sm:$0x1]
  %v53 = vld [vmem:[%s3] sm:$0xff]
  %v54 = vld [vmem:[%s3 + $0x8] sm:$0xff]
  %v55 = vld [vmem:[%s3 + $0x10] sm:$0xff]
  %v56 = vld [vmem:[%s3 + $0x18] sm:$0xff]
  %v57 = vld [vmem:[%s3 + $0x20] sm:$0xff]
  %v58 = vld [vmem:[%s3 + $0x28] sm:$0xff]
  %v59 = vld [vmem:[%s3 + $0x30] sm:$0xff]
  %v60 = vld [vmem:[%s3 + $0x38] sm:$0xff]
  %s61 = scalar_lea.vmem %s3, 64
  %v62 = vld [vmem:[%s61] sm:$0xff]
  %v63 = vld [vmem:[%s61 + $0x8] sm:$0xff]
  %v64 = vld [vmem:[%s61 + $0x10] sm:$0xff]
  %v65 = vld [vmem:[%s61 + $0x18] sm:$0xff]
  %v66 = vld [vmem:[%s61 + $0x20] sm:$0xff]
  %v67 = vld [vmem:[%s61 + $0x28] sm:$0xff]
  %v68 = vld [vmem:[%s61 + $0x30] sm:$0xff]
  %v69 = vld [vmem:[%s61 + $0x38] sm:$0xff]
  %s70 = scalar_lea.vmem %s4, 24
  %v71 = vld [vmem:[%s70] sm:$0xff]
  %v72 = vld [vmem:[%s4] sm:$0xff]
  %s73 = scalar_lea.vmem %s4, 8
  %v74 = vld [vmem:[%s73] sm:$0xff]
  %s75 = scalar_lea.vmem %s4, 16
  %v76 = vld [vmem:[%s75] sm:$0xff]
  %vm77 = vcmask 261120
  %v79 = vsel %vm77, %v72, 0
  %81 = vmatprep.subr.mxu0 %v21
  %82 = vmatpush1.msra.mxu0 %v20
  %83 = vmatprep.subr.mxu0 %v23
  %84 = vmatpush1.msra.mxu0 %v22
  %85 = vmatprep.subr.mxu0 %v25
  %86 = vmatpush1.msra.mxu0 %v24
  %87 = vmatprep.subr.mxu0 %v27
  %88 = vmatpush1.msra.mxu0 %v26
  %89 = vmatprep.subr.mxu0 0.0
  %90 = vmatpush1.msra.mxu0 0.0
  %91 = vmatprep.subr.mxu0 0.0
  %92 = vmatpush1.msra.mxu0 0.0
  %93 = vmatprep.subr.mxu0 0.0
  %94 = vmatpush1.msra.mxu0 0.0
  %95 = vmatprep.subr.mxu0 0.0
  %96 = vmatpush1.msra.mxu0 0.0
  %97 = vmatprep.subr.mxu0 0.0
  %98 = vmatpush1.msra.mxu0 0.0
  %99 = vmatprep.subr.mxu0 0.0
  %100 = vmatpush1.msra.mxu0 0.0
  %101 = vmatprep.subr.mxu0 0.0
  %102 = vmatpush1.msra.mxu0 0.0
  %103 = vmatprep.subr.mxu0 0.0
  %104 = vmatpush1.msra.mxu0 0.0
  %105 = vmatprep.subr.mxu0 0.0
  %106 = vmatpush1.msra.mxu0 0.0
  %107 = vmatprep.subr.mxu0 0.0
  %108 = vmatpush1.msra.mxu0 0.0
  %109 = vmatprep.subr.mxu0 0.0
  %110 = vmatpush1.msra.mxu0 0.0
  %111 = vmatprep.subr.mxu0 0.0
  %112 = vmatpush1.msra.mxu0 0.0
  %113 = vmatprep.subr.mxu0 0.0
  %114 = vmatpush1.msra.mxu0 0.0
  %115 = vmatprep.subr.mxu0 0.0
  %116 = vmatpush1.msra.mxu0 0.0
  %117 = vmatprep.subr.mxu0 0.0
  %118 = vmatpush1.msra.mxu0 0.0
  %119 = vmatprep.subr.mxu0 0.0
  %120 = vmatpush1.msra.mxu0 0.0
  %121 = vmatprep.subr.mxu0 0.0
  %122 = vmatpush1.msra.mxu0 0.0
  %123 = vmatprep.subr.mxu0 0.0
  %124 = vmatpush1.msra.mxu0 0.0
  %125 = vmatprep.subr.mxu0 0.0
  %126 = vmatpush1.msra.mxu0 0.0
  %127 = vmatprep.subr.mxu0 0.0
  %128 = vmatpush1.msra.mxu0 0.0
  %129 = vmatprep.subr.mxu0 0.0
  %130 = vmatpush1.msra.mxu0 0.0
  %131 = vmatprep.subr.mxu0 0.0
  %132 = vmatpush1.msra.mxu0 0.0
  %133 = vmatprep.subr.mxu0 0.0
  %134 = vmatpush1.msra.mxu0 0.0
  %135 = vmatprep.subr.mxu0 0.0
  %136 = vmatpush1.msra.mxu0 0.0
  %137 = vmatprep.subr.mxu0 0.0
  %138 = vmatpush1.msra.mxu0 0.0
  %139 = vmatprep.subr.mxu0 0.0
  %140 = vmatpush1.msra.mxu0 0.0
  %141 = vmatprep.subr.mxu0 0.0
  %142 = vmatpush1.msra.mxu0 0.0
  %143 = vmatprep.subr.mxu0 0.0
  %144 = vmatpush1.msra.mxu0 0.0
  %145 = vmatprep.mubr.f32.mxu0 0.0
  %146 = vmatmul.mubr.f32.gmra.mrb[0].mxu0 %v79
  %v147 = vpop.f32.mrb[0].mxu0
  %v148 = vpop.f32.mrb[0].mxu0
  %v149 = vadd.f32 0.0, %v148
  %150 = vdwg.mxu0
  %v152 = vsel %vm77, %v74, 0
  %154 = vmatprep.subr.mxu0 %v30
  %155 = vmatpush1.msra.mxu0 %v29
  %156 = vmatprep.subr.mxu0 %v32
  %157 = vmatpush1.msra.mxu0 %v31
  %158 = vmatprep.subr.mxu0 %v34
  %159 = vmatpush1.msra.mxu0 %v33
  %160 = vmatprep.subr.mxu0 %v36
  %161 = vmatpush1.msra.mxu0 %v35
  %162 = vmatprep.subr.mxu0 0.0
  %163 = vmatpush1.msra.mxu0 0.0
  %164 = vmatprep.subr.mxu0 0.0
  %165 = vmatpush1.msra.mxu0 0.0
  %166 = vmatprep.subr.mxu0 0.0
  %167 = vmatpush1.msra.mxu0 0.0
  %168 = vmatprep.subr.mxu0 0.0
  %169 = vmatpush1.msra.mxu0 0.0
  %170 = vmatprep.subr.mxu0 0.0
  %171 = vmatpush1.msra.mxu0 0.0
  %172 = vmatprep.subr.mxu0 0.0
  %173 = vmatpush1.msra.mxu0 0.0
  %174 = vmatprep.subr.mxu0 0.0
  %175 = vmatpush1.msra.mxu0 0.0
  %176 = vmatprep.subr.mxu0 0.0
  %177 = vmatpush1.msra.mxu0 0.0
  %178 = vmatprep.subr.mxu0 0.0
  %179 = vmatpush1.msra.mxu0 0.0
  %180 = vmatprep.subr.mxu0 0.0
  %181 = vmatpush1.msra.mxu0 0.0
  %182 = vmatprep.subr.mxu0 0.0
  %183 = vmatpush1.msra.mxu0 0.0
  %184 = vmatprep.subr.mxu0 0.0
  %185 = vmatpush1.msra.mxu0 0.0
  %186 = vmatprep.subr.mxu0 0.0
  %187 = vmatpush1.msra.mxu0 0.0
  %188 = vmatprep.subr.mxu0 0.0
  %189 = vmatpush1.msra.mxu0 0.0
  %190 = vmatprep.subr.mxu0 0.0
  %191 = vmatpush1.msra.mxu0 0.0
  %192 = vmatprep.subr.mxu0 0.0
  %193 = vmatpush1.msra.mxu0 0.0
  %194 = vmatprep.subr.mxu0 0.0
  %195 = vmatpush1.msra.mxu0 0.0
  %196 = vmatprep.subr.mxu0 0.0
  %197 = vmatpush1.msra.mxu0 0.0
  %198 = vmatprep.subr.mxu0 0.0
  %199 = vmatpush1.msra.mxu0 0.0
  %200 = vmatprep.subr.mxu0 0.0
  %201 = vmatpush1.msra.mxu0 0.0
  %202 = vmatprep.subr.mxu0 0.0
  %203 = vmatpush1.msra.mxu0 0.0
  %204 = vmatprep.subr.mxu0 0.0
  %205 = vmatpush1.msra.mxu0 0.0
  %206 = vmatprep.subr.mxu0 0.0
  %207 = vmatpush1.msra.mxu0 0.0
  %208 = vmatprep.subr.mxu0 0.0
  %209 = vmatpush1.msra.mxu0 0.0
  %210 = vmatprep.subr.mxu0 0.0
  %211 = vmatpush1.msra.mxu0 0.0
  %212 = vmatprep.subr.mxu0 0.0
  %213 = vmatpush1.msra.mxu0 0.0
  %214 = vmatprep.subr.mxu0 0.0
  %215 = vmatpush1.msra.mxu0 0.0
  %216 = vmatprep.subr.mxu0 0.0
  %217 = vmatpush1.msra.mxu0 0.0
  %218 = vmatprep.mubr.f32.mxu0 0.0
  %219 = vmatmul.mubr.f32.gmra.mrb[0].mxu0 %v152
  %v220 = vpop.f32.mrb[0].mxu0
  %v221 = vpop.f32.mrb[0].mxu0
  %v222 = vadd.f32 0.0, %v221
  %223 = vdwg.mxu0
  %v225 = vsel %vm77, %v76, 0
  %227 = vmatprep.subr.mxu0 %v39
  %228 = vmatpush1.msra.mxu0 %v38
  %229 = vmatprep.subr.mxu0 %v41
  %230 = vmatpush1.msra.mxu0 %v40
  %231 = vmatprep.subr.mxu0 %v43
  %232 = vmatpush1.msra.mxu0 %v42
  %233 = vmatprep.subr.mxu0 %v45
  %234 = vmatpush1.msra.mxu0 %v44
  %235 = vmatprep.subr.mxu0 0.0
  %236 = vmatpush1.msra.mxu0 0.0
  %237 = vmatprep.subr.mxu0 0.0
  %238 = vmatpush1.msra.mxu0 0.0
  %239 = vmatprep.subr.mxu0 0.0
  %240 = vmatpush1.msra.mxu0 0.0
  %241 = vmatprep.subr.mxu0 0.0
  %242 = vmatpush1.msra.mxu0 0.0
  %243 = vmatprep.subr.mxu0 0.0
  %244 = vmatpush1.msra.mxu0 0.0
  %245 = vmatprep.subr.mxu0 0.0
  %246 = vmatpush1.msra.mxu0 0.0
  %247 = vmatprep.subr.mxu0 0.0
  %248 = vmatpush1.msra.mxu0 0.0
  %249 = vmatprep.subr.mxu0 0.0
  %250 = vmatpush1.msra.mxu0 0.0
  %251 = vmatprep.subr.mxu0 0.0
  %252 = vmatpush1.msra.mxu0 0.0
  %253 = vmatprep.subr.mxu0 0.0
  %254 = vmatpush1.msra.mxu0 0.0
  %255 = vmatprep.subr.mxu0 0.0
  %256 = vmatpush1.msra.mxu0 0.0
  %257 = vmatprep.subr.mxu0 0.0
  %258 = vmatpush1.msra.mxu0 0.0
  %259 = vmatprep.subr.mxu0 0.0
  %260 = vmatpush1.msra.mxu0 0.0
  %261 = vmatprep.subr.mxu0 0.0
  %262 = vmatpush1.msra.mxu0 0.0
  %263 = vmatprep.subr.mxu0 0.0
  %264 = vmatpush1.msra.mxu0 0.0
  %265 = vmatprep.subr.mxu0 0.0
  %266 = vmatpush1.msra.mxu0 0.0
  %267 = vmatprep.subr.mxu0 0.0
  %268 = vmatpush1.msra.mxu0 0.0
  %269 = vmatprep.subr.mxu0 0.0
  %270 = vmatpush1.msra.mxu0 0.0
  %271 = vmatprep.subr.mxu0 0.0
  %272 = vmatpush1.msra.mxu0 0.0
  %273 = vmatprep.subr.mxu0 0.0
  %274 = vmatpush1.msra.mxu0 0.0
  %275 = vmatprep.subr.mxu0 0.0
  %276 = vmatpush1.msra.mxu0 0.0
  %277 = vmatprep.subr.mxu0 0.0
  %278 = vmatpush1.msra.mxu0 0.0
  %279 = vmatprep.subr.mxu0 0.0
  %280 = vmatpush1.msra.mxu0 0.0
  %281 = vmatprep.subr.mxu0 0.0
  %282 = vmatpush1.msra.mxu0 0.0
  %283 = vmatprep.subr.mxu0 0.0
  %284 = vmatpush1.msra.mxu0 0.0
  %285 = vmatprep.subr.mxu0 0.0
  %286 = vmatpush1.msra.mxu0 0.0
  %287 = vmatprep.subr.mxu0 0.0
  %288 = vmatpush1.msra.mxu0 0.0
  %289 = vmatprep.subr.mxu0 0.0
  %290 = vmatpush1.msra.mxu0 0.0
  %291 = vmatprep.mubr.f32.mxu0 0.0
  %292 = vmatmul.mubr.f32.gmra.mrb[0].mxu0 %v225
  %v293 = vpop.f32.mrb[0].mxu0
  %v294 = vadd.f32 0.0, %v293
  %v295 = vpop.f32.mrb[0].mxu0
  %296 = vdwg.mxu0
  %v297 = vld [vmem:[%s0] sm:$0xff]
  %v298 = vld [vmem:[%s0 + $0x8] sm:$0xff]
  %v299 = vadd.f32 %v297, %v294
  %v301 = vlaneseq
  %v302 = vshrl.u32 %v301, 7
  %v303 = vsub.s32 0, %v302
  %v304 = vrot.slane %v46, %v303
  %v306 = vadd.f32 %v149, %v304
  %v307 = vadd.f32 %v299, %v306
  %v308 = vxor.u32 %v307, 2147483648
  %v309 = vmul.f32 %v308, 1.442695
  %v310 = vpow.pop %v309
  %v311 = vadd.f32 %v310, 1.0
  %v312 = vrcp.pop %v311
  %v313 = vmul.f32 1.0, %v312
  %315 = vrot.lane.b32.xlu0 %v306, 64
  %v316 = vpop.permute.xlu0 %315
  %v318 = vmul.f32 %v313, %v316
  %320 = vrot.lane.b32.xlu0 %v318, 64
  %v321 = vpop.permute.xlu0 %320
  %v323 = vadd.f32 %v299, %v321
  %v324 = vtanh.pop %v323
  %v325 = vsub.f32 1.0, %v313
  %327 = vrot.lane.b32.xlu0 %v324, 96
  %v328 = vpop.permute.xlu0 %327
  %v330 = vmul.f32 %v325, %v328
  %331 = vrot.lane.b32.xlu0 %v72, 32
  %v332 = vpop.permute.xlu0 %331
  %v334 = vmul.f32 %v313, %v332
  %v335 = vadd.f32 %v330, %v334
  %337 = vrot.lane.b32.xlu0 %v335, 96
  %v338 = vpop.permute.xlu0 %337
  %v339 = vsel %vm77, %v338, 0
  %341 = vmatprep.subr.mxu0 %v21
  %342 = vmatpush1.msra.mxu0 %v20
  %343 = vmatprep.subr.mxu0 %v23
  %344 = vmatpush1.msra.mxu0 %v22
  %345 = vmatprep.subr.mxu0 %v25
  %346 = vmatpush1.msra.mxu0 %v24
  %347 = vmatprep.subr.mxu0 %v27
  %348 = vmatpush1.msra.mxu0 %v26
  %349 = vmatprep.subr.mxu0 0.0
  %350 = vmatpush1.msra.mxu0 0.0
  %351 = vmatprep.subr.mxu0 0.0
  %352 = vmatpush1.msra.mxu0 0.0
  %353 = vmatprep.subr.mxu0 0.0
  %354 = vmatpush1.msra.mxu0 0.0
  %355 = vmatprep.subr.mxu0 0.0
  %356 = vmatpush1.msra.mxu0 0.0
  %357 = vmatprep.subr.mxu0 0.0
  %358 = vmatpush1.msra.mxu0 0.0
  %359 = vmatprep.subr.mxu0 0.0
  %360 = vmatpush1.msra.mxu0 0.0
  %361 = vmatprep.subr.mxu0 0.0
  %362 = vmatpush1.msra.mxu0 0.0
  %363 = vmatprep.subr.mxu0 0.0
  %364 = vmatpush1.msra.mxu0 0.0
  %365 = vmatprep.subr.mxu0 0.0
  %366 = vmatpush1.msra.mxu0 0.0
  %367 = vmatprep.subr.mxu0 0.0
  %368 = vmatpush1.msra.mxu0 0.0
  %369 = vmatprep.subr.mxu0 0.0
  %370 = vmatpush1.msra.mxu0 0.0
  %371 = vmatprep.subr.mxu0 0.0
  %372 = vmatpush1.msra.mxu0 0.0
  %373 = vmatprep.subr.mxu0 0.0
  %374 = vmatpush1.msra.mxu0 0.0
  %375 = vmatprep.subr.mxu0 0.0
  %376 = vmatpush1.msra.mxu0 0.0
  %377 = vmatprep.subr.mxu0 0.0
  %378 = vmatpush1.msra.mxu0 0.0
  %379 = vmatprep.subr.mxu0 0.0
  %380 = vmatpush1.msra.mxu0 0.0
  %381 = vmatprep.subr.mxu0 0.0
  %382 = vmatpush1.msra.mxu0 0.0
  %383 = vmatprep.subr.mxu0 0.0
  %384 = vmatpush1.msra.mxu0 0.0
  %385 = vmatprep.subr.mxu0 0.0
  %386 = vmatpush1.msra.mxu0 0.0
  %387 = vmatprep.subr.mxu0 0.0
  %388 = vmatpush1.msra.mxu0 0.0
  %389 = vmatprep.subr.mxu0 0.0
  %390 = vmatpush1.msra.mxu0 0.0
  %391 = vmatprep.subr.mxu0 0.0
  %392 = vmatpush1.msra.mxu0 0.0
  %393 = vmatprep.subr.mxu0 0.0
  %394 = vmatpush1.msra.mxu0 0.0
  %395 = vmatprep.subr.mxu0 0.0
  %396 = vmatpush1.msra.mxu0 0.0
  %397 = vmatprep.subr.mxu0 0.0
  %398 = vmatpush1.msra.mxu0 0.0
  %399 = vmatprep.subr.mxu0 0.0
  %400 = vmatpush1.msra.mxu0 0.0
  %401 = vmatprep.subr.mxu0 0.0
  %402 = vmatpush1.msra.mxu0 0.0
  %403 = vmatprep.subr.mxu0 0.0
  %404 = vmatpush1.msra.mxu0 0.0
  %405 = vmatprep.mubr.f32.mxu0 0.0
  %406 = vmatmul.mubr.f32.gmra.mrb[0].mxu0 %v339
  %v407 = vpop.f32.mrb[0].mxu0
  %v408 = vadd.f32 0.0, %v407
  %v409 = vpop.f32.mrb[0].mxu0
  %v410 = vadd.f32 0.0, %v409
  %411 = vdwg.mxu0
  %v413 = vlaneseq
  %v414 = vshrl.u32 %v413, 7
  %v415 = vsub.s32 0, %v414
  %v416 = vrot.slane %v48, %v415
  %v418 = vadd.f32 %v408, %v416
  %v420 = vlaneseq
  %v421 = vshrl.u32 %v420, 7
  %v422 = vsub.s32 0, %v421
  %v423 = vrot.slane %v50, %v422
  %v425 = vadd.f32 %v222, %v423
  %v426 = vadd.f32 %v418, %v425
  %v427 = vxor.u32 %v426, 2147483648
  %v428 = vmul.f32 %v427, 1.442695
  %v429 = vpow.pop %v428
  %v430 = vadd.f32 %v429, 1.0
  %v431 = vrcp.pop %v430
  %v432 = vmul.f32 1.0, %v431
  %434 = vrot.lane.b32.xlu0 %v425, 64
  %v435 = vpop.permute.xlu0 %434
  %v437 = vmul.f32 %v432, %v435
  %439 = vrot.lane.b32.xlu0 %v437, 64
  %v440 = vpop.permute.xlu0 %439
  %v442 = vadd.f32 %v418, %v440
  %v443 = vtanh.pop %v442
  %v444 = vsub.f32 1.0, %v432
  %446 = vrot.lane.b32.xlu0 %v443, 96
  %v447 = vpop.permute.xlu0 %446
  %v449 = vmul.f32 %v444, %v447
  %450 = vrot.lane.b32.xlu0 %v74, 32
  %v451 = vpop.permute.xlu0 %450
  %v453 = vmul.f32 %v432, %v451
  %v454 = vadd.f32 %v449, %v453
  %456 = vrot.lane.b32.xlu0 %v454, 96
  %v457 = vpop.permute.xlu0 %456
  %v458 = vsel %vm77, %v457, 0
  %460 = vmatprep.subr.mxu0 %v30
  %461 = vmatpush1.msra.mxu0 %v29
  %462 = vmatprep.subr.mxu0 %v32
  %463 = vmatpush1.msra.mxu0 %v31
  %464 = vmatprep.subr.mxu0 %v34
  %465 = vmatpush1.msra.mxu0 %v33
  %466 = vmatprep.subr.mxu0 %v36
  %467 = vmatpush1.msra.mxu0 %v35
  %468 = vmatprep.subr.mxu0 0.0
  %469 = vmatpush1.msra.mxu0 0.0
  %470 = vmatprep.subr.mxu0 0.0
  %471 = vmatpush1.msra.mxu0 0.0
  %472 = vmatprep.subr.mxu0 0.0
  %473 = vmatpush1.msra.mxu0 0.0
  %474 = vmatprep.subr.mxu0 0.0
  %475 = vmatpush1.msra.mxu0 0.0
  %476 = vmatprep.subr.mxu0 0.0
  %477 = vmatpush1.msra.mxu0 0.0
  %478 = vmatprep.subr.mxu0 0.0
  %479 = vmatpush1.msra.mxu0 0.0
  %480 = vmatprep.subr.mxu0 0.0
  %481 = vmatpush1.msra.mxu0 0.0
  %482 = vmatprep.subr.mxu0 0.0
  %483 = vmatpush1.msra.mxu0 0.0
  %484 = vmatprep.subr.mxu0 0.0
  %485 = vmatpush1.msra.mxu0 0.0
  %486 = vmatprep.subr.mxu0 0.0
  %487 = vmatpush1.msra.mxu0 0.0
  %488 = vmatprep.subr.mxu0 0.0
  %489 = vmatpush1.msra.mxu0 0.0
  %490 = vmatprep.subr.mxu0 0.0
  %491 = vmatpush1.msra.mxu0 0.0
  %492 = vmatprep.subr.mxu0 0.0
  %493 = vmatpush1.msra.mxu0 0.0
  %494 = vmatprep.subr.mxu0 0.0
  %495 = vmatpush1.msra.mxu0 0.0
  %496 = vmatprep.subr.mxu0 0.0
  %497 = vmatpush1.msra.mxu0 0.0
  %498 = vmatprep.subr.mxu0 0.0
  %499 = vmatpush1.msra.mxu0 0.0
  %500 = vmatprep.subr.mxu0 0.0
  %501 = vmatpush1.msra.mxu0 0.0
  %502 = vmatprep.subr.mxu0 0.0
  %503 = vmatpush1.msra.mxu0 0.0
  %504 = vmatprep.subr.mxu0 0.0
  %505 = vmatpush1.msra.mxu0 0.0
  %506 = vmatprep.subr.mxu0 0.0
  %507 = vmatpush1.msra.mxu0 0.0
  %508 = vmatprep.subr.mxu0 0.0
  %509 = vmatpush1.msra.mxu0 0.0
  %510 = vmatprep.subr.mxu0 0.0
  %511 = vmatpush1.msra.mxu0 0.0
  %512 = vmatprep.subr.mxu0 0.0
  %513 = vmatpush1.msra.mxu0 0.0
  %514 = vmatprep.subr.mxu0 0.0
  %515 = vmatpush1.msra.mxu0 0.0
  %516 = vmatprep.subr.mxu0 0.0
  %517 = vmatpush1.msra.mxu0 0.0
  %518 = vmatprep.subr.mxu0 0.0
  %519 = vmatpush1.msra.mxu0 0.0
  %520 = vmatprep.subr.mxu0 0.0
  %521 = vmatpush1.msra.mxu0 0.0
  %522 = vmatprep.subr.mxu0 0.0
  %523 = vmatpush1.msra.mxu0 0.0
  %524 = vmatprep.mubr.f32.mxu0 0.0
  %525 = vmatmul.mubr.f32.gmra.mrb[0].mxu0 %v458
  %v526 = vpop.f32.mrb[0].mxu0
  %v527 = vadd.f32 0.0, %v526
  %v528 = vpop.f32.mrb[0].mxu0
  %v529 = vadd.f32 0.0, %v528
  %530 = vdwg.mxu0
  %v532 = vcombine.high %v527, %v527
  %v534 = vunpack.c.l.s4 1966171168
  %v535 = vunpack.c.0.s8 %v534
  %v536 = vlaneseq
  %v537 = vshrl.u32 %v536, 7
  %v538 = vsub.s32 %v535, %v537
  %v539 = vrot.slane %v527, %v538
  %v541 = vunpack.c.l.s4 1966171168
  %v542 = vunpack.c.0.s8 %v541
  %v543 = vlaneseq
  %v544 = vshrl.u32 %v543, 7
  %v545 = vsub.s32 %v542, %v544
  %v546 = vrot.slane %v532, %v545
  %v547 = vcombine.high %v539, %v539
  %v548 = vcombine.high %v546, %v546
  %v550 = vunpack.c.l.s4 1966171168
  %v551 = vunpack.c.0.s8 %v550
  %v552 = vlaneseq
  %v553 = vshrl.u32 %v552, 7
  %v554 = vsub.s32 %v551, %v553
  %v555 = vrot.slane %v539, %v554
  %v557 = vunpack.c.l.s4 1966171168
  %v558 = vunpack.c.0.s8 %v557
  %v559 = vlaneseq
  %v560 = vshrl.u32 %v559, 7
  %v561 = vsub.s32 %v558, %v560
  %v562 = vrot.slane %v546, %v561
  %v564 = vunpack.c.l.s4 1966171168
  %v565 = vunpack.c.0.s8 %v564
  %v566 = vlaneseq
  %v567 = vshrl.u32 %v566, 7
  %v568 = vsub.s32 %v565, %v567
  %v569 = vrot.slane %v547, %v568
  %v571 = vunpack.c.l.s4 1966171168
  %v572 = vunpack.c.0.s8 %v571
  %v573 = vlaneseq
  %v574 = vshrl.u32 %v573, 7
  %v575 = vsub.s32 %v572, %v574
  %v576 = vrot.slane %v548, %v575
  %v577 = vcombine.high %v555, %v555
  %v578 = vcombine.high %v562, %v562
  %v579 = vcombine.high %v569, %v569
  %v580 = vcombine.high %v576, %v576
  %v581 = vlaneseq
  %v582 = vshrl.u32 %v581, 7
  %v583 = vsub.s32 0, %v582
  %v584 = vrot.slane %v555, %v583
  %v585 = vlaneseq
  %v586 = vshrl.u32 %v585, 7
  %v587 = vsub.s32 0, %v586
  %v588 = vrot.slane %v569, %v587
  %v589 = vlaneseq
  %v590 = vshrl.u32 %v589, 7
  %v591 = vsub.s32 0, %v590
  %v592 = vrot.slane %v577, %v591
  %v593 = vlaneseq
  %v594 = vshrl.u32 %v593, 7
  %v595 = vsub.s32 0, %v594
  %v596 = vrot.slane %v579, %v595
  %v597 = vlaneseq
  %v598 = vshrl.u32 %v597, 7
  %v599 = vsub.s32 0, %v598
  %v600 = vrot.slane %v562, %v599
  %v601 = vlaneseq
  %v602 = vshrl.u32 %v601, 7
  %v603 = vsub.s32 0, %v602
  %v604 = vrot.slane %v576, %v603
  %v605 = vlaneseq
  %v606 = vshrl.u32 %v605, 7
  %v607 = vsub.s32 0, %v606
  %v608 = vrot.slane %v578, %v607
  %v609 = vlaneseq
  %v610 = vshrl.u32 %v609, 7
  %v611 = vsub.s32 0, %v610
  %v612 = vrot.slane %v580, %v611
  %v621 = vadd.f32 %v53, %v584
  %v622 = vadd.f32 %v54, %v588
  %v623 = vadd.f32 %v55, %v592
  %v624 = vadd.f32 %v56, %v596
  %v625 = vadd.f32 %v57, %v600
  %v626 = vadd.f32 %v58, %v604
  %v627 = vadd.f32 %v59, %v608
  %v628 = vadd.f32 %v60, %v612
  %v629 = vtanh.pop %v621
  %v630 = vtanh.pop %v622
  %v631 = vtanh.pop %v623
  %v632 = vtanh.pop %v624
  %v633 = vtanh.pop %v625
  %v634 = vtanh.pop %v626
  %v635 = vtanh.pop %v627
  %v636 = vtanh.pop %v628
  %v638 = vlaneseq
  %v639 = vshrl.u32 %v638, 7
  %v640 = vsub.s32 0, %v639
  %v641 = vrot.slane %v52, %v640
  %v643 = vmul.f32 %v629, %v641
  %v644 = vmul.f32 %v630, %v641
  %v645 = vmul.f32 %v631, %v641
  %v646 = vmul.f32 %v632, %v641
  %v647 = vmul.f32 %v633, %v641
  %v648 = vmul.f32 %v634, %v641
  %v649 = vmul.f32 %v635, %v641
  %v650 = vmul.f32 %v636, %v641
  %v651 = vsel %vm77, %v643, 0.0
  %652 = vadd.xlane.f32.xlu0 %v651
  %v653 = vpop.xlane.xlu0 %652
  %v654 = vsel %vm77, %v644, 0.0
  %655 = vadd.xlane.f32.xlu0 %v654
  %v656 = vpop.xlane.xlu0 %655
  %v657 = vsel %vm77, %v645, 0.0
  %658 = vadd.xlane.f32.xlu0 %v657
  %v659 = vpop.xlane.xlu0 %658
  %v660 = vsel %vm77, %v646, 0.0
  %661 = vadd.xlane.f32.xlu0 %v660
  %v662 = vpop.xlane.xlu0 %661
  %v663 = vsel %vm77, %v647, 0.0
  %664 = vadd.xlane.f32.xlu0 %v663
  %v665 = vpop.xlane.xlu0 %664
  %v666 = vsel %vm77, %v648, 0.0
  %667 = vadd.xlane.f32.xlu0 %v666
  %v668 = vpop.xlane.xlu0 %667
  %v669 = vsel %vm77, %v649, 0.0
  %670 = vadd.xlane.f32.xlu0 %v669
  %v671 = vpop.xlane.xlu0 %670
  %v672 = vsel %vm77, %v650, 0.0
  %673 = vadd.xlane.f32.xlu0 %v672
  %v674 = vpop.xlane.xlu0 %673
  %v676 = vlaneseq
  %v677 = vshrl.u32 %v676, 7
  %v678 = vsub.s32 0, %v677
  %v679 = vrot.slane %v71, %v678
  %681 = vbcast.lane.b32.xlu0 %v679, 256
  %v682 = vpop.permute.xlu0 %681
  %v683 = vlaneseq
  %v684 = vshrl.u32 %v683, 7
  %v685 = vsub.s32 1, %v684
  %v686 = vrot.slane %v71, %v685
  %688 = vbcast.lane.b32.xlu0 %v686, 256
  %v689 = vpop.permute.xlu0 %688
  %v690 = vlaneseq
  %v691 = vshrl.u32 %v690, 7
  %v692 = vsub.s32 2, %v691
  %v693 = vrot.slane %v71, %v692
  %695 = vbcast.lane.b32.xlu0 %v693, 256
  %v696 = vpop.permute.xlu0 %695
  %v697 = vlaneseq
  %v698 = vshrl.u32 %v697, 7
  %v699 = vsub.s32 3, %v698
  %v700 = vrot.slane %v71, %v699
  %702 = vbcast.lane.b32.xlu0 %v700, 256
  %v703 = vpop.permute.xlu0 %702
  %v704 = vlaneseq
  %v705 = vshrl.u32 %v704, 7
  %v706 = vsub.s32 4, %v705
  %v707 = vrot.slane %v71, %v706
  %709 = vbcast.lane.b32.xlu0 %v707, 256
  %v710 = vpop.permute.xlu0 %709
  %v711 = vlaneseq
  %v712 = vshrl.u32 %v711, 7
  %v713 = vsub.s32 5, %v712
  %v714 = vrot.slane %v71, %v713
  %716 = vbcast.lane.b32.xlu0 %v714, 256
  %v717 = vpop.permute.xlu0 %716
  %v718 = vlaneseq
  %v719 = vshrl.u32 %v718, 7
  %v720 = vsub.s32 6, %v719
  %v721 = vrot.slane %v71, %v720
  %723 = vbcast.lane.b32.xlu0 %v721, 256
  %v724 = vpop.permute.xlu0 %723
  %v725 = vlaneseq
  %v726 = vshrl.u32 %v725, 7
  %v727 = vsub.s32 7, %v726
  %v728 = vrot.slane %v71, %v727
  %730 = vbcast.lane.b32.xlu0 %v728, 256
  %v731 = vpop.permute.xlu0 %730
  %v740 = vadd.f32 %v653, %v682
  %v741 = vadd.f32 %v656, %v689
  %v742 = vadd.f32 %v659, %v696
  %v743 = vadd.f32 %v662, %v703
  %v744 = vadd.f32 %v665, %v710
  %v745 = vadd.f32 %v668, %v717
  %v746 = vadd.f32 %v671, %v724
  %v747 = vadd.f32 %v674, %v731
  %v748 = vmul.f32 %v740, 1.442695
  %v749 = vpow.pop %v748
  %v750 = vmul.f32 %v741, 1.442695
  %v751 = vpow.pop %v750
  %v752 = vmul.f32 %v742, 1.442695
  %v753 = vpow.pop %v752
  %v754 = vmul.f32 %v743, 1.442695
  %v755 = vpow.pop %v754
  %v756 = vmul.f32 %v744, 1.442695
  %v757 = vpow.pop %v756
  %v758 = vmul.f32 %v745, 1.442695
  %v759 = vpow.pop %v758
  %v760 = vmul.f32 %v746, 1.442695
  %v761 = vpow.pop %v760
  %v762 = vmul.f32 %v747, 1.442695
  %v763 = vpow.pop %v762
  %772 = vset.pattern.permute.xlu0 0
  %773 = vperm.xlu0 %772, %v749
  %v774 = vpop.permute.xlu0 %773
  %775 = vset.pattern.permute.xlu0 0
  %776 = vperm.xlu0 %775, %v751
  %v777 = vpop.permute.xlu0 %776
  %778 = vset.pattern.permute.xlu0 0
  %779 = vperm.xlu0 %778, %v753
  %v780 = vpop.permute.xlu0 %779
  %781 = vset.pattern.permute.xlu0 0
  %782 = vperm.xlu0 %781, %v755
  %v783 = vpop.permute.xlu0 %782
  %784 = vset.pattern.permute.xlu0 0
  %785 = vperm.xlu0 %784, %v757
  %v786 = vpop.permute.xlu0 %785
  %787 = vset.pattern.permute.xlu0 0
  %788 = vperm.xlu0 %787, %v759
  %v789 = vpop.permute.xlu0 %788
  %790 = vset.pattern.permute.xlu0 0
  %791 = vperm.xlu0 %790, %v761
  %v792 = vpop.permute.xlu0 %791
  %793 = vset.pattern.permute.xlu0 0
  %794 = vperm.xlu0 %793, %v763
  %v795 = vpop.permute.xlu0 %794
  %v796 = vlaneseq
  %v797 = vand.u32 %v796, 127
  %v798 = vlaneseq
  %v799 = vshrl.u32 %v798, 7
  %v800 = vsub.s32 %v797, %v799
  %v801 = vrot.slane %v774, %v800
  %v802 = vlaneseq
  %v803 = vshrl.u32 %v802, 7
  %v804 = vsub.s32 %v797, %v803
  %v805 = vrot.slane %v777, %v804
  %v806 = vlaneseq
  %v807 = vshrl.u32 %v806, 7
  %v808 = vsub.s32 %v797, %v807
  %v809 = vrot.slane %v780, %v808
  %v810 = vlaneseq
  %v811 = vshrl.u32 %v810, 7
  %v812 = vsub.s32 %v797, %v811
  %v813 = vrot.slane %v783, %v812
  %v814 = vlaneseq
  %v815 = vshrl.u32 %v814, 7
  %v816 = vsub.s32 %v797, %v815
  %v817 = vrot.slane %v786, %v816
  %v818 = vlaneseq
  %v819 = vshrl.u32 %v818, 7
  %v820 = vsub.s32 %v797, %v819
  %v821 = vrot.slane %v789, %v820
  %v822 = vlaneseq
  %v823 = vshrl.u32 %v822, 7
  %v824 = vsub.s32 %v797, %v823
  %v825 = vrot.slane %v792, %v824
  %v826 = vlaneseq
  %v827 = vshrl.u32 %v826, 7
  %v828 = vsub.s32 %v797, %v827
  %v829 = vrot.slane %v795, %v828
  %vm830 = vcmask 1041409
  %v831 = vsel %vm830, %v805, %v801
  %vm832 = vcmask 1042434
  %v833 = vsel %vm832, %v809, %v831
  %vm834 = vcmask 1043459
  %v835 = vsel %vm834, %v813, %v833
  %vm836 = vcmask 1044484
  %v837 = vsel %vm836, %v817, %v835
  %vm838 = vcmask 1045509
  %v839 = vsel %vm838, %v821, %v837
  %vm840 = vcmask 1046534
  %v841 = vsel %vm840, %v825, %v839
  %vm842 = vcmask 1047559
  %v843 = vsel %vm842, %v829, %v841
  %vm845 = vcmask 64512
  %v846 = vsel %vm845, %v843, 0.0
  %847 = vadd.xlane.f32.xlu0 %v846
  %v848 = vpop.xlane.xlu0 %847
  %v849 = vrcp.pop %v848
  %v851 = vlaneseq
  %v852 = vshrl.u32 %v851, 7
  %v853 = vsub.s32 0, %v852
  %v854 = vrot.slane %v849, %v853
  %v855 = vlaneseq
  %v856 = vshrl.u32 %v855, 7
  %v857 = vsub.s32 1, %v856
  %v858 = vrot.slane %v849, %v857
  %v859 = vlaneseq
  %v860 = vshrl.u32 %v859, 7
  %v861 = vsub.s32 2, %v860
  %v862 = vrot.slane %v849, %v861
  %v863 = vlaneseq
  %v864 = vshrl.u32 %v863, 7
  %v865 = vsub.s32 3, %v864
  %v866 = vrot.slane %v849, %v865
  %v867 = vlaneseq
  %v868 = vshrl.u32 %v867, 7
  %v869 = vsub.s32 4, %v868
  %v870 = vrot.slane %v849, %v869
  %v871 = vlaneseq
  %v872 = vshrl.u32 %v871, 7
  %v873 = vsub.s32 5, %v872
  %v874 = vrot.slane %v849, %v873
  %v875 = vlaneseq
  %v876 = vshrl.u32 %v875, 7
  %v877 = vsub.s32 6, %v876
  %v878 = vrot.slane %v849, %v877
  %v879 = vlaneseq
  %v880 = vshrl.u32 %v879, 7
  %v881 = vsub.s32 7, %v880
  %v882 = vrot.slane %v849, %v881
  %v891 = vmul.f32 %v749, %v854
  %v892 = vmul.f32 %v751, %v858
  %v893 = vmul.f32 %v753, %v862
  %v894 = vmul.f32 %v755, %v866
  %v895 = vmul.f32 %v757, %v870
  %v896 = vmul.f32 %v759, %v874
  %v897 = vmul.f32 %v761, %v878
  %v898 = vmul.f32 %v763, %v882
  %900 = vset.pattern.permute.xlu0 0
  %901 = vperm.xlu0 %900, %v891
  %v902 = vpop.permute.xlu0 %901
  %905 = vset.pattern.permute.xlu0 0
  %906 = vperm.xlu0 %905, %v892
  %v907 = vpop.permute.xlu0 %906
  %910 = vset.pattern.permute.xlu0 0
  %911 = vperm.xlu0 %910, %v893
  %v912 = vpop.permute.xlu0 %911
  %915 = vset.pattern.permute.xlu0 0
  %916 = vperm.xlu0 %915, %v894
  %v917 = vpop.permute.xlu0 %916
  %920 = vset.pattern.permute.xlu0 0
  %921 = vperm.xlu0 %920, %v895
  %v922 = vpop.permute.xlu0 %921
  %925 = vset.pattern.permute.xlu0 0
  %926 = vperm.xlu0 %925, %v896
  %v927 = vpop.permute.xlu0 %926
  %930 = vset.pattern.permute.xlu0 0
  %931 = vperm.xlu0 %930, %v897
  %v932 = vpop.permute.xlu0 %931
  %935 = vset.pattern.permute.xlu0 0
  %936 = vperm.xlu0 %935, %v898
  %v937 = vpop.permute.xlu0 %936
  %v939 = vmul.f32 %v902, %v62
  %v940 = vmul.f32 %v907, %v63
  %v941 = vmul.f32 %v912, %v64
  %v942 = vmul.f32 %v917, %v65
  %v943 = vmul.f32 %v922, %v66
  %v944 = vmul.f32 %v927, %v67
  %v945 = vmul.f32 %v932, %v68
  %v946 = vmul.f32 %v937, %v69
  %v947 = vsel %vm77, %v939, 0.0
  %v948 = vrot.slane %v947, 4
  %v949 = vadd.f32 %v947, %v948
  %v950 = vrot.slane %v949, 2
  %v951 = vadd.f32 %v949, %v950
  %v952 = vrot.slane %v951, 1
  %v953 = vadd.f32 %v951, %v952
  %v954 = vsel %vm77, %v940, 0.0
  %v955 = vrot.slane %v954, 4
  %v956 = vadd.f32 %v954, %v955
  %v957 = vrot.slane %v956, 2
  %v958 = vadd.f32 %v956, %v957
  %v959 = vrot.slane %v958, 1
  %v960 = vadd.f32 %v958, %v959
  %v961 = vsel %vm77, %v941, 0.0
  %v962 = vrot.slane %v961, 4
  %v963 = vadd.f32 %v961, %v962
  %v964 = vrot.slane %v963, 2
  %v965 = vadd.f32 %v963, %v964
  %v966 = vrot.slane %v965, 1
  %v967 = vadd.f32 %v965, %v966
  %v968 = vsel %vm77, %v942, 0.0
  %v969 = vrot.slane %v968, 4
  %v970 = vadd.f32 %v968, %v969
  %v971 = vrot.slane %v970, 2
  %v972 = vadd.f32 %v970, %v971
  %v973 = vrot.slane %v972, 1
  %v974 = vadd.f32 %v972, %v973
  %v975 = vsel %vm77, %v943, 0.0
  %v976 = vrot.slane %v975, 4
  %v977 = vadd.f32 %v975, %v976
  %v978 = vrot.slane %v977, 2
  %v979 = vadd.f32 %v977, %v978
  %v980 = vrot.slane %v979, 1
  %v981 = vadd.f32 %v979, %v980
  %v982 = vsel %vm77, %v944, 0.0
  %v983 = vrot.slane %v982, 4
  %v984 = vadd.f32 %v982, %v983
  %v985 = vrot.slane %v984, 2
  %v986 = vadd.f32 %v984, %v985
  %v987 = vrot.slane %v986, 1
  %v988 = vadd.f32 %v986, %v987
  %v989 = vsel %vm77, %v945, 0.0
  %v990 = vrot.slane %v989, 4
  %v991 = vadd.f32 %v989, %v990
  %v992 = vrot.slane %v991, 2
  %v993 = vadd.f32 %v991, %v992
  %v994 = vrot.slane %v993, 1
  %v995 = vadd.f32 %v993, %v994
  %v996 = vsel %vm77, %v946, 0.0
  %v997 = vrot.slane %v996, 4
  %v998 = vadd.f32 %v996, %v997
  %v999 = vrot.slane %v998, 2
  %v1000 = vadd.f32 %v998, %v999
  %v1001 = vrot.slane %v1000, 1
  %v1002 = vadd.f32 %v1000, %v1001
  %v1011 = vsel %vm830, %v960, %v953
  %v1012 = vsel %vm832, %v967, %v1011
  %v1013 = vsel %vm834, %v974, %v1012
  %v1014 = vsel %vm836, %v981, %v1013
  %v1015 = vsel %vm838, %v988, %v1014
  %v1016 = vsel %vm840, %v995, %v1015
  %v1017 = vsel %vm842, %v1002, %v1016
  %v1018 = vsel %vm77, %v1017, 0
  %1020 = vmatprep.subr.mxu0 %v39
  %1021 = vmatpush1.msra.mxu0 %v38
  %1022 = vmatprep.subr.mxu0 %v41
  %1023 = vmatpush1.msra.mxu0 %v40
  %1024 = vmatprep.subr.mxu0 %v43
  %1025 = vmatpush1.msra.mxu0 %v42
  %1026 = vmatprep.subr.mxu0 %v45
  %1027 = vmatpush1.msra.mxu0 %v44
  %1028 = vmatprep.subr.mxu0 0.0
  %1029 = vmatpush1.msra.mxu0 0.0
  %1030 = vmatprep.subr.mxu0 0.0
  %1031 = vmatpush1.msra.mxu0 0.0
  %1032 = vmatprep.subr.mxu0 0.0
  %1033 = vmatpush1.msra.mxu0 0.0
  %1034 = vmatprep.subr.mxu0 0.0
  %1035 = vmatpush1.msra.mxu0 0.0
  %1036 = vmatprep.subr.mxu0 0.0
  %1037 = vmatpush1.msra.mxu0 0.0
  %1038 = vmatprep.subr.mxu0 0.0
  %1039 = vmatpush1.msra.mxu0 0.0
  %1040 = vmatprep.subr.mxu0 0.0
  %1041 = vmatpush1.msra.mxu0 0.0
  %1042 = vmatprep.subr.mxu0 0.0
  %1043 = vmatpush1.msra.mxu0 0.0
  %1044 = vmatprep.subr.mxu0 0.0
  %1045 = vmatpush1.msra.mxu0 0.0
  %1046 = vmatprep.subr.mxu0 0.0
  %1047 = vmatpush1.msra.mxu0 0.0
  %1048 = vmatprep.subr.mxu0 0.0
  %1049 = vmatpush1.msra.mxu0 0.0
  %1050 = vmatprep.subr.mxu0 0.0
  %1051 = vmatpush1.msra.mxu0 0.0
  %1052 = vmatprep.subr.mxu0 0.0
  %1053 = vmatpush1.msra.mxu0 0.0
  %1054 = vmatprep.subr.mxu0 0.0
  %1055 = vmatpush1.msra.mxu0 0.0
  %1056 = vmatprep.subr.mxu0 0.0
  %1057 = vmatpush1.msra.mxu0 0.0
  %1058 = vmatprep.subr.mxu0 0.0
  %1059 = vmatpush1.msra.mxu0 0.0
  %1060 = vmatprep.subr.mxu0 0.0
  %1061 = vmatpush1.msra.mxu0 0.0
  %1062 = vmatprep.subr.mxu0 0.0
  %1063 = vmatpush1.msra.mxu0 0.0
  %1064 = vmatprep.subr.mxu0 0.0
  %1065 = vmatpush1.msra.mxu0 0.0
  %1066 = vmatprep.subr.mxu0 0.0
  %1067 = vmatpush1.msra.mxu0 0.0
  %1068 = vmatprep.subr.mxu0 0.0
  %1069 = vmatpush1.msra.mxu0 0.0
  %1070 = vmatprep.subr.mxu0 0.0
  %1071 = vmatpush1.msra.mxu0 0.0
  %1072 = vmatprep.subr.mxu0 0.0
  %1073 = vmatpush1.msra.mxu0 0.0
  %1074 = vmatprep.subr.mxu0 0.0
  %1075 = vmatpush1.msra.mxu0 0.0
  %1076 = vmatprep.subr.mxu0 0.0
  %1077 = vmatpush1.msra.mxu0 0.0
  %1078 = vmatprep.subr.mxu0 0.0
  %1079 = vmatpush1.msra.mxu0 0.0
  %1080 = vmatprep.subr.mxu0 0.0
  %1081 = vmatpush1.msra.mxu0 0.0
  %1082 = vmatprep.subr.mxu0 0.0
  %1083 = vmatpush1.msra.mxu0 0.0
  %1084 = vmatprep.mubr.f32.mxu0 0.0
  %1085 = vmatmul.mubr.f32.gmra.mrb[0].mxu0 %v1018
  %v1086 = vpop.f32.mrb[0].mxu0
  %v1087 = vadd.f32 0.0, %v1086
  %v1088 = vpop.f32.mrb[0].mxu0
  %v1089 = vadd.f32 0.0, %v1088
  %1090 = vdwg.mxu0
  %v1091 = vadd.f32 %v298, %v527
  %v1092 = vadd.f32 %v1091, %v1089
  %1094 = vrot.lane.b32.xlu0 %v1092, 112
  %v1095 = vpop.permute.xlu0 %1094
  %v1097 = vmax.f32 %v1092, %v1095
  %v1098 = vxor.u32 %v1092, 2147483648
  %v1099 = vmul.f32 %v1098, 1.442695
  %v1100 = vpow.pop %v1099
  %v1101 = vadd.f32 %v1100, 1.0
  %v1102 = vrcp.pop %v1101
  %v1103 = vmul.f32 1.0, %v1102
  %1105 = vrot.lane.b32.xlu0 %v1097, 96
  %v1106 = vpop.permute.xlu0 %1105
  %v1108 = vadd.s32 %v797, 4294967280
  %v1109 = vlaneseq
  %v1110 = vshrl.u32 %v1109, 7
  %v1111 = vsub.s32 %v1108, %v1110
  %v1112 = vrot.slane %v902, %v1111
  %v1113 = vlaneseq
  %v1114 = vshrl.u32 %v1113, 7
  %v1115 = vsub.s32 %v1108, %v1114
  %v1116 = vrot.slane %v907, %v1115
  %v1117 = vlaneseq
  %v1118 = vshrl.u32 %v1117, 7
  %v1119 = vsub.s32 %v1108, %v1118
  %v1120 = vrot.slane %v912, %v1119
  %v1121 = vlaneseq
  %v1122 = vshrl.u32 %v1121, 7
  %v1123 = vsub.s32 %v1108, %v1122
  %v1124 = vrot.slane %v917, %v1123
  %v1125 = vlaneseq
  %v1126 = vshrl.u32 %v1125, 7
  %v1127 = vsub.s32 %v1108, %v1126
  %v1128 = vrot.slane %v922, %v1127
  %v1129 = vlaneseq
  %v1130 = vshrl.u32 %v1129, 7
  %v1131 = vsub.s32 %v1108, %v1130
  %v1132 = vrot.slane %v927, %v1131
  %v1133 = vlaneseq
  %v1134 = vshrl.u32 %v1133, 7
  %v1135 = vsub.s32 %v1108, %v1134
  %v1136 = vrot.slane %v932, %v1135
  %v1137 = vlaneseq
  %v1138 = vshrl.u32 %v1137, 7
  %v1139 = vsub.s32 %v1108, %v1138
  %v1140 = vrot.slane %v937, %v1139
  %v1141 = vsel %vm830, %v1116, %v1112
  %v1142 = vsel %vm832, %v1120, %v1141
  %v1143 = vsel %vm834, %v1124, %v1142
  %v1144 = vsel %vm836, %v1128, %v1143
  %v1145 = vsel %vm838, %v1132, %v1144
  %v1146 = vsel %vm840, %v1136, %v1145
  %v1147 = vsel %vm842, %v1140, %v1146
  %1150 = vrot.lane.b32.xlu0 %v1103, 88
  %v1151 = vpop.permute.xlu0 %1150
  %1153 = vrot.lane.b32.xlu0 %v454, 32
  %v1154 = vpop.permute.xlu0 %1153
  %1156 = vrot.lane.b32.xlu0 %v1017, 96
  %v1157 = vpop.permute.xlu0 %1156
  %vm1159 = vcmask 130048
  %v1160 = vsel %vm1159, %v1106, %v1147
  %vm1161 = vcmask 195584
  %v1162 = vsel %vm1161, %v1160, %v1151
  %vm1163 = vcmask 203776
  %v1164 = vsel %vm1163, %v1162, 0.0
  %v1165 = vsel %vm77, %v1164, %v335
  %vm1166 = vcmask 523264
  %v1167 = vsel %vm1166, %v1165, %v1154
  %vm1168 = vcmask 785408
  %v1169 = vsel %vm1168, %v1167, %v1157
  %1170 = vst [vmem:[%s5] sm:$0xff] %v1169
  %s1171 = scalar_lea.vmem %s0, 16
  %v1172 = vld [vmem:[%s1171] sm:$0xff]
  %v1173 = vld [vmem:[%s1171 + $0x8] sm:$0xff]
  %v1174 = vadd.f32 %v1172, %v1087
  %v1175 = vadd.f32 %v410, %v304
  %v1176 = vadd.f32 %v1174, %v1175
  %v1177 = vxor.u32 %v1176, 2147483648
  %v1178 = vmul.f32 %v1177, 1.442695
  %v1179 = vpow.pop %v1178
  %v1180 = vadd.f32 %v1179, 1.0
  %v1181 = vrcp.pop %v1180
  %v1182 = vmul.f32 1.0, %v1181
  %1184 = vrot.lane.b32.xlu0 %v1175, 64
  %v1185 = vpop.permute.xlu0 %1184
  %v1187 = vmul.f32 %v1182, %v1185
  %1189 = vrot.lane.b32.xlu0 %v1187, 64
  %v1190 = vpop.permute.xlu0 %1189
  %v1192 = vadd.f32 %v1174, %v1190
  %v1193 = vtanh.pop %v1192
  %v1194 = vsub.f32 1.0, %v1182
  %1196 = vrot.lane.b32.xlu0 %v1193, 96
  %v1197 = vpop.permute.xlu0 %1196
  %v1199 = vmul.f32 %v1194, %v1197
  %v1200 = vmul.f32 %v1182, %v335
  %v1201 = vadd.f32 %v1199, %v1200
  %1203 = vrot.lane.b32.xlu0 %v1201, 96
  %v1204 = vpop.permute.xlu0 %1203
  %v1205 = vsel %vm77, %v1204, 0
  %1207 = vmatprep.subr.mxu0 %v21
  %1208 = vmatpush1.msra.mxu0 %v20
  %1209 = vmatprep.subr.mxu0 %v23
  %1210 = vmatpush1.msra.mxu0 %v22
  %1211 = vmatprep.subr.mxu0 %v25
  %1212 = vmatpush1.msra.mxu0 %v24
  %1213 = vmatprep.subr.mxu0 %v27
  %1214 = vmatpush1.msra.mxu0 %v26
  %1215 = vmatprep.subr.mxu0 0.0
  %1216 = vmatpush1.msra.mxu0 0.0
  %1217 = vmatprep.subr.mxu0 0.0
  %1218 = vmatpush1.msra.mxu0 0.0
  %1219 = vmatprep.subr.mxu0 0.0
  %1220 = vmatpush1.msra.mxu0 0.0
  %1221 = vmatprep.subr.mxu0 0.0
  %1222 = vmatpush1.msra.mxu0 0.0
  %1223 = vmatprep.subr.mxu0 0.0
  %1224 = vmatpush1.msra.mxu0 0.0
  %1225 = vmatprep.subr.mxu0 0.0
  %1226 = vmatpush1.msra.mxu0 0.0
  %1227 = vmatprep.subr.mxu0 0.0
  %1228 = vmatpush1.msra.mxu0 0.0
  %1229 = vmatprep.subr.mxu0 0.0
  %1230 = vmatpush1.msra.mxu0 0.0
  %1231 = vmatprep.subr.mxu0 0.0
  %1232 = vmatpush1.msra.mxu0 0.0
  %1233 = vmatprep.subr.mxu0 0.0
  %1234 = vmatpush1.msra.mxu0 0.0
  %1235 = vmatprep.subr.mxu0 0.0
  %1236 = vmatpush1.msra.mxu0 0.0
  %1237 = vmatprep.subr.mxu0 0.0
  %1238 = vmatpush1.msra.mxu0 0.0
  %1239 = vmatprep.subr.mxu0 0.0
  %1240 = vmatpush1.msra.mxu0 0.0
  %1241 = vmatprep.subr.mxu0 0.0
  %1242 = vmatpush1.msra.mxu0 0.0
  %1243 = vmatprep.subr.mxu0 0.0
  %1244 = vmatpush1.msra.mxu0 0.0
  %1245 = vmatprep.subr.mxu0 0.0
  %1246 = vmatpush1.msra.mxu0 0.0
  %1247 = vmatprep.subr.mxu0 0.0
  %1248 = vmatpush1.msra.mxu0 0.0
  %1249 = vmatprep.subr.mxu0 0.0
  %1250 = vmatpush1.msra.mxu0 0.0
  %1251 = vmatprep.subr.mxu0 0.0
  %1252 = vmatpush1.msra.mxu0 0.0
  %1253 = vmatprep.subr.mxu0 0.0
  %1254 = vmatpush1.msra.mxu0 0.0
  %1255 = vmatprep.subr.mxu0 0.0
  %1256 = vmatpush1.msra.mxu0 0.0
  %1257 = vmatprep.subr.mxu0 0.0
  %1258 = vmatpush1.msra.mxu0 0.0
  %1259 = vmatprep.subr.mxu0 0.0
  %1260 = vmatpush1.msra.mxu0 0.0
  %1261 = vmatprep.subr.mxu0 0.0
  %1262 = vmatpush1.msra.mxu0 0.0
  %1263 = vmatprep.subr.mxu0 0.0
  %1264 = vmatpush1.msra.mxu0 0.0
  %1265 = vmatprep.subr.mxu0 0.0
  %1266 = vmatpush1.msra.mxu0 0.0
  %1267 = vmatprep.subr.mxu0 0.0
  %1268 = vmatpush1.msra.mxu0 0.0
  %1269 = vmatprep.subr.mxu0 0.0
  %1270 = vmatpush1.msra.mxu0 0.0
  %1271 = vmatprep.mubr.f32.mxu0 0.0
  %1272 = vmatmul.mubr.f32.gmra.mrb[0].mxu0 %v1205
  %v1273 = vpop.f32.mrb[0].mxu0
  %v1274 = vadd.f32 0.0, %v1273
  %v1275 = vpop.f32.mrb[0].mxu0
  %v1276 = vadd.f32 0.0, %v1275
  %1277 = vdwg.mxu0
  %v1278 = vadd.f32 %v1274, %v416
  %v1279 = vadd.f32 %v529, %v423
  %v1280 = vadd.f32 %v1278, %v1279
  %v1281 = vxor.u32 %v1280, 2147483648
  %v1282 = vmul.f32 %v1281, 1.442695
  %v1283 = vpow.pop %v1282
  %v1284 = vadd.f32 %v1283, 1.0
  %v1285 = vrcp.pop %v1284
  %v1286 = vmul.f32 1.0, %v1285
  %1288 = vrot.lane.b32.xlu0 %v1279, 64
  %v1289 = vpop.permute.xlu0 %1288
  %v1291 = vmul.f32 %v1286, %v1289
  %1293 = vrot.lane.b32.xlu0 %v1291, 64
  %v1294 = vpop.permute.xlu0 %1293
  %v1296 = vadd.f32 %v1278, %v1294
  %v1297 = vtanh.pop %v1296
  %v1298 = vsub.f32 1.0, %v1286
  %1300 = vrot.lane.b32.xlu0 %v1297, 96
  %v1301 = vpop.permute.xlu0 %1300
  %v1303 = vmul.f32 %v1298, %v1301
  %v1304 = vmul.f32 %v1286, %v454
  %v1305 = vadd.f32 %v1303, %v1304
  %1307 = vrot.lane.b32.xlu0 %v1305, 96
  %v1308 = vpop.permute.xlu0 %1307
  %v1309 = vsel %vm77, %v1308, 0
  %1311 = vmatprep.subr.mxu0 %v30
  %1312 = vmatpush1.msra.mxu0 %v29
  %1313 = vmatprep.subr.mxu0 %v32
  %1314 = vmatpush1.msra.mxu0 %v31
  %1315 = vmatprep.subr.mxu0 %v34
  %1316 = vmatpush1.msra.mxu0 %v33
  %1317 = vmatprep.subr.mxu0 %v36
  %1318 = vmatpush1.msra.mxu0 %v35
  %1319 = vmatprep.subr.mxu0 0.0
  %1320 = vmatpush1.msra.mxu0 0.0
  %1321 = vmatprep.subr.mxu0 0.0
  %1322 = vmatpush1.msra.mxu0 0.0
  %1323 = vmatprep.subr.mxu0 0.0
  %1324 = vmatpush1.msra.mxu0 0.0
  %1325 = vmatprep.subr.mxu0 0.0
  %1326 = vmatpush1.msra.mxu0 0.0
  %1327 = vmatprep.subr.mxu0 0.0
  %1328 = vmatpush1.msra.mxu0 0.0
  %1329 = vmatprep.subr.mxu0 0.0
  %1330 = vmatpush1.msra.mxu0 0.0
  %1331 = vmatprep.subr.mxu0 0.0
  %1332 = vmatpush1.msra.mxu0 0.0
  %1333 = vmatprep.subr.mxu0 0.0
  %1334 = vmatpush1.msra.mxu0 0.0
  %1335 = vmatprep.subr.mxu0 0.0
  %1336 = vmatpush1.msra.mxu0 0.0
  %1337 = vmatprep.subr.mxu0 0.0
  %1338 = vmatpush1.msra.mxu0 0.0
  %1339 = vmatprep.subr.mxu0 0.0
  %1340 = vmatpush1.msra.mxu0 0.0
  %1341 = vmatprep.subr.mxu0 0.0
  %1342 = vmatpush1.msra.mxu0 0.0
  %1343 = vmatprep.subr.mxu0 0.0
  %1344 = vmatpush1.msra.mxu0 0.0
  %1345 = vmatprep.subr.mxu0 0.0
  %1346 = vmatpush1.msra.mxu0 0.0
  %1347 = vmatprep.subr.mxu0 0.0
  %1348 = vmatpush1.msra.mxu0 0.0
  %1349 = vmatprep.subr.mxu0 0.0
  %1350 = vmatpush1.msra.mxu0 0.0
  %1351 = vmatprep.subr.mxu0 0.0
  %1352 = vmatpush1.msra.mxu0 0.0
  %1353 = vmatprep.subr.mxu0 0.0
  %1354 = vmatpush1.msra.mxu0 0.0
  %1355 = vmatprep.subr.mxu0 0.0
  %1356 = vmatpush1.msra.mxu0 0.0
  %1357 = vmatprep.subr.mxu0 0.0
  %1358 = vmatpush1.msra.mxu0 0.0
  %1359 = vmatprep.subr.mxu0 0.0
  %1360 = vmatpush1.msra.mxu0 0.0
  %1361 = vmatprep.subr.mxu0 0.0
  %1362 = vmatpush1.msra.mxu0 0.0
  %1363 = vmatprep.subr.mxu0 0.0
  %1364 = vmatpush1.msra.mxu0 0.0
  %1365 = vmatprep.subr.mxu0 0.0
  %1366 = vmatpush1.msra.mxu0 0.0
  %1367 = vmatprep.subr.mxu0 0.0
  %1368 = vmatpush1.msra.mxu0 0.0
  %1369 = vmatprep.subr.mxu0 0.0
  %1370 = vmatpush1.msra.mxu0 0.0
  %1371 = vmatprep.subr.mxu0 0.0
  %1372 = vmatpush1.msra.mxu0 0.0
  %1373 = vmatprep.subr.mxu0 0.0
  %1374 = vmatpush1.msra.mxu0 0.0
  %1375 = vmatprep.mubr.f32.mxu0 0.0
  %1376 = vmatmul.mubr.f32.gmra.mrb[0].mxu0 %v1309
  %v1377 = vpop.f32.mrb[0].mxu0
  %v1378 = vadd.f32 0.0, %v1377
  %v1379 = vpop.f32.mrb[0].mxu0
  %v1380 = vadd.f32 0.0, %v1379
  %1381 = vdwg.mxu0
  %v1383 = vcombine.high %v1378, %v1378
  %v1385 = vunpack.c.l.s4 1966171168
  %v1386 = vunpack.c.0.s8 %v1385
  %v1387 = vlaneseq
  %v1388 = vshrl.u32 %v1387, 7
  %v1389 = vsub.s32 %v1386, %v1388
  %v1390 = vrot.slane %v1378, %v1389
  %v1392 = vunpack.c.l.s4 1966171168
  %v1393 = vunpack.c.0.s8 %v1392
  %v1394 = vlaneseq
  %v1395 = vshrl.u32 %v1394, 7
  %v1396 = vsub.s32 %v1393, %v1395
  %v1397 = vrot.slane %v1383, %v1396
  %v1398 = vcombine.high %v1390, %v1390
  %v1399 = vcombine.high %v1397, %v1397
  %v1401 = vunpack.c.l.s4 1966171168
  %v1402 = vunpack.c.0.s8 %v1401
  %v1403 = vlaneseq
  %v1404 = vshrl.u32 %v1403, 7
  %v1405 = vsub.s32 %v1402, %v1404
  %v1406 = vrot.slane %v1390, %v1405
  %v1408 = vunpack.c.l.s4 1966171168
  %v1409 = vunpack.c.0.s8 %v1408
  %v1410 = vlaneseq
  %v1411 = vshrl.u32 %v1410, 7
  %v1412 = vsub.s32 %v1409, %v1411
  %v1413 = vrot.slane %v1397, %v1412
  %v1415 = vunpack.c.l.s4 1966171168
  %v1416 = vunpack.c.0.s8 %v1415
  %v1417 = vlaneseq
  %v1418 = vshrl.u32 %v1417, 7
  %v1419 = vsub.s32 %v1416, %v1418
  %v1420 = vrot.slane %v1398, %v1419
  %v1422 = vunpack.c.l.s4 1966171168
  %v1423 = vunpack.c.0.s8 %v1422
  %v1424 = vlaneseq
  %v1425 = vshrl.u32 %v1424, 7
  %v1426 = vsub.s32 %v1423, %v1425
  %v1427 = vrot.slane %v1399, %v1426
  %v1428 = vcombine.high %v1406, %v1406
  %v1429 = vcombine.high %v1413, %v1413
  %v1430 = vcombine.high %v1420, %v1420
  %v1431 = vcombine.high %v1427, %v1427
  %v1432 = vlaneseq
  %v1433 = vshrl.u32 %v1432, 7
  %v1434 = vsub.s32 0, %v1433
  %v1435 = vrot.slane %v1406, %v1434
  %v1436 = vlaneseq
  %v1437 = vshrl.u32 %v1436, 7
  %v1438 = vsub.s32 0, %v1437
  %v1439 = vrot.slane %v1420, %v1438
  %v1440 = vlaneseq
  %v1441 = vshrl.u32 %v1440, 7
  %v1442 = vsub.s32 0, %v1441
  %v1443 = vrot.slane %v1428, %v1442
  %v1444 = vlaneseq
  %v1445 = vshrl.u32 %v1444, 7
  %v1446 = vsub.s32 0, %v1445
  %v1447 = vrot.slane %v1430, %v1446
  %v1448 = vlaneseq
  %v1449 = vshrl.u32 %v1448, 7
  %v1450 = vsub.s32 0, %v1449
  %v1451 = vrot.slane %v1413, %v1450
  %v1452 = vlaneseq
  %v1453 = vshrl.u32 %v1452, 7
  %v1454 = vsub.s32 0, %v1453
  %v1455 = vrot.slane %v1427, %v1454
  %v1456 = vlaneseq
  %v1457 = vshrl.u32 %v1456, 7
  %v1458 = vsub.s32 0, %v1457
  %v1459 = vrot.slane %v1429, %v1458
  %v1460 = vlaneseq
  %v1461 = vshrl.u32 %v1460, 7
  %v1462 = vsub.s32 0, %v1461
  %v1463 = vrot.slane %v1431, %v1462
  %v1472 = vadd.f32 %v53, %v1435
  %v1473 = vadd.f32 %v54, %v1439
  %v1474 = vadd.f32 %v55, %v1443
  %v1475 = vadd.f32 %v56, %v1447
  %v1476 = vadd.f32 %v57, %v1451
  %v1477 = vadd.f32 %v58, %v1455
  %v1478 = vadd.f32 %v59, %v1459
  %v1479 = vadd.f32 %v60, %v1463
  %v1480 = vtanh.pop %v1472
  %v1481 = vtanh.pop %v1473
  %v1482 = vtanh.pop %v1474
  %v1483 = vtanh.pop %v1475
  %v1484 = vtanh.pop %v1476
  %v1485 = vtanh.pop %v1477
  %v1486 = vtanh.pop %v1478
  %v1487 = vtanh.pop %v1479
  %v1488 = vmul.f32 %v1480, %v641
  %v1489 = vmul.f32 %v1481, %v641
  %v1490 = vmul.f32 %v1482, %v641
  %v1491 = vmul.f32 %v1483, %v641
  %v1492 = vmul.f32 %v1484, %v641
  %v1493 = vmul.f32 %v1485, %v641
  %v1494 = vmul.f32 %v1486, %v641
  %v1495 = vmul.f32 %v1487, %v641
  %v1496 = vsel %vm77, %v1488, 0.0
  %1497 = vadd.xlane.f32.xlu0 %v1496
  %v1498 = vpop.xlane.xlu0 %1497
  %v1499 = vsel %vm77, %v1489, 0.0
  %1500 = vadd.xlane.f32.xlu0 %v1499
  %v1501 = vpop.xlane.xlu0 %1500
  %v1502 = vsel %vm77, %v1490, 0.0
  %1503 = vadd.xlane.f32.xlu0 %v1502
  %v1504 = vpop.xlane.xlu0 %1503
  %v1505 = vsel %vm77, %v1491, 0.0
  %1506 = vadd.xlane.f32.xlu0 %v1505
  %v1507 = vpop.xlane.xlu0 %1506
  %v1508 = vsel %vm77, %v1492, 0.0
  %1509 = vadd.xlane.f32.xlu0 %v1508
  %v1510 = vpop.xlane.xlu0 %1509
  %v1511 = vsel %vm77, %v1493, 0.0
  %1512 = vadd.xlane.f32.xlu0 %v1511
  %v1513 = vpop.xlane.xlu0 %1512
  %v1514 = vsel %vm77, %v1494, 0.0
  %1515 = vadd.xlane.f32.xlu0 %v1514
  %v1516 = vpop.xlane.xlu0 %1515
  %v1517 = vsel %vm77, %v1495, 0.0
  %1518 = vadd.xlane.f32.xlu0 %v1517
  %v1519 = vpop.xlane.xlu0 %1518
  %v1520 = vadd.f32 %v1498, %v682
  %v1521 = vadd.f32 %v1501, %v689
  %v1522 = vadd.f32 %v1504, %v696
  %v1523 = vadd.f32 %v1507, %v703
  %v1524 = vadd.f32 %v1510, %v710
  %v1525 = vadd.f32 %v1513, %v717
  %v1526 = vadd.f32 %v1516, %v724
  %v1527 = vadd.f32 %v1519, %v731
  %v1528 = vmul.f32 %v1520, 1.442695
  %v1529 = vpow.pop %v1528
  %v1530 = vmul.f32 %v1521, 1.442695
  %v1531 = vpow.pop %v1530
  %v1532 = vmul.f32 %v1522, 1.442695
  %v1533 = vpow.pop %v1532
  %v1534 = vmul.f32 %v1523, 1.442695
  %v1535 = vpow.pop %v1534
  %v1536 = vmul.f32 %v1524, 1.442695
  %v1537 = vpow.pop %v1536
  %v1538 = vmul.f32 %v1525, 1.442695
  %v1539 = vpow.pop %v1538
  %v1540 = vmul.f32 %v1526, 1.442695
  %v1541 = vpow.pop %v1540
  %v1542 = vmul.f32 %v1527, 1.442695
  %v1543 = vpow.pop %v1542
  %1552 = vset.pattern.permute.xlu0 0
  %1553 = vperm.xlu0 %1552, %v1529
  %v1554 = vpop.permute.xlu0 %1553
  %1555 = vset.pattern.permute.xlu0 0
  %1556 = vperm.xlu0 %1555, %v1531
  %v1557 = vpop.permute.xlu0 %1556
  %1558 = vset.pattern.permute.xlu0 0
  %1559 = vperm.xlu0 %1558, %v1533
  %v1560 = vpop.permute.xlu0 %1559
  %1561 = vset.pattern.permute.xlu0 0
  %1562 = vperm.xlu0 %1561, %v1535
  %v1563 = vpop.permute.xlu0 %1562
  %1564 = vset.pattern.permute.xlu0 0
  %1565 = vperm.xlu0 %1564, %v1537
  %v1566 = vpop.permute.xlu0 %1565
  %1567 = vset.pattern.permute.xlu0 0
  %1568 = vperm.xlu0 %1567, %v1539
  %v1569 = vpop.permute.xlu0 %1568
  %1570 = vset.pattern.permute.xlu0 0
  %1571 = vperm.xlu0 %1570, %v1541
  %v1572 = vpop.permute.xlu0 %1571
  %1573 = vset.pattern.permute.xlu0 0
  %1574 = vperm.xlu0 %1573, %v1543
  %v1575 = vpop.permute.xlu0 %1574
  %v1576 = vlaneseq
  %v1577 = vshrl.u32 %v1576, 7
  %v1578 = vsub.s32 %v797, %v1577
  %v1579 = vrot.slane %v1554, %v1578
  %v1580 = vlaneseq
  %v1581 = vshrl.u32 %v1580, 7
  %v1582 = vsub.s32 %v797, %v1581
  %v1583 = vrot.slane %v1557, %v1582
  %v1584 = vlaneseq
  %v1585 = vshrl.u32 %v1584, 7
  %v1586 = vsub.s32 %v797, %v1585
  %v1587 = vrot.slane %v1560, %v1586
  %v1588 = vlaneseq
  %v1589 = vshrl.u32 %v1588, 7
  %v1590 = vsub.s32 %v797, %v1589
  %v1591 = vrot.slane %v1563, %v1590
  %v1592 = vlaneseq
  %v1593 = vshrl.u32 %v1592, 7
  %v1594 = vsub.s32 %v797, %v1593
  %v1595 = vrot.slane %v1566, %v1594
  %v1596 = vlaneseq
  %v1597 = vshrl.u32 %v1596, 7
  %v1598 = vsub.s32 %v797, %v1597
  %v1599 = vrot.slane %v1569, %v1598
  %v1600 = vlaneseq
  %v1601 = vshrl.u32 %v1600, 7
  %v1602 = vsub.s32 %v797, %v1601
  %v1603 = vrot.slane %v1572, %v1602
  %v1604 = vlaneseq
  %v1605 = vshrl.u32 %v1604, 7
  %v1606 = vsub.s32 %v797, %v1605
  %v1607 = vrot.slane %v1575, %v1606
  %v1608 = vsel %vm830, %v1583, %v1579
  %v1609 = vsel %vm832, %v1587, %v1608
  %v1610 = vsel %vm834, %v1591, %v1609
  %v1611 = vsel %vm836, %v1595, %v1610
  %v1612 = vsel %vm838, %v1599, %v1611
  %v1613 = vsel %vm840, %v1603, %v1612
  %v1614 = vsel %vm842, %v1607, %v1613
  %v1616 = vsel %vm845, %v1614, 0.0
  %1617 = vadd.xlane.f32.xlu0 %v1616
  %v1618 = vpop.xlane.xlu0 %1617
  %v1619 = vrcp.pop %v1618
  %v1621 = vlaneseq
  %v1622 = vshrl.u32 %v1621, 7
  %v1623 = vsub.s32 0, %v1622
  %v1624 = vrot.slane %v1619, %v1623
  %v1625 = vlaneseq
  %v1626 = vshrl.u32 %v1625, 7
  %v1627 = vsub.s32 1, %v1626
  %v1628 = vrot.slane %v1619, %v1627
  %v1629 = vlaneseq
  %v1630 = vshrl.u32 %v1629, 7
  %v1631 = vsub.s32 2, %v1630
  %v1632 = vrot.slane %v1619, %v1631
  %v1633 = vlaneseq
  %v1634 = vshrl.u32 %v1633, 7
  %v1635 = vsub.s32 3, %v1634
  %v1636 = vrot.slane %v1619, %v1635
  %v1637 = vlaneseq
  %v1638 = vshrl.u32 %v1637, 7
  %v1639 = vsub.s32 4, %v1638
  %v1640 = vrot.slane %v1619, %v1639
  %v1641 = vlaneseq
  %v1642 = vshrl.u32 %v1641, 7
  %v1643 = vsub.s32 5, %v1642
  %v1644 = vrot.slane %v1619, %v1643
  %v1645 = vlaneseq
  %v1646 = vshrl.u32 %v1645, 7
  %v1647 = vsub.s32 6, %v1646
  %v1648 = vrot.slane %v1619, %v1647
  %v1649 = vlaneseq
  %v1650 = vshrl.u32 %v1649, 7
  %v1651 = vsub.s32 7, %v1650
  %v1652 = vrot.slane %v1619, %v1651
  %v1661 = vmul.f32 %v1529, %v1624
  %v1662 = vmul.f32 %v1531, %v1628
  %v1663 = vmul.f32 %v1533, %v1632
  %v1664 = vmul.f32 %v1535, %v1636
  %v1665 = vmul.f32 %v1537, %v1640
  %v1666 = vmul.f32 %v1539, %v1644
  %v1667 = vmul.f32 %v1541, %v1648
  %v1668 = vmul.f32 %v1543, %v1652
  %1670 = vset.pattern.permute.xlu0 0
  %1671 = vperm.xlu0 %1670, %v1661
  %v1672 = vpop.permute.xlu0 %1671
  %1675 = vset.pattern.permute.xlu0 0
  %1676 = vperm.xlu0 %1675, %v1662
  %v1677 = vpop.permute.xlu0 %1676
  %1680 = vset.pattern.permute.xlu0 0
  %1681 = vperm.xlu0 %1680, %v1663
  %v1682 = vpop.permute.xlu0 %1681
  %1685 = vset.pattern.permute.xlu0 0
  %1686 = vperm.xlu0 %1685, %v1664
  %v1687 = vpop.permute.xlu0 %1686
  %1690 = vset.pattern.permute.xlu0 0
  %1691 = vperm.xlu0 %1690, %v1665
  %v1692 = vpop.permute.xlu0 %1691
  %1695 = vset.pattern.permute.xlu0 0
  %1696 = vperm.xlu0 %1695, %v1666
  %v1697 = vpop.permute.xlu0 %1696
  %1700 = vset.pattern.permute.xlu0 0
  %1701 = vperm.xlu0 %1700, %v1667
  %v1702 = vpop.permute.xlu0 %1701
  %1705 = vset.pattern.permute.xlu0 0
  %1706 = vperm.xlu0 %1705, %v1668
  %v1707 = vpop.permute.xlu0 %1706
  %v1709 = vmul.f32 %v1672, %v62
  %v1710 = vmul.f32 %v1677, %v63
  %v1711 = vmul.f32 %v1682, %v64
  %v1712 = vmul.f32 %v1687, %v65
  %v1713 = vmul.f32 %v1692, %v66
  %v1714 = vmul.f32 %v1697, %v67
  %v1715 = vmul.f32 %v1702, %v68
  %v1716 = vmul.f32 %v1707, %v69
  %v1717 = vsel %vm77, %v1709, 0.0
  %v1718 = vrot.slane %v1717, 4
  %v1719 = vadd.f32 %v1717, %v1718
  %v1720 = vrot.slane %v1719, 2
  %v1721 = vadd.f32 %v1719, %v1720
  %v1722 = vrot.slane %v1721, 1
  %v1723 = vadd.f32 %v1721, %v1722
  %v1724 = vsel %vm77, %v1710, 0.0
  %v1725 = vrot.slane %v1724, 4
  %v1726 = vadd.f32 %v1724, %v1725
  %v1727 = vrot.slane %v1726, 2
  %v1728 = vadd.f32 %v1726, %v1727
  %v1729 = vrot.slane %v1728, 1
  %v1730 = vadd.f32 %v1728, %v1729
  %v1731 = vsel %vm77, %v1711, 0.0
  %v1732 = vrot.slane %v1731, 4
  %v1733 = vadd.f32 %v1731, %v1732
  %v1734 = vrot.slane %v1733, 2
  %v1735 = vadd.f32 %v1733, %v1734
  %v1736 = vrot.slane %v1735, 1
  %v1737 = vadd.f32 %v1735, %v1736
  %v1738 = vsel %vm77, %v1712, 0.0
  %v1739 = vrot.slane %v1738, 4
  %v1740 = vadd.f32 %v1738, %v1739
  %v1741 = vrot.slane %v1740, 2
  %v1742 = vadd.f32 %v1740, %v1741
  %v1743 = vrot.slane %v1742, 1
  %v1744 = vadd.f32 %v1742, %v1743
  %v1745 = vsel %vm77, %v1713, 0.0
  %v1746 = vrot.slane %v1745, 4
  %v1747 = vadd.f32 %v1745, %v1746
  %v1748 = vrot.slane %v1747, 2
  %v1749 = vadd.f32 %v1747, %v1748
  %v1750 = vrot.slane %v1749, 1
  %v1751 = vadd.f32 %v1749, %v1750
  %v1752 = vsel %vm77, %v1714, 0.0
  %v1753 = vrot.slane %v1752, 4
  %v1754 = vadd.f32 %v1752, %v1753
  %v1755 = vrot.slane %v1754, 2
  %v1756 = vadd.f32 %v1754, %v1755
  %v1757 = vrot.slane %v1756, 1
  %v1758 = vadd.f32 %v1756, %v1757
  %v1759 = vsel %vm77, %v1715, 0.0
  %v1760 = vrot.slane %v1759, 4
  %v1761 = vadd.f32 %v1759, %v1760
  %v1762 = vrot.slane %v1761, 2
  %v1763 = vadd.f32 %v1761, %v1762
  %v1764 = vrot.slane %v1763, 1
  %v1765 = vadd.f32 %v1763, %v1764
  %v1766 = vsel %vm77, %v1716, 0.0
  %v1767 = vrot.slane %v1766, 4
  %v1768 = vadd.f32 %v1766, %v1767
  %v1769 = vrot.slane %v1768, 2
  %v1770 = vadd.f32 %v1768, %v1769
  %v1771 = vrot.slane %v1770, 1
  %v1772 = vadd.f32 %v1770, %v1771
  %v1781 = vsel %vm830, %v1730, %v1723
  %v1782 = vsel %vm832, %v1737, %v1781
  %v1783 = vsel %vm834, %v1744, %v1782
  %v1784 = vsel %vm836, %v1751, %v1783
  %v1785 = vsel %vm838, %v1758, %v1784
  %v1786 = vsel %vm840, %v1765, %v1785
  %v1787 = vsel %vm842, %v1772, %v1786
  %v1788 = vsel %vm77, %v1787, 0
  %1790 = vmatprep.subr.mxu0 %v39
  %1791 = vmatpush1.msra.mxu0 %v38
  %1792 = vmatprep.subr.mxu0 %v41
  %1793 = vmatpush1.msra.mxu0 %v40
  %1794 = vmatprep.subr.mxu0 %v43
  %1795 = vmatpush1.msra.mxu0 %v42
  %1796 = vmatprep.subr.mxu0 %v45
  %1797 = vmatpush1.msra.mxu0 %v44
  %1798 = vmatprep.subr.mxu0 0.0
  %1799 = vmatpush1.msra.mxu0 0.0
  %1800 = vmatprep.subr.mxu0 0.0
  %1801 = vmatpush1.msra.mxu0 0.0
  %1802 = vmatprep.subr.mxu0 0.0
  %1803 = vmatpush1.msra.mxu0 0.0
  %1804 = vmatprep.subr.mxu0 0.0
  %1805 = vmatpush1.msra.mxu0 0.0
  %1806 = vmatprep.subr.mxu0 0.0
  %1807 = vmatpush1.msra.mxu0 0.0
  %1808 = vmatprep.subr.mxu0 0.0
  %1809 = vmatpush1.msra.mxu0 0.0
  %1810 = vmatprep.subr.mxu0 0.0
  %1811 = vmatpush1.msra.mxu0 0.0
  %1812 = vmatprep.subr.mxu0 0.0
  %1813 = vmatpush1.msra.mxu0 0.0
  %1814 = vmatprep.subr.mxu0 0.0
  %1815 = vmatpush1.msra.mxu0 0.0
  %1816 = vmatprep.subr.mxu0 0.0
  %1817 = vmatpush1.msra.mxu0 0.0
  %1818 = vmatprep.subr.mxu0 0.0
  %1819 = vmatpush1.msra.mxu0 0.0
  %1820 = vmatprep.subr.mxu0 0.0
  %1821 = vmatpush1.msra.mxu0 0.0
  %1822 = vmatprep.subr.mxu0 0.0
  %1823 = vmatpush1.msra.mxu0 0.0
  %1824 = vmatprep.subr.mxu0 0.0
  %1825 = vmatpush1.msra.mxu0 0.0
  %1826 = vmatprep.subr.mxu0 0.0
  %1827 = vmatpush1.msra.mxu0 0.0
  %1828 = vmatprep.subr.mxu0 0.0
  %1829 = vmatpush1.msra.mxu0 0.0
  %1830 = vmatprep.subr.mxu0 0.0
  %1831 = vmatpush1.msra.mxu0 0.0
  %1832 = vmatprep.subr.mxu0 0.0
  %1833 = vmatpush1.msra.mxu0 0.0
  %1834 = vmatprep.subr.mxu0 0.0
  %1835 = vmatpush1.msra.mxu0 0.0
  %1836 = vmatprep.subr.mxu0 0.0
  %1837 = vmatpush1.msra.mxu0 0.0
  %1838 = vmatprep.subr.mxu0 0.0
  %1839 = vmatpush1.msra.mxu0 0.0
  %1840 = vmatprep.subr.mxu0 0.0
  %1841 = vmatpush1.msra.mxu0 0.0
  %1842 = vmatprep.subr.mxu0 0.0
  %1843 = vmatpush1.msra.mxu0 0.0
  %1844 = vmatprep.subr.mxu0 0.0
  %1845 = vmatpush1.msra.mxu0 0.0
  %1846 = vmatprep.subr.mxu0 0.0
  %1847 = vmatpush1.msra.mxu0 0.0
  %1848 = vmatprep.subr.mxu0 0.0
  %1849 = vmatpush1.msra.mxu0 0.0
  %1850 = vmatprep.subr.mxu0 0.0
  %1851 = vmatpush1.msra.mxu0 0.0
  %1852 = vmatprep.subr.mxu0 0.0
  %1853 = vmatpush1.msra.mxu0 0.0
  %1854 = vmatprep.mubr.f32.mxu0 0.0
  %1855 = vmatmul.mubr.f32.gmra.mrb[0].mxu0 %v1788
  %v1856 = vpop.f32.mrb[0].mxu0
  %v1857 = vadd.f32 0.0, %v1856
  %v1858 = vpop.f32.mrb[0].mxu0
  %v1859 = vadd.f32 0.0, %v1858
  %1860 = vdwg.mxu0
  %v1861 = vadd.f32 %v1173, %v1378
  %v1862 = vadd.f32 %v1861, %v1859
  %1864 = vrot.lane.b32.xlu0 %v1862, 112
  %v1865 = vpop.permute.xlu0 %1864
  %v1867 = vmax.f32 %v1862, %v1865
  %v1868 = vxor.u32 %v1862, 2147483648
  %v1869 = vmul.f32 %v1868, 1.442695
  %v1870 = vpow.pop %v1869
  %v1871 = vadd.f32 %v1870, 1.0
  %v1872 = vrcp.pop %v1871
  %v1873 = vmul.f32 1.0, %v1872
  %1875 = vrot.lane.b32.xlu0 %v1867, 96
  %v1876 = vpop.permute.xlu0 %1875
  %v1878 = vlaneseq
  %v1879 = vshrl.u32 %v1878, 7
  %v1880 = vsub.s32 %v1108, %v1879
  %v1881 = vrot.slane %v1672, %v1880
  %v1882 = vlaneseq
  %v1883 = vshrl.u32 %v1882, 7
  %v1884 = vsub.s32 %v1108, %v1883
  %v1885 = vrot.slane %v1677, %v1884
  %v1886 = vlaneseq
  %v1887 = vshrl.u32 %v1886, 7
  %v1888 = vsub.s32 %v1108, %v1887
  %v1889 = vrot.slane %v1682, %v1888
  %v1890 = vlaneseq
  %v1891 = vshrl.u32 %v1890, 7
  %v1892 = vsub.s32 %v1108, %v1891
  %v1893 = vrot.slane %v1687, %v1892
  %v1894 = vlaneseq
  %v1895 = vshrl.u32 %v1894, 7
  %v1896 = vsub.s32 %v1108, %v1895
  %v1897 = vrot.slane %v1692, %v1896
  %v1898 = vlaneseq
  %v1899 = vshrl.u32 %v1898, 7
  %v1900 = vsub.s32 %v1108, %v1899
  %v1901 = vrot.slane %v1697, %v1900
  %v1902 = vlaneseq
  %v1903 = vshrl.u32 %v1902, 7
  %v1904 = vsub.s32 %v1108, %v1903
  %v1905 = vrot.slane %v1702, %v1904
  %v1906 = vlaneseq
  %v1907 = vshrl.u32 %v1906, 7
  %v1908 = vsub.s32 %v1108, %v1907
  %v1909 = vrot.slane %v1707, %v1908
  %v1910 = vsel %vm830, %v1885, %v1881
  %v1911 = vsel %vm832, %v1889, %v1910
  %v1912 = vsel %vm834, %v1893, %v1911
  %v1913 = vsel %vm836, %v1897, %v1912
  %v1914 = vsel %vm838, %v1901, %v1913
  %v1915 = vsel %vm840, %v1905, %v1914
  %v1916 = vsel %vm842, %v1909, %v1915
  %1919 = vrot.lane.b32.xlu0 %v1873, 88
  %v1920 = vpop.permute.xlu0 %1919
  %1922 = vrot.lane.b32.xlu0 %v1305, 32
  %v1923 = vpop.permute.xlu0 %1922
  %1925 = vrot.lane.b32.xlu0 %v1787, 96
  %v1926 = vpop.permute.xlu0 %1925
  %v1928 = vsel %vm1159, %v1876, %v1916
  %v1929 = vsel %vm1161, %v1928, %v1920
  %v1930 = vsel %vm1163, %v1929, 0.0
  %v1931 = vsel %vm77, %v1930, %v1201
  %v1932 = vsel %vm1166, %v1931, %v1923
  %v1933 = vsel %vm1168, %v1932, %v1926
  %s1934 = scalar_lea.vmem %s5, 8
  %1935 = vst [vmem:[%s1934] sm:$0xff] %v1933
  %s1936 = scalar_lea.vmem %s0, 32
  %v1937 = vld [vmem:[%s1936] sm:$0xff]
  %v1938 = vld [vmem:[%s1936 + $0x8] sm:$0xff]
  %v1939 = vadd.f32 %v1937, %v1857
  %v1940 = vadd.f32 %v1276, %v304
  %v1941 = vadd.f32 %v1939, %v1940
  %v1942 = vxor.u32 %v1941, 2147483648
  %v1943 = vmul.f32 %v1942, 1.442695
  %v1944 = vpow.pop %v1943
  %v1945 = vadd.f32 %v1944, 1.0
  %v1946 = vrcp.pop %v1945
  %v1947 = vmul.f32 1.0, %v1946
  %1949 = vrot.lane.b32.xlu0 %v1940, 64
  %v1950 = vpop.permute.xlu0 %1949
  %v1952 = vmul.f32 %v1947, %v1950
  %1954 = vrot.lane.b32.xlu0 %v1952, 64
  %v1955 = vpop.permute.xlu0 %1954
  %v1957 = vadd.f32 %v1939, %v1955
  %v1958 = vtanh.pop %v1957
  %v1959 = vsub.f32 1.0, %v1947
  %1961 = vrot.lane.b32.xlu0 %v1958, 96
  %v1962 = vpop.permute.xlu0 %1961
  %v1964 = vmul.f32 %v1959, %v1962
  %v1965 = vmul.f32 %v1947, %v1201
  %v1966 = vadd.f32 %v1964, %v1965
  %1968 = vrot.lane.b32.xlu0 %v1966, 96
  %v1969 = vpop.permute.xlu0 %1968
  %v1970 = vsel %vm77, %v1969, 0
  %1972 = vmatprep.subr.mxu0 %v21
  %1973 = vmatpush1.msra.mxu0 %v20
  %1974 = vmatprep.subr.mxu0 %v23
  %1975 = vmatpush1.msra.mxu0 %v22
  %1976 = vmatprep.subr.mxu0 %v25
  %1977 = vmatpush1.msra.mxu0 %v24
  %1978 = vmatprep.subr.mxu0 %v27
  %1979 = vmatpush1.msra.mxu0 %v26
  %1980 = vmatprep.subr.mxu0 0.0
  %1981 = vmatpush1.msra.mxu0 0.0
  %1982 = vmatprep.subr.mxu0 0.0
  %1983 = vmatpush1.msra.mxu0 0.0
  %1984 = vmatprep.subr.mxu0 0.0
  %1985 = vmatpush1.msra.mxu0 0.0
  %1986 = vmatprep.subr.mxu0 0.0
  %1987 = vmatpush1.msra.mxu0 0.0
  %1988 = vmatprep.subr.mxu0 0.0
  %1989 = vmatpush1.msra.mxu0 0.0
  %1990 = vmatprep.subr.mxu0 0.0
  %1991 = vmatpush1.msra.mxu0 0.0
  %1992 = vmatprep.subr.mxu0 0.0
  %1993 = vmatpush1.msra.mxu0 0.0
  %1994 = vmatprep.subr.mxu0 0.0
  %1995 = vmatpush1.msra.mxu0 0.0
  %1996 = vmatprep.subr.mxu0 0.0
  %1997 = vmatpush1.msra.mxu0 0.0
  %1998 = vmatprep.subr.mxu0 0.0
  %1999 = vmatpush1.msra.mxu0 0.0
  %2000 = vmatprep.subr.mxu0 0.0
  %2001 = vmatpush1.msra.mxu0 0.0
  %2002 = vmatprep.subr.mxu0 0.0
  %2003 = vmatpush1.msra.mxu0 0.0
  %2004 = vmatprep.subr.mxu0 0.0
  %2005 = vmatpush1.msra.mxu0 0.0
  %2006 = vmatprep.subr.mxu0 0.0
  %2007 = vmatpush1.msra.mxu0 0.0
  %2008 = vmatprep.subr.mxu0 0.0
  %2009 = vmatpush1.msra.mxu0 0.0
  %2010 = vmatprep.subr.mxu0 0.0
  %2011 = vmatpush1.msra.mxu0 0.0
  %2012 = vmatprep.subr.mxu0 0.0
  %2013 = vmatpush1.msra.mxu0 0.0
  %2014 = vmatprep.subr.mxu0 0.0
  %2015 = vmatpush1.msra.mxu0 0.0
  %2016 = vmatprep.subr.mxu0 0.0
  %2017 = vmatpush1.msra.mxu0 0.0
  %2018 = vmatprep.subr.mxu0 0.0
  %2019 = vmatpush1.msra.mxu0 0.0
  %2020 = vmatprep.subr.mxu0 0.0
  %2021 = vmatpush1.msra.mxu0 0.0
  %2022 = vmatprep.subr.mxu0 0.0
  %2023 = vmatpush1.msra.mxu0 0.0
  %2024 = vmatprep.subr.mxu0 0.0
  %2025 = vmatpush1.msra.mxu0 0.0
  %2026 = vmatprep.subr.mxu0 0.0
  %2027 = vmatpush1.msra.mxu0 0.0
  %2028 = vmatprep.subr.mxu0 0.0
  %2029 = vmatpush1.msra.mxu0 0.0
  %2030 = vmatprep.subr.mxu0 0.0
  %2031 = vmatpush1.msra.mxu0 0.0
  %2032 = vmatprep.subr.mxu0 0.0
  %2033 = vmatpush1.msra.mxu0 0.0
  %2034 = vmatprep.subr.mxu0 0.0
  %2035 = vmatpush1.msra.mxu0 0.0
  %2036 = vmatprep.mubr.f32.mxu0 0.0
  %2037 = vmatmul.mubr.f32.gmra.mrb[0].mxu0 %v1970
  %v2038 = vpop.f32.mrb[0].mxu0
  %v2039 = vadd.f32 0.0, %v2038
  %v2040 = vpop.f32.mrb[0].mxu0
  %v2041 = vadd.f32 0.0, %v2040
  %2042 = vdwg.mxu0
  %v2043 = vadd.f32 %v2039, %v416
  %v2044 = vadd.f32 %v1380, %v423
  %v2045 = vadd.f32 %v2043, %v2044
  %v2046 = vxor.u32 %v2045, 2147483648
  %v2047 = vmul.f32 %v2046, 1.442695
  %v2048 = vpow.pop %v2047
  %v2049 = vadd.f32 %v2048, 1.0
  %v2050 = vrcp.pop %v2049
  %v2051 = vmul.f32 1.0, %v2050
  %2053 = vrot.lane.b32.xlu0 %v2044, 64
  %v2054 = vpop.permute.xlu0 %2053
  %v2056 = vmul.f32 %v2051, %v2054
  %2058 = vrot.lane.b32.xlu0 %v2056, 64
  %v2059 = vpop.permute.xlu0 %2058
  %v2061 = vadd.f32 %v2043, %v2059
  %v2062 = vtanh.pop %v2061
  %v2063 = vsub.f32 1.0, %v2051
  %2065 = vrot.lane.b32.xlu0 %v2062, 96
  %v2066 = vpop.permute.xlu0 %2065
  %v2068 = vmul.f32 %v2063, %v2066
  %v2069 = vmul.f32 %v2051, %v1305
  %v2070 = vadd.f32 %v2068, %v2069
  %2072 = vrot.lane.b32.xlu0 %v2070, 96
  %v2073 = vpop.permute.xlu0 %2072
  %v2074 = vsel %vm77, %v2073, 0
  %2076 = vmatprep.subr.mxu0 %v30
  %2077 = vmatpush1.msra.mxu0 %v29
  %2078 = vmatprep.subr.mxu0 %v32
  %2079 = vmatpush1.msra.mxu0 %v31
  %2080 = vmatprep.subr.mxu0 %v34
  %2081 = vmatpush1.msra.mxu0 %v33
  %2082 = vmatprep.subr.mxu0 %v36
  %2083 = vmatpush1.msra.mxu0 %v35
  %2084 = vmatprep.subr.mxu0 0.0
  %2085 = vmatpush1.msra.mxu0 0.0
  %2086 = vmatprep.subr.mxu0 0.0
  %2087 = vmatpush1.msra.mxu0 0.0
  %2088 = vmatprep.subr.mxu0 0.0
  %2089 = vmatpush1.msra.mxu0 0.0
  %2090 = vmatprep.subr.mxu0 0.0
  %2091 = vmatpush1.msra.mxu0 0.0
  %2092 = vmatprep.subr.mxu0 0.0
  %2093 = vmatpush1.msra.mxu0 0.0
  %2094 = vmatprep.subr.mxu0 0.0
  %2095 = vmatpush1.msra.mxu0 0.0
  %2096 = vmatprep.subr.mxu0 0.0
  %2097 = vmatpush1.msra.mxu0 0.0
  %2098 = vmatprep.subr.mxu0 0.0
  %2099 = vmatpush1.msra.mxu0 0.0
  %2100 = vmatprep.subr.mxu0 0.0
  %2101 = vmatpush1.msra.mxu0 0.0
  %2102 = vmatprep.subr.mxu0 0.0
  %2103 = vmatpush1.msra.mxu0 0.0
  %2104 = vmatprep.subr.mxu0 0.0
  %2105 = vmatpush1.msra.mxu0 0.0
  %2106 = vmatprep.subr.mxu0 0.0
  %2107 = vmatpush1.msra.mxu0 0.0
  %2108 = vmatprep.subr.mxu0 0.0
  %2109 = vmatpush1.msra.mxu0 0.0
  %2110 = vmatprep.subr.mxu0 0.0
  %2111 = vmatpush1.msra.mxu0 0.0
  %2112 = vmatprep.subr.mxu0 0.0
  %2113 = vmatpush1.msra.mxu0 0.0
  %2114 = vmatprep.subr.mxu0 0.0
  %2115 = vmatpush1.msra.mxu0 0.0
  %2116 = vmatprep.subr.mxu0 0.0
  %2117 = vmatpush1.msra.mxu0 0.0
  %2118 = vmatprep.subr.mxu0 0.0
  %2119 = vmatpush1.msra.mxu0 0.0
  %2120 = vmatprep.subr.mxu0 0.0
  %2121 = vmatpush1.msra.mxu0 0.0
  %2122 = vmatprep.subr.mxu0 0.0
  %2123 = vmatpush1.msra.mxu0 0.0
  %2124 = vmatprep.subr.mxu0 0.0
  %2125 = vmatpush1.msra.mxu0 0.0
  %2126 = vmatprep.subr.mxu0 0.0
  %2127 = vmatpush1.msra.mxu0 0.0
  %2128 = vmatprep.subr.mxu0 0.0
  %2129 = vmatpush1.msra.mxu0 0.0
  %2130 = vmatprep.subr.mxu0 0.0
  %2131 = vmatpush1.msra.mxu0 0.0
  %2132 = vmatprep.subr.mxu0 0.0
  %2133 = vmatpush1.msra.mxu0 0.0
  %2134 = vmatprep.subr.mxu0 0.0
  %2135 = vmatpush1.msra.mxu0 0.0
  %2136 = vmatprep.subr.mxu0 0.0
  %2137 = vmatpush1.msra.mxu0 0.0
  %2138 = vmatprep.subr.mxu0 0.0
  %2139 = vmatpush1.msra.mxu0 0.0
  %2140 = vmatprep.mubr.f32.mxu0 0.0
  %2141 = vmatmul.mubr.f32.gmra.mrb[0].mxu0 %v2074
  %v2142 = vpop.f32.mrb[0].mxu0
  %v2143 = vadd.f32 0.0, %v2142
  %v2144 = vpop.f32.mrb[0].mxu0
  %v2145 = vadd.f32 0.0, %v2144
  %2146 = vdwg.mxu0
  %v2148 = vcombine.high %v2143, %v2143
  %v2150 = vunpack.c.l.s4 1966171168
  %v2151 = vunpack.c.0.s8 %v2150
  %v2152 = vlaneseq
  %v2153 = vshrl.u32 %v2152, 7
  %v2154 = vsub.s32 %v2151, %v2153
  %v2155 = vrot.slane %v2143, %v2154
  %v2157 = vunpack.c.l.s4 1966171168
  %v2158 = vunpack.c.0.s8 %v2157
  %v2159 = vlaneseq
  %v2160 = vshrl.u32 %v2159, 7
  %v2161 = vsub.s32 %v2158, %v2160
  %v2162 = vrot.slane %v2148, %v2161
  %v2163 = vcombine.high %v2155, %v2155
  %v2164 = vcombine.high %v2162, %v2162
  %v2166 = vunpack.c.l.s4 1966171168
  %v2167 = vunpack.c.0.s8 %v2166
  %v2168 = vlaneseq
  %v2169 = vshrl.u32 %v2168, 7
  %v2170 = vsub.s32 %v2167, %v2169
  %v2171 = vrot.slane %v2155, %v2170
  %v2173 = vunpack.c.l.s4 1966171168
  %v2174 = vunpack.c.0.s8 %v2173
  %v2175 = vlaneseq
  %v2176 = vshrl.u32 %v2175, 7
  %v2177 = vsub.s32 %v2174, %v2176
  %v2178 = vrot.slane %v2162, %v2177
  %v2180 = vunpack.c.l.s4 1966171168
  %v2181 = vunpack.c.0.s8 %v2180
  %v2182 = vlaneseq
  %v2183 = vshrl.u32 %v2182, 7
  %v2184 = vsub.s32 %v2181, %v2183
  %v2185 = vrot.slane %v2163, %v2184
  %v2187 = vunpack.c.l.s4 1966171168
  %v2188 = vunpack.c.0.s8 %v2187
  %v2189 = vlaneseq
  %v2190 = vshrl.u32 %v2189, 7
  %v2191 = vsub.s32 %v2188, %v2190
  %v2192 = vrot.slane %v2164, %v2191
  %v2193 = vcombine.high %v2171, %v2171
  %v2194 = vcombine.high %v2178, %v2178
  %v2195 = vcombine.high %v2185, %v2185
  %v2196 = vcombine.high %v2192, %v2192
  %v2197 = vlaneseq
  %v2198 = vshrl.u32 %v2197, 7
  %v2199 = vsub.s32 0, %v2198
  %v2200 = vrot.slane %v2171, %v2199
  %v2201 = vlaneseq
  %v2202 = vshrl.u32 %v2201, 7
  %v2203 = vsub.s32 0, %v2202
  %v2204 = vrot.slane %v2185, %v2203
  %v2205 = vlaneseq
  %v2206 = vshrl.u32 %v2205, 7
  %v2207 = vsub.s32 0, %v2206
  %v2208 = vrot.slane %v2193, %v2207
  %v2209 = vlaneseq
  %v2210 = vshrl.u32 %v2209, 7
  %v2211 = vsub.s32 0, %v2210
  %v2212 = vrot.slane %v2195, %v2211
  %v2213 = vlaneseq
  %v2214 = vshrl.u32 %v2213, 7
  %v2215 = vsub.s32 0, %v2214
  %v2216 = vrot.slane %v2178, %v2215
  %v2217 = vlaneseq
  %v2218 = vshrl.u32 %v2217, 7
  %v2219 = vsub.s32 0, %v2218
  %v2220 = vrot.slane %v2192, %v2219
  %v2221 = vlaneseq
  %v2222 = vshrl.u32 %v2221, 7
  %v2223 = vsub.s32 0, %v2222
  %v2224 = vrot.slane %v2194, %v2223
  %v2225 = vlaneseq
  %v2226 = vshrl.u32 %v2225, 7
  %v2227 = vsub.s32 0, %v2226
  %v2228 = vrot.slane %v2196, %v2227
  %v2237 = vadd.f32 %v53, %v2200
  %v2238 = vadd.f32 %v54, %v2204
  %v2239 = vadd.f32 %v55, %v2208
  %v2240 = vadd.f32 %v56, %v2212
  %v2241 = vadd.f32 %v57, %v2216
  %v2242 = vadd.f32 %v58, %v2220
  %v2243 = vadd.f32 %v59, %v2224
  %v2244 = vadd.f32 %v60, %v2228
  %v2245 = vtanh.pop %v2237
  %v2246 = vtanh.pop %v2238
  %v2247 = vtanh.pop %v2239
  %v2248 = vtanh.pop %v2240
  %v2249 = vtanh.pop %v2241
  %v2250 = vtanh.pop %v2242
  %v2251 = vtanh.pop %v2243
  %v2252 = vtanh.pop %v2244
  %v2253 = vmul.f32 %v2245, %v641
  %v2254 = vmul.f32 %v2246, %v641
  %v2255 = vmul.f32 %v2247, %v641
  %v2256 = vmul.f32 %v2248, %v641
  %v2257 = vmul.f32 %v2249, %v641
  %v2258 = vmul.f32 %v2250, %v641
  %v2259 = vmul.f32 %v2251, %v641
  %v2260 = vmul.f32 %v2252, %v641
  %v2261 = vsel %vm77, %v2253, 0.0
  %2262 = vadd.xlane.f32.xlu0 %v2261
  %v2263 = vpop.xlane.xlu0 %2262
  %v2264 = vsel %vm77, %v2254, 0.0
  %2265 = vadd.xlane.f32.xlu0 %v2264
  %v2266 = vpop.xlane.xlu0 %2265
  %v2267 = vsel %vm77, %v2255, 0.0
  %2268 = vadd.xlane.f32.xlu0 %v2267
  %v2269 = vpop.xlane.xlu0 %2268
  %v2270 = vsel %vm77, %v2256, 0.0
  %2271 = vadd.xlane.f32.xlu0 %v2270
  %v2272 = vpop.xlane.xlu0 %2271
  %v2273 = vsel %vm77, %v2257, 0.0
  %2274 = vadd.xlane.f32.xlu0 %v2273
  %v2275 = vpop.xlane.xlu0 %2274
  %v2276 = vsel %vm77, %v2258, 0.0
  %2277 = vadd.xlane.f32.xlu0 %v2276
  %v2278 = vpop.xlane.xlu0 %2277
  %v2279 = vsel %vm77, %v2259, 0.0
  %2280 = vadd.xlane.f32.xlu0 %v2279
  %v2281 = vpop.xlane.xlu0 %2280
  %v2282 = vsel %vm77, %v2260, 0.0
  %2283 = vadd.xlane.f32.xlu0 %v2282
  %v2284 = vpop.xlane.xlu0 %2283
  %v2285 = vadd.f32 %v2263, %v682
  %v2286 = vadd.f32 %v2266, %v689
  %v2287 = vadd.f32 %v2269, %v696
  %v2288 = vadd.f32 %v2272, %v703
  %v2289 = vadd.f32 %v2275, %v710
  %v2290 = vadd.f32 %v2278, %v717
  %v2291 = vadd.f32 %v2281, %v724
  %v2292 = vadd.f32 %v2284, %v731
  %v2293 = vmul.f32 %v2285, 1.442695
  %v2294 = vpow.pop %v2293
  %v2295 = vmul.f32 %v2286, 1.442695
  %v2296 = vpow.pop %v2295
  %v2297 = vmul.f32 %v2287, 1.442695
  %v2298 = vpow.pop %v2297
  %v2299 = vmul.f32 %v2288, 1.442695
  %v2300 = vpow.pop %v2299
  %v2301 = vmul.f32 %v2289, 1.442695
  %v2302 = vpow.pop %v2301
  %v2303 = vmul.f32 %v2290, 1.442695
  %v2304 = vpow.pop %v2303
  %v2305 = vmul.f32 %v2291, 1.442695
  %v2306 = vpow.pop %v2305
  %v2307 = vmul.f32 %v2292, 1.442695
  %v2308 = vpow.pop %v2307
  %2317 = vset.pattern.permute.xlu0 0
  %2318 = vperm.xlu0 %2317, %v2294
  %v2319 = vpop.permute.xlu0 %2318
  %2320 = vset.pattern.permute.xlu0 0
  %2321 = vperm.xlu0 %2320, %v2296
  %v2322 = vpop.permute.xlu0 %2321
  %2323 = vset.pattern.permute.xlu0 0
  %2324 = vperm.xlu0 %2323, %v2298
  %v2325 = vpop.permute.xlu0 %2324
  %2326 = vset.pattern.permute.xlu0 0
  %2327 = vperm.xlu0 %2326, %v2300
  %v2328 = vpop.permute.xlu0 %2327
  %2329 = vset.pattern.permute.xlu0 0
  %2330 = vperm.xlu0 %2329, %v2302
  %v2331 = vpop.permute.xlu0 %2330
  %2332 = vset.pattern.permute.xlu0 0
  %2333 = vperm.xlu0 %2332, %v2304
  %v2334 = vpop.permute.xlu0 %2333
  %2335 = vset.pattern.permute.xlu0 0
  %2336 = vperm.xlu0 %2335, %v2306
  %v2337 = vpop.permute.xlu0 %2336
  %2338 = vset.pattern.permute.xlu0 0
  %2339 = vperm.xlu0 %2338, %v2308
  %v2340 = vpop.permute.xlu0 %2339
  %v2341 = vlaneseq
  %v2342 = vshrl.u32 %v2341, 7
  %v2343 = vsub.s32 %v797, %v2342
  %v2344 = vrot.slane %v2319, %v2343
  %v2345 = vlaneseq
  %v2346 = vshrl.u32 %v2345, 7
  %v2347 = vsub.s32 %v797, %v2346
  %v2348 = vrot.slane %v2322, %v2347
  %v2349 = vlaneseq
  %v2350 = vshrl.u32 %v2349, 7
  %v2351 = vsub.s32 %v797, %v2350
  %v2352 = vrot.slane %v2325, %v2351
  %v2353 = vlaneseq
  %v2354 = vshrl.u32 %v2353, 7
  %v2355 = vsub.s32 %v797, %v2354
  %v2356 = vrot.slane %v2328, %v2355
  %v2357 = vlaneseq
  %v2358 = vshrl.u32 %v2357, 7
  %v2359 = vsub.s32 %v797, %v2358
  %v2360 = vrot.slane %v2331, %v2359
  %v2361 = vlaneseq
  %v2362 = vshrl.u32 %v2361, 7
  %v2363 = vsub.s32 %v797, %v2362
  %v2364 = vrot.slane %v2334, %v2363
  %v2365 = vlaneseq
  %v2366 = vshrl.u32 %v2365, 7
  %v2367 = vsub.s32 %v797, %v2366
  %v2368 = vrot.slane %v2337, %v2367
  %v2369 = vlaneseq
  %v2370 = vshrl.u32 %v2369, 7
  %v2371 = vsub.s32 %v797, %v2370
  %v2372 = vrot.slane %v2340, %v2371
  %v2373 = vsel %vm830, %v2348, %v2344
  %v2374 = vsel %vm832, %v2352, %v2373
  %v2375 = vsel %vm834, %v2356, %v2374
  %v2376 = vsel %vm836, %v2360, %v2375
  %v2377 = vsel %vm838, %v2364, %v2376
  %v2378 = vsel %vm840, %v2368, %v2377
  %v2379 = vsel %vm842, %v2372, %v2378
  %v2381 = vsel %vm845, %v2379, 0.0
  %2382 = vadd.xlane.f32.xlu0 %v2381
  %v2383 = vpop.xlane.xlu0 %2382
  %v2384 = vrcp.pop %v2383
  %v2386 = vlaneseq
  %v2387 = vshrl.u32 %v2386, 7
  %v2388 = vsub.s32 0, %v2387
  %v2389 = vrot.slane %v2384, %v2388
  %v2390 = vlaneseq
  %v2391 = vshrl.u32 %v2390, 7
  %v2392 = vsub.s32 1, %v2391
  %v2393 = vrot.slane %v2384, %v2392
  %v2394 = vlaneseq
  %v2395 = vshrl.u32 %v2394, 7
  %v2396 = vsub.s32 2, %v2395
  %v2397 = vrot.slane %v2384, %v2396
  %v2398 = vlaneseq
  %v2399 = vshrl.u32 %v2398, 7
  %v2400 = vsub.s32 3, %v2399
  %v2401 = vrot.slane %v2384, %v2400
  %v2402 = vlaneseq
  %v2403 = vshrl.u32 %v2402, 7
  %v2404 = vsub.s32 4, %v2403
  %v2405 = vrot.slane %v2384, %v2404
  %v2406 = vlaneseq
  %v2407 = vshrl.u32 %v2406, 7
  %v2408 = vsub.s32 5, %v2407
  %v2409 = vrot.slane %v2384, %v2408
  %v2410 = vlaneseq
  %v2411 = vshrl.u32 %v2410, 7
  %v2412 = vsub.s32 6, %v2411
  %v2413 = vrot.slane %v2384, %v2412
  %v2414 = vlaneseq
  %v2415 = vshrl.u32 %v2414, 7
  %v2416 = vsub.s32 7, %v2415
  %v2417 = vrot.slane %v2384, %v2416
  %v2426 = vmul.f32 %v2294, %v2389
  %v2427 = vmul.f32 %v2296, %v2393
  %v2428 = vmul.f32 %v2298, %v2397
  %v2429 = vmul.f32 %v2300, %v2401
  %v2430 = vmul.f32 %v2302, %v2405
  %v2431 = vmul.f32 %v2304, %v2409
  %v2432 = vmul.f32 %v2306, %v2413
  %v2433 = vmul.f32 %v2308, %v2417
  %2435 = vset.pattern.permute.xlu0 0
  %2436 = vperm.xlu0 %2435, %v2426
  %v2437 = vpop.permute.xlu0 %2436
  %2440 = vset.pattern.permute.xlu0 0
  %2441 = vperm.xlu0 %2440, %v2427
  %v2442 = vpop.permute.xlu0 %2441
  %2445 = vset.pattern.permute.xlu0 0
  %2446 = vperm.xlu0 %2445, %v2428
  %v2447 = vpop.permute.xlu0 %2446
  %2450 = vset.pattern.permute.xlu0 0
  %2451 = vperm.xlu0 %2450, %v2429
  %v2452 = vpop.permute.xlu0 %2451
  %2455 = vset.pattern.permute.xlu0 0
  %2456 = vperm.xlu0 %2455, %v2430
  %v2457 = vpop.permute.xlu0 %2456
  %2460 = vset.pattern.permute.xlu0 0
  %2461 = vperm.xlu0 %2460, %v2431
  %v2462 = vpop.permute.xlu0 %2461
  %2465 = vset.pattern.permute.xlu0 0
  %2466 = vperm.xlu0 %2465, %v2432
  %v2467 = vpop.permute.xlu0 %2466
  %2470 = vset.pattern.permute.xlu0 0
  %2471 = vperm.xlu0 %2470, %v2433
  %v2472 = vpop.permute.xlu0 %2471
  %v2474 = vmul.f32 %v2437, %v62
  %v2475 = vmul.f32 %v2442, %v63
  %v2476 = vmul.f32 %v2447, %v64
  %v2477 = vmul.f32 %v2452, %v65
  %v2478 = vmul.f32 %v2457, %v66
  %v2479 = vmul.f32 %v2462, %v67
  %v2480 = vmul.f32 %v2467, %v68
  %v2481 = vmul.f32 %v2472, %v69
  %v2482 = vsel %vm77, %v2474, 0.0
  %v2483 = vrot.slane %v2482, 4
  %v2484 = vadd.f32 %v2482, %v2483
  %v2485 = vrot.slane %v2484, 2
  %v2486 = vadd.f32 %v2484, %v2485
  %v2487 = vrot.slane %v2486, 1
  %v2488 = vadd.f32 %v2486, %v2487
  %v2489 = vsel %vm77, %v2475, 0.0
  %v2490 = vrot.slane %v2489, 4
  %v2491 = vadd.f32 %v2489, %v2490
  %v2492 = vrot.slane %v2491, 2
  %v2493 = vadd.f32 %v2491, %v2492
  %v2494 = vrot.slane %v2493, 1
  %v2495 = vadd.f32 %v2493, %v2494
  %v2496 = vsel %vm77, %v2476, 0.0
  %v2497 = vrot.slane %v2496, 4
  %v2498 = vadd.f32 %v2496, %v2497
  %v2499 = vrot.slane %v2498, 2
  %v2500 = vadd.f32 %v2498, %v2499
  %v2501 = vrot.slane %v2500, 1
  %v2502 = vadd.f32 %v2500, %v2501
  %v2503 = vsel %vm77, %v2477, 0.0
  %v2504 = vrot.slane %v2503, 4
  %v2505 = vadd.f32 %v2503, %v2504
  %v2506 = vrot.slane %v2505, 2
  %v2507 = vadd.f32 %v2505, %v2506
  %v2508 = vrot.slane %v2507, 1
  %v2509 = vadd.f32 %v2507, %v2508
  %v2510 = vsel %vm77, %v2478, 0.0
  %v2511 = vrot.slane %v2510, 4
  %v2512 = vadd.f32 %v2510, %v2511
  %v2513 = vrot.slane %v2512, 2
  %v2514 = vadd.f32 %v2512, %v2513
  %v2515 = vrot.slane %v2514, 1
  %v2516 = vadd.f32 %v2514, %v2515
  %v2517 = vsel %vm77, %v2479, 0.0
  %v2518 = vrot.slane %v2517, 4
  %v2519 = vadd.f32 %v2517, %v2518
  %v2520 = vrot.slane %v2519, 2
  %v2521 = vadd.f32 %v2519, %v2520
  %v2522 = vrot.slane %v2521, 1
  %v2523 = vadd.f32 %v2521, %v2522
  %v2524 = vsel %vm77, %v2480, 0.0
  %v2525 = vrot.slane %v2524, 4
  %v2526 = vadd.f32 %v2524, %v2525
  %v2527 = vrot.slane %v2526, 2
  %v2528 = vadd.f32 %v2526, %v2527
  %v2529 = vrot.slane %v2528, 1
  %v2530 = vadd.f32 %v2528, %v2529
  %v2531 = vsel %vm77, %v2481, 0.0
  %v2532 = vrot.slane %v2531, 4
  %v2533 = vadd.f32 %v2531, %v2532
  %v2534 = vrot.slane %v2533, 2
  %v2535 = vadd.f32 %v2533, %v2534
  %v2536 = vrot.slane %v2535, 1
  %v2537 = vadd.f32 %v2535, %v2536
  %v2546 = vsel %vm830, %v2495, %v2488
  %v2547 = vsel %vm832, %v2502, %v2546
  %v2548 = vsel %vm834, %v2509, %v2547
  %v2549 = vsel %vm836, %v2516, %v2548
  %v2550 = vsel %vm838, %v2523, %v2549
  %v2551 = vsel %vm840, %v2530, %v2550
  %v2552 = vsel %vm842, %v2537, %v2551
  %v2553 = vsel %vm77, %v2552, 0
  %2555 = vmatprep.subr.mxu0 %v39
  %2556 = vmatpush1.msra.mxu0 %v38
  %2557 = vmatprep.subr.mxu0 %v41
  %2558 = vmatpush1.msra.mxu0 %v40
  %2559 = vmatprep.subr.mxu0 %v43
  %2560 = vmatpush1.msra.mxu0 %v42
  %2561 = vmatprep.subr.mxu0 %v45
  %2562 = vmatpush1.msra.mxu0 %v44
  %2563 = vmatprep.subr.mxu0 0.0
  %2564 = vmatpush1.msra.mxu0 0.0
  %2565 = vmatprep.subr.mxu0 0.0
  %2566 = vmatpush1.msra.mxu0 0.0
  %2567 = vmatprep.subr.mxu0 0.0
  %2568 = vmatpush1.msra.mxu0 0.0
  %2569 = vmatprep.subr.mxu0 0.0
  %2570 = vmatpush1.msra.mxu0 0.0
  %2571 = vmatprep.subr.mxu0 0.0
  %2572 = vmatpush1.msra.mxu0 0.0
  %2573 = vmatprep.subr.mxu0 0.0
  %2574 = vmatpush1.msra.mxu0 0.0
  %2575 = vmatprep.subr.mxu0 0.0
  %2576 = vmatpush1.msra.mxu0 0.0
  %2577 = vmatprep.subr.mxu0 0.0
  %2578 = vmatpush1.msra.mxu0 0.0
  %2579 = vmatprep.subr.mxu0 0.0
  %2580 = vmatpush1.msra.mxu0 0.0
  %2581 = vmatprep.subr.mxu0 0.0
  %2582 = vmatpush1.msra.mxu0 0.0
  %2583 = vmatprep.subr.mxu0 0.0
  %2584 = vmatpush1.msra.mxu0 0.0
  %2585 = vmatprep.subr.mxu0 0.0
  %2586 = vmatpush1.msra.mxu0 0.0
  %2587 = vmatprep.subr.mxu0 0.0
  %2588 = vmatpush1.msra.mxu0 0.0
  %2589 = vmatprep.subr.mxu0 0.0
  %2590 = vmatpush1.msra.mxu0 0.0
  %2591 = vmatprep.subr.mxu0 0.0
  %2592 = vmatpush1.msra.mxu0 0.0
  %2593 = vmatprep.subr.mxu0 0.0
  %2594 = vmatpush1.msra.mxu0 0.0
  %2595 = vmatprep.subr.mxu0 0.0
  %2596 = vmatpush1.msra.mxu0 0.0
  %2597 = vmatprep.subr.mxu0 0.0
  %2598 = vmatpush1.msra.mxu0 0.0
  %2599 = vmatprep.subr.mxu0 0.0
  %2600 = vmatpush1.msra.mxu0 0.0
  %2601 = vmatprep.subr.mxu0 0.0
  %2602 = vmatpush1.msra.mxu0 0.0
  %2603 = vmatprep.subr.mxu0 0.0
  %2604 = vmatpush1.msra.mxu0 0.0
  %2605 = vmatprep.subr.mxu0 0.0
  %2606 = vmatpush1.msra.mxu0 0.0
  %2607 = vmatprep.subr.mxu0 0.0
  %2608 = vmatpush1.msra.mxu0 0.0
  %2609 = vmatprep.subr.mxu0 0.0
  %2610 = vmatpush1.msra.mxu0 0.0
  %2611 = vmatprep.subr.mxu0 0.0
  %2612 = vmatpush1.msra.mxu0 0.0
  %2613 = vmatprep.subr.mxu0 0.0
  %2614 = vmatpush1.msra.mxu0 0.0
  %2615 = vmatprep.subr.mxu0 0.0
  %2616 = vmatpush1.msra.mxu0 0.0
  %2617 = vmatprep.subr.mxu0 0.0
  %2618 = vmatpush1.msra.mxu0 0.0
  %2619 = vmatprep.mubr.f32.mxu0 0.0
  %2620 = vmatmul.mubr.f32.gmra.mrb[0].mxu0 %v2553
  %v2621 = vpop.f32.mrb[0].mxu0
  %v2622 = vadd.f32 0.0, %v2621
  %v2623 = vpop.f32.mrb[0].mxu0
  %v2624 = vadd.f32 0.0, %v2623
  %2625 = vdwg.mxu0
  %v2626 = vadd.f32 %v1938, %v2143
  %v2627 = vadd.f32 %v2626, %v2624
  %2629 = vrot.lane.b32.xlu0 %v2627, 112
  %v2630 = vpop.permute.xlu0 %2629
  %v2632 = vmax.f32 %v2627, %v2630
  %v2633 = vxor.u32 %v2627, 2147483648
  %v2634 = vmul.f32 %v2633, 1.442695
  %v2635 = vpow.pop %v2634
  %v2636 = vadd.f32 %v2635, 1.0
  %v2637 = vrcp.pop %v2636
  %v2638 = vmul.f32 1.0, %v2637
  %2640 = vrot.lane.b32.xlu0 %v2632, 96
  %v2641 = vpop.permute.xlu0 %2640
  %v2643 = vlaneseq
  %v2644 = vshrl.u32 %v2643, 7
  %v2645 = vsub.s32 %v1108, %v2644
  %v2646 = vrot.slane %v2437, %v2645
  %v2647 = vlaneseq
  %v2648 = vshrl.u32 %v2647, 7
  %v2649 = vsub.s32 %v1108, %v2648
  %v2650 = vrot.slane %v2442, %v2649
  %v2651 = vlaneseq
  %v2652 = vshrl.u32 %v2651, 7
  %v2653 = vsub.s32 %v1108, %v2652
  %v2654 = vrot.slane %v2447, %v2653
  %v2655 = vlaneseq
  %v2656 = vshrl.u32 %v2655, 7
  %v2657 = vsub.s32 %v1108, %v2656
  %v2658 = vrot.slane %v2452, %v2657
  %v2659 = vlaneseq
  %v2660 = vshrl.u32 %v2659, 7
  %v2661 = vsub.s32 %v1108, %v2660
  %v2662 = vrot.slane %v2457, %v2661
  %v2663 = vlaneseq
  %v2664 = vshrl.u32 %v2663, 7
  %v2665 = vsub.s32 %v1108, %v2664
  %v2666 = vrot.slane %v2462, %v2665
  %v2667 = vlaneseq
  %v2668 = vshrl.u32 %v2667, 7
  %v2669 = vsub.s32 %v1108, %v2668
  %v2670 = vrot.slane %v2467, %v2669
  %v2671 = vlaneseq
  %v2672 = vshrl.u32 %v2671, 7
  %v2673 = vsub.s32 %v1108, %v2672
  %v2674 = vrot.slane %v2472, %v2673
  %v2675 = vsel %vm830, %v2650, %v2646
  %v2676 = vsel %vm832, %v2654, %v2675
  %v2677 = vsel %vm834, %v2658, %v2676
  %v2678 = vsel %vm836, %v2662, %v2677
  %v2679 = vsel %vm838, %v2666, %v2678
  %v2680 = vsel %vm840, %v2670, %v2679
  %v2681 = vsel %vm842, %v2674, %v2680
  %2684 = vrot.lane.b32.xlu0 %v2638, 88
  %v2685 = vpop.permute.xlu0 %2684
  %2687 = vrot.lane.b32.xlu0 %v2070, 32
  %v2688 = vpop.permute.xlu0 %2687
  %2690 = vrot.lane.b32.xlu0 %v2552, 96
  %v2691 = vpop.permute.xlu0 %2690
  %v2693 = vsel %vm1159, %v2641, %v2681
  %v2694 = vsel %vm1161, %v2693, %v2685
  %v2695 = vsel %vm1163, %v2694, 0.0
  %v2696 = vsel %vm77, %v2695, %v1966
  %v2697 = vsel %vm1166, %v2696, %v2688
  %v2698 = vsel %vm1168, %v2697, %v2691
  %s2699 = scalar_lea.vmem %s5, 16
  %2700 = vst [vmem:[%s2699] sm:$0xff] %v2698
  %s2701 = scalar_lea.vmem %s0, 48
  %v2702 = vld [vmem:[%s2701] sm:$0xff]
  %v2703 = vld [vmem:[%s2701 + $0x8] sm:$0xff]
  %v2704 = vadd.f32 %v2702, %v2622
  %v2705 = vadd.f32 %v2041, %v304
  %v2706 = vadd.f32 %v2704, %v2705
  %v2707 = vxor.u32 %v2706, 2147483648
  %v2708 = vmul.f32 %v2707, 1.442695
  %v2709 = vpow.pop %v2708
  %v2710 = vadd.f32 %v2709, 1.0
  %v2711 = vrcp.pop %v2710
  %v2712 = vmul.f32 1.0, %v2711
  %2714 = vrot.lane.b32.xlu0 %v2705, 64
  %v2715 = vpop.permute.xlu0 %2714
  %v2717 = vmul.f32 %v2712, %v2715
  %2719 = vrot.lane.b32.xlu0 %v2717, 64
  %v2720 = vpop.permute.xlu0 %2719
  %v2722 = vadd.f32 %v2704, %v2720
  %v2723 = vtanh.pop %v2722
  %v2724 = vsub.f32 1.0, %v2712
  %2726 = vrot.lane.b32.xlu0 %v2723, 96
  %v2727 = vpop.permute.xlu0 %2726
  %v2729 = vmul.f32 %v2724, %v2727
  %v2730 = vmul.f32 %v2712, %v1966
  %v2731 = vadd.f32 %v2729, %v2730
  %2733 = vrot.lane.b32.xlu0 %v2731, 96
  %v2734 = vpop.permute.xlu0 %2733
  %v2735 = vsel %vm77, %v2734, 0
  %2737 = vmatprep.subr.mxu0 %v21
  %2738 = vmatpush1.msra.mxu0 %v20
  %2739 = vmatprep.subr.mxu0 %v23
  %2740 = vmatpush1.msra.mxu0 %v22
  %2741 = vmatprep.subr.mxu0 %v25
  %2742 = vmatpush1.msra.mxu0 %v24
  %2743 = vmatprep.subr.mxu0 %v27
  %2744 = vmatpush1.msra.mxu0 %v26
  %2745 = vmatprep.subr.mxu0 0.0
  %2746 = vmatpush1.msra.mxu0 0.0
  %2747 = vmatprep.subr.mxu0 0.0
  %2748 = vmatpush1.msra.mxu0 0.0
  %2749 = vmatprep.subr.mxu0 0.0
  %2750 = vmatpush1.msra.mxu0 0.0
  %2751 = vmatprep.subr.mxu0 0.0
  %2752 = vmatpush1.msra.mxu0 0.0
  %2753 = vmatprep.subr.mxu0 0.0
  %2754 = vmatpush1.msra.mxu0 0.0
  %2755 = vmatprep.subr.mxu0 0.0
  %2756 = vmatpush1.msra.mxu0 0.0
  %2757 = vmatprep.subr.mxu0 0.0
  %2758 = vmatpush1.msra.mxu0 0.0
  %2759 = vmatprep.subr.mxu0 0.0
  %2760 = vmatpush1.msra.mxu0 0.0
  %2761 = vmatprep.subr.mxu0 0.0
  %2762 = vmatpush1.msra.mxu0 0.0
  %2763 = vmatprep.subr.mxu0 0.0
  %2764 = vmatpush1.msra.mxu0 0.0
  %2765 = vmatprep.subr.mxu0 0.0
  %2766 = vmatpush1.msra.mxu0 0.0
  %2767 = vmatprep.subr.mxu0 0.0
  %2768 = vmatpush1.msra.mxu0 0.0
  %2769 = vmatprep.subr.mxu0 0.0
  %2770 = vmatpush1.msra.mxu0 0.0
  %2771 = vmatprep.subr.mxu0 0.0
  %2772 = vmatpush1.msra.mxu0 0.0
  %2773 = vmatprep.subr.mxu0 0.0
  %2774 = vmatpush1.msra.mxu0 0.0
  %2775 = vmatprep.subr.mxu0 0.0
  %2776 = vmatpush1.msra.mxu0 0.0
  %2777 = vmatprep.subr.mxu0 0.0
  %2778 = vmatpush1.msra.mxu0 0.0
  %2779 = vmatprep.subr.mxu0 0.0
  %2780 = vmatpush1.msra.mxu0 0.0
  %2781 = vmatprep.subr.mxu0 0.0
  %2782 = vmatpush1.msra.mxu0 0.0
  %2783 = vmatprep.subr.mxu0 0.0
  %2784 = vmatpush1.msra.mxu0 0.0
  %2785 = vmatprep.subr.mxu0 0.0
  %2786 = vmatpush1.msra.mxu0 0.0
  %2787 = vmatprep.subr.mxu0 0.0
  %2788 = vmatpush1.msra.mxu0 0.0
  %2789 = vmatprep.subr.mxu0 0.0
  %2790 = vmatpush1.msra.mxu0 0.0
  %2791 = vmatprep.subr.mxu0 0.0
  %2792 = vmatpush1.msra.mxu0 0.0
  %2793 = vmatprep.subr.mxu0 0.0
  %2794 = vmatpush1.msra.mxu0 0.0
  %2795 = vmatprep.subr.mxu0 0.0
  %2796 = vmatpush1.msra.mxu0 0.0
  %2797 = vmatprep.subr.mxu0 0.0
  %2798 = vmatpush1.msra.mxu0 0.0
  %2799 = vmatprep.subr.mxu0 0.0
  %2800 = vmatpush1.msra.mxu0 0.0
  %2801 = vmatprep.mubr.f32.mxu0 0.0
  %2802 = vmatmul.mubr.f32.gmra.mrb[0].mxu0 %v2735
  %v2803 = vpop.f32.mrb[0].mxu0
  %v2804 = vadd.f32 0.0, %v2803
  %v2805 = vpop.f32.mrb[0].mxu0
  %v2806 = vadd.f32 0.0, %v2805
  %2807 = vdwg.mxu0
  %v2808 = vadd.f32 %v2804, %v416
  %v2809 = vadd.f32 %v2145, %v423
  %v2810 = vadd.f32 %v2808, %v2809
  %v2811 = vxor.u32 %v2810, 2147483648
  %v2812 = vmul.f32 %v2811, 1.442695
  %v2813 = vpow.pop %v2812
  %v2814 = vadd.f32 %v2813, 1.0
  %v2815 = vrcp.pop %v2814
  %v2816 = vmul.f32 1.0, %v2815
  %2818 = vrot.lane.b32.xlu0 %v2809, 64
  %v2819 = vpop.permute.xlu0 %2818
  %v2821 = vmul.f32 %v2816, %v2819
  %2823 = vrot.lane.b32.xlu0 %v2821, 64
  %v2824 = vpop.permute.xlu0 %2823
  %v2826 = vadd.f32 %v2808, %v2824
  %v2827 = vtanh.pop %v2826
  %v2828 = vsub.f32 1.0, %v2816
  %2830 = vrot.lane.b32.xlu0 %v2827, 96
  %v2831 = vpop.permute.xlu0 %2830
  %v2833 = vmul.f32 %v2828, %v2831
  %v2834 = vmul.f32 %v2816, %v2070
  %v2835 = vadd.f32 %v2833, %v2834
  %2837 = vrot.lane.b32.xlu0 %v2835, 96
  %v2838 = vpop.permute.xlu0 %2837
  %v2839 = vsel %vm77, %v2838, 0
  %2841 = vmatprep.subr.mxu0 %v30
  %2842 = vmatpush1.msra.mxu0 %v29
  %2843 = vmatprep.subr.mxu0 %v32
  %2844 = vmatpush1.msra.mxu0 %v31
  %2845 = vmatprep.subr.mxu0 %v34
  %2846 = vmatpush1.msra.mxu0 %v33
  %2847 = vmatprep.subr.mxu0 %v36
  %2848 = vmatpush1.msra.mxu0 %v35
  %2849 = vmatprep.subr.mxu0 0.0
  %2850 = vmatpush1.msra.mxu0 0.0
  %2851 = vmatprep.subr.mxu0 0.0
  %2852 = vmatpush1.msra.mxu0 0.0
  %2853 = vmatprep.subr.mxu0 0.0
  %2854 = vmatpush1.msra.mxu0 0.0
  %2855 = vmatprep.subr.mxu0 0.0
  %2856 = vmatpush1.msra.mxu0 0.0
  %2857 = vmatprep.subr.mxu0 0.0
  %2858 = vmatpush1.msra.mxu0 0.0
  %2859 = vmatprep.subr.mxu0 0.0
  %2860 = vmatpush1.msra.mxu0 0.0
  %2861 = vmatprep.subr.mxu0 0.0
  %2862 = vmatpush1.msra.mxu0 0.0
  %2863 = vmatprep.subr.mxu0 0.0
  %2864 = vmatpush1.msra.mxu0 0.0
  %2865 = vmatprep.subr.mxu0 0.0
  %2866 = vmatpush1.msra.mxu0 0.0
  %2867 = vmatprep.subr.mxu0 0.0
  %2868 = vmatpush1.msra.mxu0 0.0
  %2869 = vmatprep.subr.mxu0 0.0
  %2870 = vmatpush1.msra.mxu0 0.0
  %2871 = vmatprep.subr.mxu0 0.0
  %2872 = vmatpush1.msra.mxu0 0.0
  %2873 = vmatprep.subr.mxu0 0.0
  %2874 = vmatpush1.msra.mxu0 0.0
  %2875 = vmatprep.subr.mxu0 0.0
  %2876 = vmatpush1.msra.mxu0 0.0
  %2877 = vmatprep.subr.mxu0 0.0
  %2878 = vmatpush1.msra.mxu0 0.0
  %2879 = vmatprep.subr.mxu0 0.0
  %2880 = vmatpush1.msra.mxu0 0.0
  %2881 = vmatprep.subr.mxu0 0.0
  %2882 = vmatpush1.msra.mxu0 0.0
  %2883 = vmatprep.subr.mxu0 0.0
  %2884 = vmatpush1.msra.mxu0 0.0
  %2885 = vmatprep.subr.mxu0 0.0
  %2886 = vmatpush1.msra.mxu0 0.0
  %2887 = vmatprep.subr.mxu0 0.0
  %2888 = vmatpush1.msra.mxu0 0.0
  %2889 = vmatprep.subr.mxu0 0.0
  %2890 = vmatpush1.msra.mxu0 0.0
  %2891 = vmatprep.subr.mxu0 0.0
  %2892 = vmatpush1.msra.mxu0 0.0
  %2893 = vmatprep.subr.mxu0 0.0
  %2894 = vmatpush1.msra.mxu0 0.0
  %2895 = vmatprep.subr.mxu0 0.0
  %2896 = vmatpush1.msra.mxu0 0.0
  %2897 = vmatprep.subr.mxu0 0.0
  %2898 = vmatpush1.msra.mxu0 0.0
  %2899 = vmatprep.subr.mxu0 0.0
  %2900 = vmatpush1.msra.mxu0 0.0
  %2901 = vmatprep.subr.mxu0 0.0
  %2902 = vmatpush1.msra.mxu0 0.0
  %2903 = vmatprep.subr.mxu0 0.0
  %2904 = vmatpush1.msra.mxu0 0.0
  %2905 = vmatprep.mubr.f32.mxu0 0.0
  %2906 = vmatmul.mubr.f32.gmra.mrb[0].mxu0 %v2839
  %v2907 = vpop.f32.mrb[0].mxu0
  %v2908 = vadd.f32 0.0, %v2907
  %v2909 = vpop.f32.mrb[0].mxu0
  %v2910 = vadd.f32 0.0, %v2909
  %2911 = vdwg.mxu0
  %v2913 = vcombine.high %v2908, %v2908
  %v2915 = vunpack.c.l.s4 1966171168
  %v2916 = vunpack.c.0.s8 %v2915
  %v2917 = vlaneseq
  %v2918 = vshrl.u32 %v2917, 7
  %v2919 = vsub.s32 %v2916, %v2918
  %v2920 = vrot.slane %v2908, %v2919
  %v2922 = vunpack.c.l.s4 1966171168
  %v2923 = vunpack.c.0.s8 %v2922
  %v2924 = vlaneseq
  %v2925 = vshrl.u32 %v2924, 7
  %v2926 = vsub.s32 %v2923, %v2925
  %v2927 = vrot.slane %v2913, %v2926
  %v2928 = vcombine.high %v2920, %v2920
  %v2929 = vcombine.high %v2927, %v2927
  %v2931 = vunpack.c.l.s4 1966171168
  %v2932 = vunpack.c.0.s8 %v2931
  %v2933 = vlaneseq
  %v2934 = vshrl.u32 %v2933, 7
  %v2935 = vsub.s32 %v2932, %v2934
  %v2936 = vrot.slane %v2920, %v2935
  %v2938 = vunpack.c.l.s4 1966171168
  %v2939 = vunpack.c.0.s8 %v2938
  %v2940 = vlaneseq
  %v2941 = vshrl.u32 %v2940, 7
  %v2942 = vsub.s32 %v2939, %v2941
  %v2943 = vrot.slane %v2927, %v2942
  %v2945 = vunpack.c.l.s4 1966171168
  %v2946 = vunpack.c.0.s8 %v2945
  %v2947 = vlaneseq
  %v2948 = vshrl.u32 %v2947, 7
  %v2949 = vsub.s32 %v2946, %v2948
  %v2950 = vrot.slane %v2928, %v2949
  %v2952 = vunpack.c.l.s4 1966171168
  %v2953 = vunpack.c.0.s8 %v2952
  %v2954 = vlaneseq
  %v2955 = vshrl.u32 %v2954, 7
  %v2956 = vsub.s32 %v2953, %v2955
  %v2957 = vrot.slane %v2929, %v2956
  %v2958 = vcombine.high %v2936, %v2936
  %v2959 = vcombine.high %v2943, %v2943
  %v2960 = vcombine.high %v2950, %v2950
  %v2961 = vcombine.high %v2957, %v2957
  %v2962 = vlaneseq
  %v2963 = vshrl.u32 %v2962, 7
  %v2964 = vsub.s32 0, %v2963
  %v2965 = vrot.slane %v2936, %v2964
  %v2966 = vlaneseq
  %v2967 = vshrl.u32 %v2966, 7
  %v2968 = vsub.s32 0, %v2967
  %v2969 = vrot.slane %v2950, %v2968
  %v2970 = vlaneseq
  %v2971 = vshrl.u32 %v2970, 7
  %v2972 = vsub.s32 0, %v2971
  %v2973 = vrot.slane %v2958, %v2972
  %v2974 = vlaneseq
  %v2975 = vshrl.u32 %v2974, 7
  %v2976 = vsub.s32 0, %v2975
  %v2977 = vrot.slane %v2960, %v2976
  %v2978 = vlaneseq
  %v2979 = vshrl.u32 %v2978, 7
  %v2980 = vsub.s32 0, %v2979
  %v2981 = vrot.slane %v2943, %v2980
  %v2982 = vlaneseq
  %v2983 = vshrl.u32 %v2982, 7
  %v2984 = vsub.s32 0, %v2983
  %v2985 = vrot.slane %v2957, %v2984
  %v2986 = vlaneseq
  %v2987 = vshrl.u32 %v2986, 7
  %v2988 = vsub.s32 0, %v2987
  %v2989 = vrot.slane %v2959, %v2988
  %v2990 = vlaneseq
  %v2991 = vshrl.u32 %v2990, 7
  %v2992 = vsub.s32 0, %v2991
  %v2993 = vrot.slane %v2961, %v2992
  %v3002 = vadd.f32 %v53, %v2965
  %v3003 = vadd.f32 %v54, %v2969
  %v3004 = vadd.f32 %v55, %v2973
  %v3005 = vadd.f32 %v56, %v2977
  %v3006 = vadd.f32 %v57, %v2981
  %v3007 = vadd.f32 %v58, %v2985
  %v3008 = vadd.f32 %v59, %v2989
  %v3009 = vadd.f32 %v60, %v2993
  %v3010 = vtanh.pop %v3002
  %v3011 = vtanh.pop %v3003
  %v3012 = vtanh.pop %v3004
  %v3013 = vtanh.pop %v3005
  %v3014 = vtanh.pop %v3006
  %v3015 = vtanh.pop %v3007
  %v3016 = vtanh.pop %v3008
  %v3017 = vtanh.pop %v3009
  %v3018 = vmul.f32 %v3010, %v641
  %v3019 = vmul.f32 %v3011, %v641
  %v3020 = vmul.f32 %v3012, %v641
  %v3021 = vmul.f32 %v3013, %v641
  %v3022 = vmul.f32 %v3014, %v641
  %v3023 = vmul.f32 %v3015, %v641
  %v3024 = vmul.f32 %v3016, %v641
  %v3025 = vmul.f32 %v3017, %v641
  %v3026 = vsel %vm77, %v3018, 0.0
  %3027 = vadd.xlane.f32.xlu0 %v3026
  %v3028 = vpop.xlane.xlu0 %3027
  %v3029 = vsel %vm77, %v3019, 0.0
  %3030 = vadd.xlane.f32.xlu0 %v3029
  %v3031 = vpop.xlane.xlu0 %3030
  %v3032 = vsel %vm77, %v3020, 0.0
  %3033 = vadd.xlane.f32.xlu0 %v3032
  %v3034 = vpop.xlane.xlu0 %3033
  %v3035 = vsel %vm77, %v3021, 0.0
  %3036 = vadd.xlane.f32.xlu0 %v3035
  %v3037 = vpop.xlane.xlu0 %3036
  %v3038 = vsel %vm77, %v3022, 0.0
  %3039 = vadd.xlane.f32.xlu0 %v3038
  %v3040 = vpop.xlane.xlu0 %3039
  %v3041 = vsel %vm77, %v3023, 0.0
  %3042 = vadd.xlane.f32.xlu0 %v3041
  %v3043 = vpop.xlane.xlu0 %3042
  %v3044 = vsel %vm77, %v3024, 0.0
  %3045 = vadd.xlane.f32.xlu0 %v3044
  %v3046 = vpop.xlane.xlu0 %3045
  %v3047 = vsel %vm77, %v3025, 0.0
  %3048 = vadd.xlane.f32.xlu0 %v3047
  %v3049 = vpop.xlane.xlu0 %3048
  %v3050 = vadd.f32 %v3028, %v682
  %v3051 = vadd.f32 %v3031, %v689
  %v3052 = vadd.f32 %v3034, %v696
  %v3053 = vadd.f32 %v3037, %v703
  %v3054 = vadd.f32 %v3040, %v710
  %v3055 = vadd.f32 %v3043, %v717
  %v3056 = vadd.f32 %v3046, %v724
  %v3057 = vadd.f32 %v3049, %v731
  %v3058 = vmul.f32 %v3050, 1.442695
  %v3059 = vpow.pop %v3058
  %v3060 = vmul.f32 %v3051, 1.442695
  %v3061 = vpow.pop %v3060
  %v3062 = vmul.f32 %v3052, 1.442695
  %v3063 = vpow.pop %v3062
  %v3064 = vmul.f32 %v3053, 1.442695
  %v3065 = vpow.pop %v3064
  %v3066 = vmul.f32 %v3054, 1.442695
  %v3067 = vpow.pop %v3066
  %v3068 = vmul.f32 %v3055, 1.442695
  %v3069 = vpow.pop %v3068
  %v3070 = vmul.f32 %v3056, 1.442695
  %v3071 = vpow.pop %v3070
  %v3072 = vmul.f32 %v3057, 1.442695
  %v3073 = vpow.pop %v3072
  %3082 = vset.pattern.permute.xlu0 0
  %3083 = vperm.xlu0 %3082, %v3059
  %v3084 = vpop.permute.xlu0 %3083
  %3085 = vset.pattern.permute.xlu0 0
  %3086 = vperm.xlu0 %3085, %v3061
  %v3087 = vpop.permute.xlu0 %3086
  %3088 = vset.pattern.permute.xlu0 0
  %3089 = vperm.xlu0 %3088, %v3063
  %v3090 = vpop.permute.xlu0 %3089
  %3091 = vset.pattern.permute.xlu0 0
  %3092 = vperm.xlu0 %3091, %v3065
  %v3093 = vpop.permute.xlu0 %3092
  %3094 = vset.pattern.permute.xlu0 0
  %3095 = vperm.xlu0 %3094, %v3067
  %v3096 = vpop.permute.xlu0 %3095
  %3097 = vset.pattern.permute.xlu0 0
  %3098 = vperm.xlu0 %3097, %v3069
  %v3099 = vpop.permute.xlu0 %3098
  %3100 = vset.pattern.permute.xlu0 0
  %3101 = vperm.xlu0 %3100, %v3071
  %v3102 = vpop.permute.xlu0 %3101
  %3103 = vset.pattern.permute.xlu0 0
  %3104 = vperm.xlu0 %3103, %v3073
  %v3105 = vpop.permute.xlu0 %3104
  %v3106 = vlaneseq
  %v3107 = vshrl.u32 %v3106, 7
  %v3108 = vsub.s32 %v797, %v3107
  %v3109 = vrot.slane %v3084, %v3108
  %v3110 = vlaneseq
  %v3111 = vshrl.u32 %v3110, 7
  %v3112 = vsub.s32 %v797, %v3111
  %v3113 = vrot.slane %v3087, %v3112
  %v3114 = vlaneseq
  %v3115 = vshrl.u32 %v3114, 7
  %v3116 = vsub.s32 %v797, %v3115
  %v3117 = vrot.slane %v3090, %v3116
  %v3118 = vlaneseq
  %v3119 = vshrl.u32 %v3118, 7
  %v3120 = vsub.s32 %v797, %v3119
  %v3121 = vrot.slane %v3093, %v3120
  %v3122 = vlaneseq
  %v3123 = vshrl.u32 %v3122, 7
  %v3124 = vsub.s32 %v797, %v3123
  %v3125 = vrot.slane %v3096, %v3124
  %v3126 = vlaneseq
  %v3127 = vshrl.u32 %v3126, 7
  %v3128 = vsub.s32 %v797, %v3127
  %v3129 = vrot.slane %v3099, %v3128
  %v3130 = vlaneseq
  %v3131 = vshrl.u32 %v3130, 7
  %v3132 = vsub.s32 %v797, %v3131
  %v3133 = vrot.slane %v3102, %v3132
  %v3134 = vlaneseq
  %v3135 = vshrl.u32 %v3134, 7
  %v3136 = vsub.s32 %v797, %v3135
  %v3137 = vrot.slane %v3105, %v3136
  %v3138 = vsel %vm830, %v3113, %v3109
  %v3139 = vsel %vm832, %v3117, %v3138
  %v3140 = vsel %vm834, %v3121, %v3139
  %v3141 = vsel %vm836, %v3125, %v3140
  %v3142 = vsel %vm838, %v3129, %v3141
  %v3143 = vsel %vm840, %v3133, %v3142
  %v3144 = vsel %vm842, %v3137, %v3143
  %v3146 = vsel %vm845, %v3144, 0.0
  %3147 = vadd.xlane.f32.xlu0 %v3146
  %v3148 = vpop.xlane.xlu0 %3147
  %v3149 = vrcp.pop %v3148
  %v3151 = vlaneseq
  %v3152 = vshrl.u32 %v3151, 7
  %v3153 = vsub.s32 0, %v3152
  %v3154 = vrot.slane %v3149, %v3153
  %v3155 = vlaneseq
  %v3156 = vshrl.u32 %v3155, 7
  %v3157 = vsub.s32 1, %v3156
  %v3158 = vrot.slane %v3149, %v3157
  %v3159 = vlaneseq
  %v3160 = vshrl.u32 %v3159, 7
  %v3161 = vsub.s32 2, %v3160
  %v3162 = vrot.slane %v3149, %v3161
  %v3163 = vlaneseq
  %v3164 = vshrl.u32 %v3163, 7
  %v3165 = vsub.s32 3, %v3164
  %v3166 = vrot.slane %v3149, %v3165
  %v3167 = vlaneseq
  %v3168 = vshrl.u32 %v3167, 7
  %v3169 = vsub.s32 4, %v3168
  %v3170 = vrot.slane %v3149, %v3169
  %v3171 = vlaneseq
  %v3172 = vshrl.u32 %v3171, 7
  %v3173 = vsub.s32 5, %v3172
  %v3174 = vrot.slane %v3149, %v3173
  %v3175 = vlaneseq
  %v3176 = vshrl.u32 %v3175, 7
  %v3177 = vsub.s32 6, %v3176
  %v3178 = vrot.slane %v3149, %v3177
  %v3179 = vlaneseq
  %v3180 = vshrl.u32 %v3179, 7
  %v3181 = vsub.s32 7, %v3180
  %v3182 = vrot.slane %v3149, %v3181
  %v3191 = vmul.f32 %v3059, %v3154
  %v3192 = vmul.f32 %v3061, %v3158
  %v3193 = vmul.f32 %v3063, %v3162
  %v3194 = vmul.f32 %v3065, %v3166
  %v3195 = vmul.f32 %v3067, %v3170
  %v3196 = vmul.f32 %v3069, %v3174
  %v3197 = vmul.f32 %v3071, %v3178
  %v3198 = vmul.f32 %v3073, %v3182
  %3200 = vset.pattern.permute.xlu0 0
  %3201 = vperm.xlu0 %3200, %v3191
  %v3202 = vpop.permute.xlu0 %3201
  %3205 = vset.pattern.permute.xlu0 0
  %3206 = vperm.xlu0 %3205, %v3192
  %v3207 = vpop.permute.xlu0 %3206
  %3210 = vset.pattern.permute.xlu0 0
  %3211 = vperm.xlu0 %3210, %v3193
  %v3212 = vpop.permute.xlu0 %3211
  %3215 = vset.pattern.permute.xlu0 0
  %3216 = vperm.xlu0 %3215, %v3194
  %v3217 = vpop.permute.xlu0 %3216
  %3220 = vset.pattern.permute.xlu0 0
  %3221 = vperm.xlu0 %3220, %v3195
  %v3222 = vpop.permute.xlu0 %3221
  %3225 = vset.pattern.permute.xlu0 0
  %3226 = vperm.xlu0 %3225, %v3196
  %v3227 = vpop.permute.xlu0 %3226
  %3230 = vset.pattern.permute.xlu0 0
  %3231 = vperm.xlu0 %3230, %v3197
  %v3232 = vpop.permute.xlu0 %3231
  %3235 = vset.pattern.permute.xlu0 0
  %3236 = vperm.xlu0 %3235, %v3198
  %v3237 = vpop.permute.xlu0 %3236
  %v3239 = vmul.f32 %v3202, %v62
  %v3240 = vmul.f32 %v3207, %v63
  %v3241 = vmul.f32 %v3212, %v64
  %v3242 = vmul.f32 %v3217, %v65
  %v3243 = vmul.f32 %v3222, %v66
  %v3244 = vmul.f32 %v3227, %v67
  %v3245 = vmul.f32 %v3232, %v68
  %v3246 = vmul.f32 %v3237, %v69
  %v3247 = vsel %vm77, %v3239, 0.0
  %v3248 = vrot.slane %v3247, 4
  %v3249 = vadd.f32 %v3247, %v3248
  %v3250 = vrot.slane %v3249, 2
  %v3251 = vadd.f32 %v3249, %v3250
  %v3252 = vrot.slane %v3251, 1
  %v3253 = vadd.f32 %v3251, %v3252
  %v3254 = vsel %vm77, %v3240, 0.0
  %v3255 = vrot.slane %v3254, 4
  %v3256 = vadd.f32 %v3254, %v3255
  %v3257 = vrot.slane %v3256, 2
  %v3258 = vadd.f32 %v3256, %v3257
  %v3259 = vrot.slane %v3258, 1
  %v3260 = vadd.f32 %v3258, %v3259
  %v3261 = vsel %vm77, %v3241, 0.0
  %v3262 = vrot.slane %v3261, 4
  %v3263 = vadd.f32 %v3261, %v3262
  %v3264 = vrot.slane %v3263, 2
  %v3265 = vadd.f32 %v3263, %v3264
  %v3266 = vrot.slane %v3265, 1
  %v3267 = vadd.f32 %v3265, %v3266
  %v3268 = vsel %vm77, %v3242, 0.0
  %v3269 = vrot.slane %v3268, 4
  %v3270 = vadd.f32 %v3268, %v3269
  %v3271 = vrot.slane %v3270, 2
  %v3272 = vadd.f32 %v3270, %v3271
  %v3273 = vrot.slane %v3272, 1
  %v3274 = vadd.f32 %v3272, %v3273
  %v3275 = vsel %vm77, %v3243, 0.0
  %v3276 = vrot.slane %v3275, 4
  %v3277 = vadd.f32 %v3275, %v3276
  %v3278 = vrot.slane %v3277, 2
  %v3279 = vadd.f32 %v3277, %v3278
  %v3280 = vrot.slane %v3279, 1
  %v3281 = vadd.f32 %v3279, %v3280
  %v3282 = vsel %vm77, %v3244, 0.0
  %v3283 = vrot.slane %v3282, 4
  %v3284 = vadd.f32 %v3282, %v3283
  %v3285 = vrot.slane %v3284, 2
  %v3286 = vadd.f32 %v3284, %v3285
  %v3287 = vrot.slane %v3286, 1
  %v3288 = vadd.f32 %v3286, %v3287
  %v3289 = vsel %vm77, %v3245, 0.0
  %v3290 = vrot.slane %v3289, 4
  %v3291 = vadd.f32 %v3289, %v3290
  %v3292 = vrot.slane %v3291, 2
  %v3293 = vadd.f32 %v3291, %v3292
  %v3294 = vrot.slane %v3293, 1
  %v3295 = vadd.f32 %v3293, %v3294
  %v3296 = vsel %vm77, %v3246, 0.0
  %v3297 = vrot.slane %v3296, 4
  %v3298 = vadd.f32 %v3296, %v3297
  %v3299 = vrot.slane %v3298, 2
  %v3300 = vadd.f32 %v3298, %v3299
  %v3301 = vrot.slane %v3300, 1
  %v3302 = vadd.f32 %v3300, %v3301
  %v3311 = vsel %vm830, %v3260, %v3253
  %v3312 = vsel %vm832, %v3267, %v3311
  %v3313 = vsel %vm834, %v3274, %v3312
  %v3314 = vsel %vm836, %v3281, %v3313
  %v3315 = vsel %vm838, %v3288, %v3314
  %v3316 = vsel %vm840, %v3295, %v3315
  %v3317 = vsel %vm842, %v3302, %v3316
  %v3318 = vsel %vm77, %v3317, 0
  %3320 = vmatprep.subr.mxu0 %v39
  %3321 = vmatpush1.msra.mxu0 %v38
  %3322 = vmatprep.subr.mxu0 %v41
  %3323 = vmatpush1.msra.mxu0 %v40
  %3324 = vmatprep.subr.mxu0 %v43
  %3325 = vmatpush1.msra.mxu0 %v42
  %3326 = vmatprep.subr.mxu0 %v45
  %3327 = vmatpush1.msra.mxu0 %v44
  %3328 = vmatprep.subr.mxu0 0.0
  %3329 = vmatpush1.msra.mxu0 0.0
  %3330 = vmatprep.subr.mxu0 0.0
  %3331 = vmatpush1.msra.mxu0 0.0
  %3332 = vmatprep.subr.mxu0 0.0
  %3333 = vmatpush1.msra.mxu0 0.0
  %3334 = vmatprep.subr.mxu0 0.0
  %3335 = vmatpush1.msra.mxu0 0.0
  %3336 = vmatprep.subr.mxu0 0.0
  %3337 = vmatpush1.msra.mxu0 0.0
  %3338 = vmatprep.subr.mxu0 0.0
  %3339 = vmatpush1.msra.mxu0 0.0
  %3340 = vmatprep.subr.mxu0 0.0
  %3341 = vmatpush1.msra.mxu0 0.0
  %3342 = vmatprep.subr.mxu0 0.0
  %3343 = vmatpush1.msra.mxu0 0.0
  %3344 = vmatprep.subr.mxu0 0.0
  %3345 = vmatpush1.msra.mxu0 0.0
  %3346 = vmatprep.subr.mxu0 0.0
  %3347 = vmatpush1.msra.mxu0 0.0
  %3348 = vmatprep.subr.mxu0 0.0
  %3349 = vmatpush1.msra.mxu0 0.0
  %3350 = vmatprep.subr.mxu0 0.0
  %3351 = vmatpush1.msra.mxu0 0.0
  %3352 = vmatprep.subr.mxu0 0.0
  %3353 = vmatpush1.msra.mxu0 0.0
  %3354 = vmatprep.subr.mxu0 0.0
  %3355 = vmatpush1.msra.mxu0 0.0
  %3356 = vmatprep.subr.mxu0 0.0
  %3357 = vmatpush1.msra.mxu0 0.0
  %3358 = vmatprep.subr.mxu0 0.0
  %3359 = vmatpush1.msra.mxu0 0.0
  %3360 = vmatprep.subr.mxu0 0.0
  %3361 = vmatpush1.msra.mxu0 0.0
  %3362 = vmatprep.subr.mxu0 0.0
  %3363 = vmatpush1.msra.mxu0 0.0
  %3364 = vmatprep.subr.mxu0 0.0
  %3365 = vmatpush1.msra.mxu0 0.0
  %3366 = vmatprep.subr.mxu0 0.0
  %3367 = vmatpush1.msra.mxu0 0.0
  %3368 = vmatprep.subr.mxu0 0.0
  %3369 = vmatpush1.msra.mxu0 0.0
  %3370 = vmatprep.subr.mxu0 0.0
  %3371 = vmatpush1.msra.mxu0 0.0
  %3372 = vmatprep.subr.mxu0 0.0
  %3373 = vmatpush1.msra.mxu0 0.0
  %3374 = vmatprep.subr.mxu0 0.0
  %3375 = vmatpush1.msra.mxu0 0.0
  %3376 = vmatprep.subr.mxu0 0.0
  %3377 = vmatpush1.msra.mxu0 0.0
  %3378 = vmatprep.subr.mxu0 0.0
  %3379 = vmatpush1.msra.mxu0 0.0
  %3380 = vmatprep.subr.mxu0 0.0
  %3381 = vmatpush1.msra.mxu0 0.0
  %3382 = vmatprep.subr.mxu0 0.0
  %3383 = vmatpush1.msra.mxu0 0.0
  %3384 = vmatprep.mubr.f32.mxu0 0.0
  %3385 = vmatmul.mubr.f32.gmra.mrb[0].mxu0 %v3318
  %v3386 = vpop.f32.mrb[0].mxu0
  %v3387 = vadd.f32 0.0, %v3386
  %v3388 = vpop.f32.mrb[0].mxu0
  %v3389 = vadd.f32 0.0, %v3388
  %3390 = vdwg.mxu0
  %v3391 = vadd.f32 %v2703, %v2908
  %v3392 = vadd.f32 %v3391, %v3389
  %3394 = vrot.lane.b32.xlu0 %v3392, 112
  %v3395 = vpop.permute.xlu0 %3394
  %v3397 = vmax.f32 %v3392, %v3395
  %v3398 = vxor.u32 %v3392, 2147483648
  %v3399 = vmul.f32 %v3398, 1.442695
  %v3400 = vpow.pop %v3399
  %v3401 = vadd.f32 %v3400, 1.0
  %v3402 = vrcp.pop %v3401
  %v3403 = vmul.f32 1.0, %v3402
  %3405 = vrot.lane.b32.xlu0 %v3397, 96
  %v3406 = vpop.permute.xlu0 %3405
  %v3408 = vlaneseq
  %v3409 = vshrl.u32 %v3408, 7
  %v3410 = vsub.s32 %v1108, %v3409
  %v3411 = vrot.slane %v3202, %v3410
  %v3412 = vlaneseq
  %v3413 = vshrl.u32 %v3412, 7
  %v3414 = vsub.s32 %v1108, %v3413
  %v3415 = vrot.slane %v3207, %v3414
  %v3416 = vlaneseq
  %v3417 = vshrl.u32 %v3416, 7
  %v3418 = vsub.s32 %v1108, %v3417
  %v3419 = vrot.slane %v3212, %v3418
  %v3420 = vlaneseq
  %v3421 = vshrl.u32 %v3420, 7
  %v3422 = vsub.s32 %v1108, %v3421
  %v3423 = vrot.slane %v3217, %v3422
  %v3424 = vlaneseq
  %v3425 = vshrl.u32 %v3424, 7
  %v3426 = vsub.s32 %v1108, %v3425
  %v3427 = vrot.slane %v3222, %v3426
  %v3428 = vlaneseq
  %v3429 = vshrl.u32 %v3428, 7
  %v3430 = vsub.s32 %v1108, %v3429
  %v3431 = vrot.slane %v3227, %v3430
  %v3432 = vlaneseq
  %v3433 = vshrl.u32 %v3432, 7
  %v3434 = vsub.s32 %v1108, %v3433
  %v3435 = vrot.slane %v3232, %v3434
  %v3436 = vlaneseq
  %v3437 = vshrl.u32 %v3436, 7
  %v3438 = vsub.s32 %v1108, %v3437
  %v3439 = vrot.slane %v3237, %v3438
  %v3440 = vsel %vm830, %v3415, %v3411
  %v3441 = vsel %vm832, %v3419, %v3440
  %v3442 = vsel %vm834, %v3423, %v3441
  %v3443 = vsel %vm836, %v3427, %v3442
  %v3444 = vsel %vm838, %v3431, %v3443
  %v3445 = vsel %vm840, %v3435, %v3444
  %v3446 = vsel %vm842, %v3439, %v3445
  %3449 = vrot.lane.b32.xlu0 %v3403, 88
  %v3450 = vpop.permute.xlu0 %3449
  %3452 = vrot.lane.b32.xlu0 %v2835, 32
  %v3453 = vpop.permute.xlu0 %3452
  %3455 = vrot.lane.b32.xlu0 %v3317, 96
  %v3456 = vpop.permute.xlu0 %3455
  %v3458 = vsel %vm1159, %v3406, %v3446
  %v3459 = vsel %vm1161, %v3458, %v3450
  %v3460 = vsel %vm1163, %v3459, 0.0
  %v3461 = vsel %vm77, %v3460, %v2731
  %v3462 = vsel %vm1166, %v3461, %v3453
  %v3463 = vsel %vm1168, %v3462, %v3456
  %s3464 = scalar_lea.vmem %s5, 24
  %3465 = vst [vmem:[%s3464] sm:$0xff] %v3463
  %s3466 = scalar_lea.vmem %s0, 64
  %v3467 = vld [vmem:[%s3466] sm:$0xff]
  %v3468 = vld [vmem:[%s3466 + $0x8] sm:$0xff]
  %v3469 = vadd.f32 %v3467, %v3387
  %v3470 = vadd.f32 %v2806, %v304
  %v3471 = vadd.f32 %v3469, %v3470
  %v3472 = vxor.u32 %v3471, 2147483648
  %v3473 = vmul.f32 %v3472, 1.442695
  %v3474 = vpow.pop %v3473
  %v3475 = vadd.f32 %v3474, 1.0
  %v3476 = vrcp.pop %v3475
  %v3477 = vmul.f32 1.0, %v3476
  %3479 = vrot.lane.b32.xlu0 %v3470, 64
  %v3480 = vpop.permute.xlu0 %3479
  %v3482 = vmul.f32 %v3477, %v3480
  %3484 = vrot.lane.b32.xlu0 %v3482, 64
  %v3485 = vpop.permute.xlu0 %3484
  %v3487 = vadd.f32 %v3469, %v3485
  %v3488 = vtanh.pop %v3487
  %v3489 = vsub.f32 1.0, %v3477
  %3491 = vrot.lane.b32.xlu0 %v3488, 96
  %v3492 = vpop.permute.xlu0 %3491
  %v3494 = vmul.f32 %v3489, %v3492
  %v3495 = vmul.f32 %v3477, %v2731
  %v3496 = vadd.f32 %v3494, %v3495
  %3498 = vrot.lane.b32.xlu0 %v3496, 96
  %v3499 = vpop.permute.xlu0 %3498
  %v3500 = vsel %vm77, %v3499, 0
  %3502 = vmatprep.subr.mxu0 %v21
  %3503 = vmatpush1.msra.mxu0 %v20
  %3504 = vmatprep.subr.mxu0 %v23
  %3505 = vmatpush1.msra.mxu0 %v22
  %3506 = vmatprep.subr.mxu0 %v25
  %3507 = vmatpush1.msra.mxu0 %v24
  %3508 = vmatprep.subr.mxu0 %v27
  %3509 = vmatpush1.msra.mxu0 %v26
  %3510 = vmatprep.subr.mxu0 0.0
  %3511 = vmatpush1.msra.mxu0 0.0
  %3512 = vmatprep.subr.mxu0 0.0
  %3513 = vmatpush1.msra.mxu0 0.0
  %3514 = vmatprep.subr.mxu0 0.0
  %3515 = vmatpush1.msra.mxu0 0.0
  %3516 = vmatprep.subr.mxu0 0.0
  %3517 = vmatpush1.msra.mxu0 0.0
  %3518 = vmatprep.subr.mxu0 0.0
  %3519 = vmatpush1.msra.mxu0 0.0
  %3520 = vmatprep.subr.mxu0 0.0
  %3521 = vmatpush1.msra.mxu0 0.0
  %3522 = vmatprep.subr.mxu0 0.0
  %3523 = vmatpush1.msra.mxu0 0.0
  %3524 = vmatprep.subr.mxu0 0.0
  %3525 = vmatpush1.msra.mxu0 0.0
  %3526 = vmatprep.subr.mxu0 0.0
  %3527 = vmatpush1.msra.mxu0 0.0
  %3528 = vmatprep.subr.mxu0 0.0
  %3529 = vmatpush1.msra.mxu0 0.0
  %3530 = vmatprep.subr.mxu0 0.0
  %3531 = vmatpush1.msra.mxu0 0.0
  %3532 = vmatprep.subr.mxu0 0.0
  %3533 = vmatpush1.msra.mxu0 0.0
  %3534 = vmatprep.subr.mxu0 0.0
  %3535 = vmatpush1.msra.mxu0 0.0
  %3536 = vmatprep.subr.mxu0 0.0
  %3537 = vmatpush1.msra.mxu0 0.0
  %3538 = vmatprep.subr.mxu0 0.0
  %3539 = vmatpush1.msra.mxu0 0.0
  %3540 = vmatprep.subr.mxu0 0.0
  %3541 = vmatpush1.msra.mxu0 0.0
  %3542 = vmatprep.subr.mxu0 0.0
  %3543 = vmatpush1.msra.mxu0 0.0
  %3544 = vmatprep.subr.mxu0 0.0
  %3545 = vmatpush1.msra.mxu0 0.0
  %3546 = vmatprep.subr.mxu0 0.0
  %3547 = vmatpush1.msra.mxu0 0.0
  %3548 = vmatprep.subr.mxu0 0.0
  %3549 = vmatpush1.msra.mxu0 0.0
  %3550 = vmatprep.subr.mxu0 0.0
  %3551 = vmatpush1.msra.mxu0 0.0
  %3552 = vmatprep.subr.mxu0 0.0
  %3553 = vmatpush1.msra.mxu0 0.0
  %3554 = vmatprep.subr.mxu0 0.0
  %3555 = vmatpush1.msra.mxu0 0.0
  %3556 = vmatprep.subr.mxu0 0.0
  %3557 = vmatpush1.msra.mxu0 0.0
  %3558 = vmatprep.subr.mxu0 0.0
  %3559 = vmatpush1.msra.mxu0 0.0
  %3560 = vmatprep.subr.mxu0 0.0
  %3561 = vmatpush1.msra.mxu0 0.0
  %3562 = vmatprep.subr.mxu0 0.0
  %3563 = vmatpush1.msra.mxu0 0.0
  %3564 = vmatprep.subr.mxu0 0.0
  %3565 = vmatpush1.msra.mxu0 0.0
  %3566 = vmatprep.mubr.f32.mxu0 0.0
  %3567 = vmatmul.mubr.f32.gmra.mrb[0].mxu0 %v3500
  %v3568 = vpop.f32.mrb[0].mxu0
  %v3569 = vadd.f32 0.0, %v3568
  %v3570 = vpop.f32.mrb[0].mxu0
  %v3571 = vadd.f32 0.0, %v3570
  %3572 = vdwg.mxu0
  %v3573 = vadd.f32 %v3569, %v416
  %v3574 = vadd.f32 %v2910, %v423
  %v3575 = vadd.f32 %v3573, %v3574
  %v3576 = vxor.u32 %v3575, 2147483648
  %v3577 = vmul.f32 %v3576, 1.442695
  %v3578 = vpow.pop %v3577
  %v3579 = vadd.f32 %v3578, 1.0
  %v3580 = vrcp.pop %v3579
  %v3581 = vmul.f32 1.0, %v3580
  %3583 = vrot.lane.b32.xlu0 %v3574, 64
  %v3584 = vpop.permute.xlu0 %3583
  %v3586 = vmul.f32 %v3581, %v3584
  %3588 = vrot.lane.b32.xlu0 %v3586, 64
  %v3589 = vpop.permute.xlu0 %3588
  %v3591 = vadd.f32 %v3573, %v3589
  %v3592 = vtanh.pop %v3591
  %v3593 = vsub.f32 1.0, %v3581
  %3595 = vrot.lane.b32.xlu0 %v3592, 96
  %v3596 = vpop.permute.xlu0 %3595
  %v3598 = vmul.f32 %v3593, %v3596
  %v3599 = vmul.f32 %v3581, %v2835
  %v3600 = vadd.f32 %v3598, %v3599
  %3602 = vrot.lane.b32.xlu0 %v3600, 96
  %v3603 = vpop.permute.xlu0 %3602
  %v3604 = vsel %vm77, %v3603, 0
  %3606 = vmatprep.subr.mxu0 %v30
  %3607 = vmatpush1.msra.mxu0 %v29
  %3608 = vmatprep.subr.mxu0 %v32
  %3609 = vmatpush1.msra.mxu0 %v31
  %3610 = vmatprep.subr.mxu0 %v34
  %3611 = vmatpush1.msra.mxu0 %v33
  %3612 = vmatprep.subr.mxu0 %v36
  %3613 = vmatpush1.msra.mxu0 %v35
  %3614 = vmatprep.subr.mxu0 0.0
  %3615 = vmatpush1.msra.mxu0 0.0
  %3616 = vmatprep.subr.mxu0 0.0
  %3617 = vmatpush1.msra.mxu0 0.0
  %3618 = vmatprep.subr.mxu0 0.0
  %3619 = vmatpush1.msra.mxu0 0.0
  %3620 = vmatprep.subr.mxu0 0.0
  %3621 = vmatpush1.msra.mxu0 0.0
  %3622 = vmatprep.subr.mxu0 0.0
  %3623 = vmatpush1.msra.mxu0 0.0
  %3624 = vmatprep.subr.mxu0 0.0
  %3625 = vmatpush1.msra.mxu0 0.0
  %3626 = vmatprep.subr.mxu0 0.0
  %3627 = vmatpush1.msra.mxu0 0.0
  %3628 = vmatprep.subr.mxu0 0.0
  %3629 = vmatpush1.msra.mxu0 0.0
  %3630 = vmatprep.subr.mxu0 0.0
  %3631 = vmatpush1.msra.mxu0 0.0
  %3632 = vmatprep.subr.mxu0 0.0
  %3633 = vmatpush1.msra.mxu0 0.0
  %3634 = vmatprep.subr.mxu0 0.0
  %3635 = vmatpush1.msra.mxu0 0.0
  %3636 = vmatprep.subr.mxu0 0.0
  %3637 = vmatpush1.msra.mxu0 0.0
  %3638 = vmatprep.subr.mxu0 0.0
  %3639 = vmatpush1.msra.mxu0 0.0
  %3640 = vmatprep.subr.mxu0 0.0
  %3641 = vmatpush1.msra.mxu0 0.0
  %3642 = vmatprep.subr.mxu0 0.0
  %3643 = vmatpush1.msra.mxu0 0.0
  %3644 = vmatprep.subr.mxu0 0.0
  %3645 = vmatpush1.msra.mxu0 0.0
  %3646 = vmatprep.subr.mxu0 0.0
  %3647 = vmatpush1.msra.mxu0 0.0
  %3648 = vmatprep.subr.mxu0 0.0
  %3649 = vmatpush1.msra.mxu0 0.0
  %3650 = vmatprep.subr.mxu0 0.0
  %3651 = vmatpush1.msra.mxu0 0.0
  %3652 = vmatprep.subr.mxu0 0.0
  %3653 = vmatpush1.msra.mxu0 0.0
  %3654 = vmatprep.subr.mxu0 0.0
  %3655 = vmatpush1.msra.mxu0 0.0
  %3656 = vmatprep.subr.mxu0 0.0
  %3657 = vmatpush1.msra.mxu0 0.0
  %3658 = vmatprep.subr.mxu0 0.0
  %3659 = vmatpush1.msra.mxu0 0.0
  %3660 = vmatprep.subr.mxu0 0.0
  %3661 = vmatpush1.msra.mxu0 0.0
  %3662 = vmatprep.subr.mxu0 0.0
  %3663 = vmatpush1.msra.mxu0 0.0
  %3664 = vmatprep.subr.mxu0 0.0
  %3665 = vmatpush1.msra.mxu0 0.0
  %3666 = vmatprep.subr.mxu0 0.0
  %3667 = vmatpush1.msra.mxu0 0.0
  %3668 = vmatprep.subr.mxu0 0.0
  %3669 = vmatpush1.msra.mxu0 0.0
  %3670 = vmatprep.mubr.f32.mxu0 0.0
  %3671 = vmatmul.mubr.f32.gmra.mrb[0].mxu0 %v3604
  %v3672 = vpop.f32.mrb[0].mxu0
  %v3673 = vadd.f32 0.0, %v3672
  %v3674 = vpop.f32.mrb[0].mxu0
  %v3675 = vadd.f32 0.0, %v3674
  %3676 = vdwg.mxu0
  %v3678 = vcombine.high %v3673, %v3673
  %v3680 = vunpack.c.l.s4 1966171168
  %v3681 = vunpack.c.0.s8 %v3680
  %v3682 = vlaneseq
  %v3683 = vshrl.u32 %v3682, 7
  %v3684 = vsub.s32 %v3681, %v3683
  %v3685 = vrot.slane %v3673, %v3684
  %v3687 = vunpack.c.l.s4 1966171168
  %v3688 = vunpack.c.0.s8 %v3687
  %v3689 = vlaneseq
  %v3690 = vshrl.u32 %v3689, 7
  %v3691 = vsub.s32 %v3688, %v3690
  %v3692 = vrot.slane %v3678, %v3691
  %v3693 = vcombine.high %v3685, %v3685
  %v3694 = vcombine.high %v3692, %v3692
  %v3696 = vunpack.c.l.s4 1966171168
  %v3697 = vunpack.c.0.s8 %v3696
  %v3698 = vlaneseq
  %v3699 = vshrl.u32 %v3698, 7
  %v3700 = vsub.s32 %v3697, %v3699
  %v3701 = vrot.slane %v3685, %v3700
  %v3703 = vunpack.c.l.s4 1966171168
  %v3704 = vunpack.c.0.s8 %v3703
  %v3705 = vlaneseq
  %v3706 = vshrl.u32 %v3705, 7
  %v3707 = vsub.s32 %v3704, %v3706
  %v3708 = vrot.slane %v3692, %v3707
  %v3710 = vunpack.c.l.s4 1966171168
  %v3711 = vunpack.c.0.s8 %v3710
  %v3712 = vlaneseq
  %v3713 = vshrl.u32 %v3712, 7
  %v3714 = vsub.s32 %v3711, %v3713
  %v3715 = vrot.slane %v3693, %v3714
  %v3717 = vunpack.c.l.s4 1966171168
  %v3718 = vunpack.c.0.s8 %v3717
  %v3719 = vlaneseq
  %v3720 = vshrl.u32 %v3719, 7
  %v3721 = vsub.s32 %v3718, %v3720
  %v3722 = vrot.slane %v3694, %v3721
  %v3723 = vcombine.high %v3701, %v3701
  %v3724 = vcombine.high %v3708, %v3708
  %v3725 = vcombine.high %v3715, %v3715
  %v3726 = vcombine.high %v3722, %v3722
  %v3727 = vlaneseq
  %v3728 = vshrl.u32 %v3727, 7
  %v3729 = vsub.s32 0, %v3728
  %v3730 = vrot.slane %v3701, %v3729
  %v3731 = vlaneseq
  %v3732 = vshrl.u32 %v3731, 7
  %v3733 = vsub.s32 0, %v3732
  %v3734 = vrot.slane %v3715, %v3733
  %v3735 = vlaneseq
  %v3736 = vshrl.u32 %v3735, 7
  %v3737 = vsub.s32 0, %v3736
  %v3738 = vrot.slane %v3723, %v3737
  %v3739 = vlaneseq
  %v3740 = vshrl.u32 %v3739, 7
  %v3741 = vsub.s32 0, %v3740
  %v3742 = vrot.slane %v3725, %v3741
  %v3743 = vlaneseq
  %v3744 = vshrl.u32 %v3743, 7
  %v3745 = vsub.s32 0, %v3744
  %v3746 = vrot.slane %v3708, %v3745
  %v3747 = vlaneseq
  %v3748 = vshrl.u32 %v3747, 7
  %v3749 = vsub.s32 0, %v3748
  %v3750 = vrot.slane %v3722, %v3749
  %v3751 = vlaneseq
  %v3752 = vshrl.u32 %v3751, 7
  %v3753 = vsub.s32 0, %v3752
  %v3754 = vrot.slane %v3724, %v3753
  %v3755 = vlaneseq
  %v3756 = vshrl.u32 %v3755, 7
  %v3757 = vsub.s32 0, %v3756
  %v3758 = vrot.slane %v3726, %v3757
  %v3767 = vadd.f32 %v53, %v3730
  %v3768 = vadd.f32 %v54, %v3734
  %v3769 = vadd.f32 %v55, %v3738
  %v3770 = vadd.f32 %v56, %v3742
  %v3771 = vadd.f32 %v57, %v3746
  %v3772 = vadd.f32 %v58, %v3750
  %v3773 = vadd.f32 %v59, %v3754
  %v3774 = vadd.f32 %v60, %v3758
  %v3775 = vtanh.pop %v3767
  %v3776 = vtanh.pop %v3768
  %v3777 = vtanh.pop %v3769
  %v3778 = vtanh.pop %v3770
  %v3779 = vtanh.pop %v3771
  %v3780 = vtanh.pop %v3772
  %v3781 = vtanh.pop %v3773
  %v3782 = vtanh.pop %v3774
  %v3783 = vmul.f32 %v3775, %v641
  %v3784 = vmul.f32 %v3776, %v641
  %v3785 = vmul.f32 %v3777, %v641
  %v3786 = vmul.f32 %v3778, %v641
  %v3787 = vmul.f32 %v3779, %v641
  %v3788 = vmul.f32 %v3780, %v641
  %v3789 = vmul.f32 %v3781, %v641
  %v3790 = vmul.f32 %v3782, %v641
  %v3791 = vsel %vm77, %v3783, 0.0
  %3792 = vadd.xlane.f32.xlu0 %v3791
  %v3793 = vpop.xlane.xlu0 %3792
  %v3794 = vsel %vm77, %v3784, 0.0
  %3795 = vadd.xlane.f32.xlu0 %v3794
  %v3796 = vpop.xlane.xlu0 %3795
  %v3797 = vsel %vm77, %v3785, 0.0
  %3798 = vadd.xlane.f32.xlu0 %v3797
  %v3799 = vpop.xlane.xlu0 %3798
  %v3800 = vsel %vm77, %v3786, 0.0
  %3801 = vadd.xlane.f32.xlu0 %v3800
  %v3802 = vpop.xlane.xlu0 %3801
  %v3803 = vsel %vm77, %v3787, 0.0
  %3804 = vadd.xlane.f32.xlu0 %v3803
  %v3805 = vpop.xlane.xlu0 %3804
  %v3806 = vsel %vm77, %v3788, 0.0
  %3807 = vadd.xlane.f32.xlu0 %v3806
  %v3808 = vpop.xlane.xlu0 %3807
  %v3809 = vsel %vm77, %v3789, 0.0
  %3810 = vadd.xlane.f32.xlu0 %v3809
  %v3811 = vpop.xlane.xlu0 %3810
  %v3812 = vsel %vm77, %v3790, 0.0
  %3813 = vadd.xlane.f32.xlu0 %v3812
  %v3814 = vpop.xlane.xlu0 %3813
  %v3815 = vadd.f32 %v3793, %v682
  %v3816 = vadd.f32 %v3796, %v689
  %v3817 = vadd.f32 %v3799, %v696
  %v3818 = vadd.f32 %v3802, %v703
  %v3819 = vadd.f32 %v3805, %v710
  %v3820 = vadd.f32 %v3808, %v717
  %v3821 = vadd.f32 %v3811, %v724
  %v3822 = vadd.f32 %v3814, %v731
  %v3823 = vmul.f32 %v3815, 1.442695
  %v3824 = vpow.pop %v3823
  %v3825 = vmul.f32 %v3816, 1.442695
  %v3826 = vpow.pop %v3825
  %v3827 = vmul.f32 %v3817, 1.442695
  %v3828 = vpow.pop %v3827
  %v3829 = vmul.f32 %v3818, 1.442695
  %v3830 = vpow.pop %v3829
  %v3831 = vmul.f32 %v3819, 1.442695
  %v3832 = vpow.pop %v3831
  %v3833 = vmul.f32 %v3820, 1.442695
  %v3834 = vpow.pop %v3833
  %v3835 = vmul.f32 %v3821, 1.442695
  %v3836 = vpow.pop %v3835
  %v3837 = vmul.f32 %v3822, 1.442695
  %v3838 = vpow.pop %v3837
  %3847 = vset.pattern.permute.xlu0 0
  %3848 = vperm.xlu0 %3847, %v3824
  %v3849 = vpop.permute.xlu0 %3848
  %3850 = vset.pattern.permute.xlu0 0
  %3851 = vperm.xlu0 %3850, %v3826
  %v3852 = vpop.permute.xlu0 %3851
  %3853 = vset.pattern.permute.xlu0 0
  %3854 = vperm.xlu0 %3853, %v3828
  %v3855 = vpop.permute.xlu0 %3854
  %3856 = vset.pattern.permute.xlu0 0
  %3857 = vperm.xlu0 %3856, %v3830
  %v3858 = vpop.permute.xlu0 %3857
  %3859 = vset.pattern.permute.xlu0 0
  %3860 = vperm.xlu0 %3859, %v3832
  %v3861 = vpop.permute.xlu0 %3860
  %3862 = vset.pattern.permute.xlu0 0
  %3863 = vperm.xlu0 %3862, %v3834
  %v3864 = vpop.permute.xlu0 %3863
  %3865 = vset.pattern.permute.xlu0 0
  %3866 = vperm.xlu0 %3865, %v3836
  %v3867 = vpop.permute.xlu0 %3866
  %3868 = vset.pattern.permute.xlu0 0
  %3869 = vperm.xlu0 %3868, %v3838
  %v3870 = vpop.permute.xlu0 %3869
  %v3871 = vlaneseq
  %v3872 = vshrl.u32 %v3871, 7
  %v3873 = vsub.s32 %v797, %v3872
  %v3874 = vrot.slane %v3849, %v3873
  %v3875 = vlaneseq
  %v3876 = vshrl.u32 %v3875, 7
  %v3877 = vsub.s32 %v797, %v3876
  %v3878 = vrot.slane %v3852, %v3877
  %v3879 = vlaneseq
  %v3880 = vshrl.u32 %v3879, 7
  %v3881 = vsub.s32 %v797, %v3880
  %v3882 = vrot.slane %v3855, %v3881
  %v3883 = vlaneseq
  %v3884 = vshrl.u32 %v3883, 7
  %v3885 = vsub.s32 %v797, %v3884
  %v3886 = vrot.slane %v3858, %v3885
  %v3887 = vlaneseq
  %v3888 = vshrl.u32 %v3887, 7
  %v3889 = vsub.s32 %v797, %v3888
  %v3890 = vrot.slane %v3861, %v3889
  %v3891 = vlaneseq
  %v3892 = vshrl.u32 %v3891, 7
  %v3893 = vsub.s32 %v797, %v3892
  %v3894 = vrot.slane %v3864, %v3893
  %v3895 = vlaneseq
  %v3896 = vshrl.u32 %v3895, 7
  %v3897 = vsub.s32 %v797, %v3896
  %v3898 = vrot.slane %v3867, %v3897
  %v3899 = vlaneseq
  %v3900 = vshrl.u32 %v3899, 7
  %v3901 = vsub.s32 %v797, %v3900
  %v3902 = vrot.slane %v3870, %v3901
  %v3903 = vsel %vm830, %v3878, %v3874
  %v3904 = vsel %vm832, %v3882, %v3903
  %v3905 = vsel %vm834, %v3886, %v3904
  %v3906 = vsel %vm836, %v3890, %v3905
  %v3907 = vsel %vm838, %v3894, %v3906
  %v3908 = vsel %vm840, %v3898, %v3907
  %v3909 = vsel %vm842, %v3902, %v3908
  %v3911 = vsel %vm845, %v3909, 0.0
  %3912 = vadd.xlane.f32.xlu0 %v3911
  %v3913 = vpop.xlane.xlu0 %3912
  %v3914 = vrcp.pop %v3913
  %v3916 = vlaneseq
  %v3917 = vshrl.u32 %v3916, 7
  %v3918 = vsub.s32 0, %v3917
  %v3919 = vrot.slane %v3914, %v3918
  %v3920 = vlaneseq
  %v3921 = vshrl.u32 %v3920, 7
  %v3922 = vsub.s32 1, %v3921
  %v3923 = vrot.slane %v3914, %v3922
  %v3924 = vlaneseq
  %v3925 = vshrl.u32 %v3924, 7
  %v3926 = vsub.s32 2, %v3925
  %v3927 = vrot.slane %v3914, %v3926
  %v3928 = vlaneseq
  %v3929 = vshrl.u32 %v3928, 7
  %v3930 = vsub.s32 3, %v3929
  %v3931 = vrot.slane %v3914, %v3930
  %v3932 = vlaneseq
  %v3933 = vshrl.u32 %v3932, 7
  %v3934 = vsub.s32 4, %v3933
  %v3935 = vrot.slane %v3914, %v3934
  %v3936 = vlaneseq
  %v3937 = vshrl.u32 %v3936, 7
  %v3938 = vsub.s32 5, %v3937
  %v3939 = vrot.slane %v3914, %v3938
  %v3940 = vlaneseq
  %v3941 = vshrl.u32 %v3940, 7
  %v3942 = vsub.s32 6, %v3941
  %v3943 = vrot.slane %v3914, %v3942
  %v3944 = vlaneseq
  %v3945 = vshrl.u32 %v3944, 7
  %v3946 = vsub.s32 7, %v3945
  %v3947 = vrot.slane %v3914, %v3946
  %v3956 = vmul.f32 %v3824, %v3919
  %v3957 = vmul.f32 %v3826, %v3923
  %v3958 = vmul.f32 %v3828, %v3927
  %v3959 = vmul.f32 %v3830, %v3931
  %v3960 = vmul.f32 %v3832, %v3935
  %v3961 = vmul.f32 %v3834, %v3939
  %v3962 = vmul.f32 %v3836, %v3943
  %v3963 = vmul.f32 %v3838, %v3947
  %3965 = vset.pattern.permute.xlu0 0
  %3966 = vperm.xlu0 %3965, %v3956
  %v3967 = vpop.permute.xlu0 %3966
  %3970 = vset.pattern.permute.xlu0 0
  %3971 = vperm.xlu0 %3970, %v3957
  %v3972 = vpop.permute.xlu0 %3971
  %3975 = vset.pattern.permute.xlu0 0
  %3976 = vperm.xlu0 %3975, %v3958
  %v3977 = vpop.permute.xlu0 %3976
  %3980 = vset.pattern.permute.xlu0 0
  %3981 = vperm.xlu0 %3980, %v3959
  %v3982 = vpop.permute.xlu0 %3981
  %3985 = vset.pattern.permute.xlu0 0
  %3986 = vperm.xlu0 %3985, %v3960
  %v3987 = vpop.permute.xlu0 %3986
  %3990 = vset.pattern.permute.xlu0 0
  %3991 = vperm.xlu0 %3990, %v3961
  %v3992 = vpop.permute.xlu0 %3991
  %3995 = vset.pattern.permute.xlu0 0
  %3996 = vperm.xlu0 %3995, %v3962
  %v3997 = vpop.permute.xlu0 %3996
  %4000 = vset.pattern.permute.xlu0 0
  %4001 = vperm.xlu0 %4000, %v3963
  %v4002 = vpop.permute.xlu0 %4001
  %v4004 = vmul.f32 %v3967, %v62
  %v4005 = vmul.f32 %v3972, %v63
  %v4006 = vmul.f32 %v3977, %v64
  %v4007 = vmul.f32 %v3982, %v65
  %v4008 = vmul.f32 %v3987, %v66
  %v4009 = vmul.f32 %v3992, %v67
  %v4010 = vmul.f32 %v3997, %v68
  %v4011 = vmul.f32 %v4002, %v69
  %v4012 = vsel %vm77, %v4004, 0.0
  %v4013 = vrot.slane %v4012, 4
  %v4014 = vadd.f32 %v4012, %v4013
  %v4015 = vrot.slane %v4014, 2
  %v4016 = vadd.f32 %v4014, %v4015
  %v4017 = vrot.slane %v4016, 1
  %v4018 = vadd.f32 %v4016, %v4017
  %v4019 = vsel %vm77, %v4005, 0.0
  %v4020 = vrot.slane %v4019, 4
  %v4021 = vadd.f32 %v4019, %v4020
  %v4022 = vrot.slane %v4021, 2
  %v4023 = vadd.f32 %v4021, %v4022
  %v4024 = vrot.slane %v4023, 1
  %v4025 = vadd.f32 %v4023, %v4024
  %v4026 = vsel %vm77, %v4006, 0.0
  %v4027 = vrot.slane %v4026, 4
  %v4028 = vadd.f32 %v4026, %v4027
  %v4029 = vrot.slane %v4028, 2
  %v4030 = vadd.f32 %v4028, %v4029
  %v4031 = vrot.slane %v4030, 1
  %v4032 = vadd.f32 %v4030, %v4031
  %v4033 = vsel %vm77, %v4007, 0.0
  %v4034 = vrot.slane %v4033, 4
  %v4035 = vadd.f32 %v4033, %v4034
  %v4036 = vrot.slane %v4035, 2
  %v4037 = vadd.f32 %v4035, %v4036
  %v4038 = vrot.slane %v4037, 1
  %v4039 = vadd.f32 %v4037, %v4038
  %v4040 = vsel %vm77, %v4008, 0.0
  %v4041 = vrot.slane %v4040, 4
  %v4042 = vadd.f32 %v4040, %v4041
  %v4043 = vrot.slane %v4042, 2
  %v4044 = vadd.f32 %v4042, %v4043
  %v4045 = vrot.slane %v4044, 1
  %v4046 = vadd.f32 %v4044, %v4045
  %v4047 = vsel %vm77, %v4009, 0.0
  %v4048 = vrot.slane %v4047, 4
  %v4049 = vadd.f32 %v4047, %v4048
  %v4050 = vrot.slane %v4049, 2
  %v4051 = vadd.f32 %v4049, %v4050
  %v4052 = vrot.slane %v4051, 1
  %v4053 = vadd.f32 %v4051, %v4052
  %v4054 = vsel %vm77, %v4010, 0.0
  %v4055 = vrot.slane %v4054, 4
  %v4056 = vadd.f32 %v4054, %v4055
  %v4057 = vrot.slane %v4056, 2
  %v4058 = vadd.f32 %v4056, %v4057
  %v4059 = vrot.slane %v4058, 1
  %v4060 = vadd.f32 %v4058, %v4059
  %v4061 = vsel %vm77, %v4011, 0.0
  %v4062 = vrot.slane %v4061, 4
  %v4063 = vadd.f32 %v4061, %v4062
  %v4064 = vrot.slane %v4063, 2
  %v4065 = vadd.f32 %v4063, %v4064
  %v4066 = vrot.slane %v4065, 1
  %v4067 = vadd.f32 %v4065, %v4066
  %v4076 = vsel %vm830, %v4025, %v4018
  %v4077 = vsel %vm832, %v4032, %v4076
  %v4078 = vsel %vm834, %v4039, %v4077
  %v4079 = vsel %vm836, %v4046, %v4078
  %v4080 = vsel %vm838, %v4053, %v4079
  %v4081 = vsel %vm840, %v4060, %v4080
  %v4082 = vsel %vm842, %v4067, %v4081
  %v4083 = vsel %vm77, %v4082, 0
  %4085 = vmatprep.subr.mxu0 %v39
  %4086 = vmatpush1.msra.mxu0 %v38
  %4087 = vmatprep.subr.mxu0 %v41
  %4088 = vmatpush1.msra.mxu0 %v40
  %4089 = vmatprep.subr.mxu0 %v43
  %4090 = vmatpush1.msra.mxu0 %v42
  %4091 = vmatprep.subr.mxu0 %v45
  %4092 = vmatpush1.msra.mxu0 %v44
  %4093 = vmatprep.subr.mxu0 0.0
  %4094 = vmatpush1.msra.mxu0 0.0
  %4095 = vmatprep.subr.mxu0 0.0
  %4096 = vmatpush1.msra.mxu0 0.0
  %4097 = vmatprep.subr.mxu0 0.0
  %4098 = vmatpush1.msra.mxu0 0.0
  %4099 = vmatprep.subr.mxu0 0.0
  %4100 = vmatpush1.msra.mxu0 0.0
  %4101 = vmatprep.subr.mxu0 0.0
  %4102 = vmatpush1.msra.mxu0 0.0
  %4103 = vmatprep.subr.mxu0 0.0
  %4104 = vmatpush1.msra.mxu0 0.0
  %4105 = vmatprep.subr.mxu0 0.0
  %4106 = vmatpush1.msra.mxu0 0.0
  %4107 = vmatprep.subr.mxu0 0.0
  %4108 = vmatpush1.msra.mxu0 0.0
  %4109 = vmatprep.subr.mxu0 0.0
  %4110 = vmatpush1.msra.mxu0 0.0
  %4111 = vmatprep.subr.mxu0 0.0
  %4112 = vmatpush1.msra.mxu0 0.0
  %4113 = vmatprep.subr.mxu0 0.0
  %4114 = vmatpush1.msra.mxu0 0.0
  %4115 = vmatprep.subr.mxu0 0.0
  %4116 = vmatpush1.msra.mxu0 0.0
  %4117 = vmatprep.subr.mxu0 0.0
  %4118 = vmatpush1.msra.mxu0 0.0
  %4119 = vmatprep.subr.mxu0 0.0
  %4120 = vmatpush1.msra.mxu0 0.0
  %4121 = vmatprep.subr.mxu0 0.0
  %4122 = vmatpush1.msra.mxu0 0.0
  %4123 = vmatprep.subr.mxu0 0.0
  %4124 = vmatpush1.msra.mxu0 0.0
  %4125 = vmatprep.subr.mxu0 0.0
  %4126 = vmatpush1.msra.mxu0 0.0
  %4127 = vmatprep.subr.mxu0 0.0
  %4128 = vmatpush1.msra.mxu0 0.0
  %4129 = vmatprep.subr.mxu0 0.0
  %4130 = vmatpush1.msra.mxu0 0.0
  %4131 = vmatprep.subr.mxu0 0.0
  %4132 = vmatpush1.msra.mxu0 0.0
  %4133 = vmatprep.subr.mxu0 0.0
  %4134 = vmatpush1.msra.mxu0 0.0
  %4135 = vmatprep.subr.mxu0 0.0
  %4136 = vmatpush1.msra.mxu0 0.0
  %4137 = vmatprep.subr.mxu0 0.0
  %4138 = vmatpush1.msra.mxu0 0.0
  %4139 = vmatprep.subr.mxu0 0.0
  %4140 = vmatpush1.msra.mxu0 0.0
  %4141 = vmatprep.subr.mxu0 0.0
  %4142 = vmatpush1.msra.mxu0 0.0
  %4143 = vmatprep.subr.mxu0 0.0
  %4144 = vmatpush1.msra.mxu0 0.0
  %4145 = vmatprep.subr.mxu0 0.0
  %4146 = vmatpush1.msra.mxu0 0.0
  %4147 = vmatprep.subr.mxu0 0.0
  %4148 = vmatpush1.msra.mxu0 0.0
  %4149 = vmatprep.mubr.f32.mxu0 0.0
  %4150 = vmatmul.mubr.f32.gmra.mrb[0].mxu0 %v4083
  %v4151 = vpop.f32.mrb[0].mxu0
  %v4152 = vadd.f32 0.0, %v4151
  %v4153 = vpop.f32.mrb[0].mxu0
  %v4154 = vadd.f32 0.0, %v4153
  %4155 = vdwg.mxu0
  %v4156 = vadd.f32 %v3468, %v3673
  %v4157 = vadd.f32 %v4156, %v4154
  %4159 = vrot.lane.b32.xlu0 %v4157, 112
  %v4160 = vpop.permute.xlu0 %4159
  %v4162 = vmax.f32 %v4157, %v4160
  %v4163 = vxor.u32 %v4157, 2147483648
  %v4164 = vmul.f32 %v4163, 1.442695
  %v4165 = vpow.pop %v4164
  %v4166 = vadd.f32 %v4165, 1.0
  %v4167 = vrcp.pop %v4166
  %v4168 = vmul.f32 1.0, %v4167
  %4170 = vrot.lane.b32.xlu0 %v4162, 96
  %v4171 = vpop.permute.xlu0 %4170
  %v4173 = vlaneseq
  %v4174 = vshrl.u32 %v4173, 7
  %v4175 = vsub.s32 %v1108, %v4174
  %v4176 = vrot.slane %v3967, %v4175
  %v4177 = vlaneseq
  %v4178 = vshrl.u32 %v4177, 7
  %v4179 = vsub.s32 %v1108, %v4178
  %v4180 = vrot.slane %v3972, %v4179
  %v4181 = vlaneseq
  %v4182 = vshrl.u32 %v4181, 7
  %v4183 = vsub.s32 %v1108, %v4182
  %v4184 = vrot.slane %v3977, %v4183
  %v4185 = vlaneseq
  %v4186 = vshrl.u32 %v4185, 7
  %v4187 = vsub.s32 %v1108, %v4186
  %v4188 = vrot.slane %v3982, %v4187
  %v4189 = vlaneseq
  %v4190 = vshrl.u32 %v4189, 7
  %v4191 = vsub.s32 %v1108, %v4190
  %v4192 = vrot.slane %v3987, %v4191
  %v4193 = vlaneseq
  %v4194 = vshrl.u32 %v4193, 7
  %v4195 = vsub.s32 %v1108, %v4194
  %v4196 = vrot.slane %v3992, %v4195
  %v4197 = vlaneseq
  %v4198 = vshrl.u32 %v4197, 7
  %v4199 = vsub.s32 %v1108, %v4198
  %v4200 = vrot.slane %v3997, %v4199
  %v4201 = vlaneseq
  %v4202 = vshrl.u32 %v4201, 7
  %v4203 = vsub.s32 %v1108, %v4202
  %v4204 = vrot.slane %v4002, %v4203
  %v4205 = vsel %vm830, %v4180, %v4176
  %v4206 = vsel %vm832, %v4184, %v4205
  %v4207 = vsel %vm834, %v4188, %v4206
  %v4208 = vsel %vm836, %v4192, %v4207
  %v4209 = vsel %vm838, %v4196, %v4208
  %v4210 = vsel %vm840, %v4200, %v4209
  %v4211 = vsel %vm842, %v4204, %v4210
  %4214 = vrot.lane.b32.xlu0 %v4168, 88
  %v4215 = vpop.permute.xlu0 %4214
  %4217 = vrot.lane.b32.xlu0 %v3600, 32
  %v4218 = vpop.permute.xlu0 %4217
  %4220 = vrot.lane.b32.xlu0 %v4082, 96
  %v4221 = vpop.permute.xlu0 %4220
  %v4223 = vsel %vm1159, %v4171, %v4211
  %v4224 = vsel %vm1161, %v4223, %v4215
  %v4225 = vsel %vm1163, %v4224, 0.0
  %v4226 = vsel %vm77, %v4225, %v3496
  %v4227 = vsel %vm1166, %v4226, %v4218
  %v4228 = vsel %vm1168, %v4227, %v4221
  %s4229 = scalar_lea.vmem %s5, 32
  %4230 = vst [vmem:[%s4229] sm:$0xff] %v4228
  %s4231 = scalar_lea.vmem %s0, 80
  %v4232 = vld [vmem:[%s4231] sm:$0xff]
  %v4233 = vld [vmem:[%s4231 + $0x8] sm:$0xff]
  %v4234 = vadd.f32 %v4232, %v4152
  %v4235 = vadd.f32 %v3571, %v304
  %v4236 = vadd.f32 %v4234, %v4235
  %v4237 = vxor.u32 %v4236, 2147483648
  %v4238 = vmul.f32 %v4237, 1.442695
  %v4239 = vpow.pop %v4238
  %v4240 = vadd.f32 %v4239, 1.0
  %v4241 = vrcp.pop %v4240
  %v4242 = vmul.f32 1.0, %v4241
  %4244 = vrot.lane.b32.xlu0 %v4235, 64
  %v4245 = vpop.permute.xlu0 %4244
  %v4247 = vmul.f32 %v4242, %v4245
  %4249 = vrot.lane.b32.xlu0 %v4247, 64
  %v4250 = vpop.permute.xlu0 %4249
  %v4252 = vadd.f32 %v4234, %v4250
  %v4253 = vtanh.pop %v4252
  %v4254 = vsub.f32 1.0, %v4242
  %4256 = vrot.lane.b32.xlu0 %v4253, 96
  %v4257 = vpop.permute.xlu0 %4256
  %v4259 = vmul.f32 %v4254, %v4257
  %v4260 = vmul.f32 %v4242, %v3496
  %v4261 = vadd.f32 %v4259, %v4260
  %4263 = vrot.lane.b32.xlu0 %v4261, 96
  %v4264 = vpop.permute.xlu0 %4263
  %v4265 = vsel %vm77, %v4264, 0
  %4267 = vmatprep.subr.mxu0 %v21
  %4268 = vmatpush1.msra.mxu0 %v20
  %4269 = vmatprep.subr.mxu0 %v23
  %4270 = vmatpush1.msra.mxu0 %v22
  %4271 = vmatprep.subr.mxu0 %v25
  %4272 = vmatpush1.msra.mxu0 %v24
  %4273 = vmatprep.subr.mxu0 %v27
  %4274 = vmatpush1.msra.mxu0 %v26
  %4275 = vmatprep.subr.mxu0 0.0
  %4276 = vmatpush1.msra.mxu0 0.0
  %4277 = vmatprep.subr.mxu0 0.0
  %4278 = vmatpush1.msra.mxu0 0.0
  %4279 = vmatprep.subr.mxu0 0.0
  %4280 = vmatpush1.msra.mxu0 0.0
  %4281 = vmatprep.subr.mxu0 0.0
  %4282 = vmatpush1.msra.mxu0 0.0
  %4283 = vmatprep.subr.mxu0 0.0
  %4284 = vmatpush1.msra.mxu0 0.0
  %4285 = vmatprep.subr.mxu0 0.0
  %4286 = vmatpush1.msra.mxu0 0.0
  %4287 = vmatprep.subr.mxu0 0.0
  %4288 = vmatpush1.msra.mxu0 0.0
  %4289 = vmatprep.subr.mxu0 0.0
  %4290 = vmatpush1.msra.mxu0 0.0
  %4291 = vmatprep.subr.mxu0 0.0
  %4292 = vmatpush1.msra.mxu0 0.0
  %4293 = vmatprep.subr.mxu0 0.0
  %4294 = vmatpush1.msra.mxu0 0.0
  %4295 = vmatprep.subr.mxu0 0.0
  %4296 = vmatpush1.msra.mxu0 0.0
  %4297 = vmatprep.subr.mxu0 0.0
  %4298 = vmatpush1.msra.mxu0 0.0
  %4299 = vmatprep.subr.mxu0 0.0
  %4300 = vmatpush1.msra.mxu0 0.0
  %4301 = vmatprep.subr.mxu0 0.0
  %4302 = vmatpush1.msra.mxu0 0.0
  %4303 = vmatprep.subr.mxu0 0.0
  %4304 = vmatpush1.msra.mxu0 0.0
  %4305 = vmatprep.subr.mxu0 0.0
  %4306 = vmatpush1.msra.mxu0 0.0
  %4307 = vmatprep.subr.mxu0 0.0
  %4308 = vmatpush1.msra.mxu0 0.0
  %4309 = vmatprep.subr.mxu0 0.0
  %4310 = vmatpush1.msra.mxu0 0.0
  %4311 = vmatprep.subr.mxu0 0.0
  %4312 = vmatpush1.msra.mxu0 0.0
  %4313 = vmatprep.subr.mxu0 0.0
  %4314 = vmatpush1.msra.mxu0 0.0
  %4315 = vmatprep.subr.mxu0 0.0
  %4316 = vmatpush1.msra.mxu0 0.0
  %4317 = vmatprep.subr.mxu0 0.0
  %4318 = vmatpush1.msra.mxu0 0.0
  %4319 = vmatprep.subr.mxu0 0.0
  %4320 = vmatpush1.msra.mxu0 0.0
  %4321 = vmatprep.subr.mxu0 0.0
  %4322 = vmatpush1.msra.mxu0 0.0
  %4323 = vmatprep.subr.mxu0 0.0
  %4324 = vmatpush1.msra.mxu0 0.0
  %4325 = vmatprep.subr.mxu0 0.0
  %4326 = vmatpush1.msra.mxu0 0.0
  %4327 = vmatprep.subr.mxu0 0.0
  %4328 = vmatpush1.msra.mxu0 0.0
  %4329 = vmatprep.subr.mxu0 0.0
  %4330 = vmatpush1.msra.mxu0 0.0
  %4331 = vmatprep.mubr.f32.mxu0 0.0
  %4332 = vmatmul.mubr.f32.gmra.mrb[0].mxu0 %v4265
  %v4333 = vpop.f32.mrb[0].mxu0
  %v4334 = vadd.f32 0.0, %v4333
  %v4335 = vpop.f32.mrb[0].mxu0
  %4336 = vdwg.mxu0
  %v4337 = vadd.f32 %v4334, %v416
  %v4338 = vadd.f32 %v3675, %v423
  %v4339 = vadd.f32 %v4337, %v4338
  %v4340 = vxor.u32 %v4339, 2147483648
  %v4341 = vmul.f32 %v4340, 1.442695
  %v4342 = vpow.pop %v4341
  %v4343 = vadd.f32 %v4342, 1.0
  %v4344 = vrcp.pop %v4343
  %v4345 = vmul.f32 1.0, %v4344
  %4347 = vrot.lane.b32.xlu0 %v4338, 64
  %v4348 = vpop.permute.xlu0 %4347
  %v4350 = vmul.f32 %v4345, %v4348
  %4352 = vrot.lane.b32.xlu0 %v4350, 64
  %v4353 = vpop.permute.xlu0 %4352
  %v4355 = vadd.f32 %v4337, %v4353
  %v4356 = vtanh.pop %v4355
  %v4357 = vsub.f32 1.0, %v4345
  %4359 = vrot.lane.b32.xlu0 %v4356, 96
  %v4360 = vpop.permute.xlu0 %4359
  %v4362 = vmul.f32 %v4357, %v4360
  %v4363 = vmul.f32 %v4345, %v3600
  %v4364 = vadd.f32 %v4362, %v4363
  %4366 = vrot.lane.b32.xlu0 %v4364, 96
  %v4367 = vpop.permute.xlu0 %4366
  %v4368 = vsel %vm77, %v4367, 0
  %4370 = vmatprep.subr.mxu0 %v30
  %4371 = vmatpush1.msra.mxu0 %v29
  %4372 = vmatprep.subr.mxu0 %v32
  %4373 = vmatpush1.msra.mxu0 %v31
  %4374 = vmatprep.subr.mxu0 %v34
  %4375 = vmatpush1.msra.mxu0 %v33
  %4376 = vmatprep.subr.mxu0 %v36
  %4377 = vmatpush1.msra.mxu0 %v35
  %4378 = vmatprep.subr.mxu0 0.0
  %4379 = vmatpush1.msra.mxu0 0.0
  %4380 = vmatprep.subr.mxu0 0.0
  %4381 = vmatpush1.msra.mxu0 0.0
  %4382 = vmatprep.subr.mxu0 0.0
  %4383 = vmatpush1.msra.mxu0 0.0
  %4384 = vmatprep.subr.mxu0 0.0
  %4385 = vmatpush1.msra.mxu0 0.0
  %4386 = vmatprep.subr.mxu0 0.0
  %4387 = vmatpush1.msra.mxu0 0.0
  %4388 = vmatprep.subr.mxu0 0.0
  %4389 = vmatpush1.msra.mxu0 0.0
  %4390 = vmatprep.subr.mxu0 0.0
  %4391 = vmatpush1.msra.mxu0 0.0
  %4392 = vmatprep.subr.mxu0 0.0
  %4393 = vmatpush1.msra.mxu0 0.0
  %4394 = vmatprep.subr.mxu0 0.0
  %4395 = vmatpush1.msra.mxu0 0.0
  %4396 = vmatprep.subr.mxu0 0.0
  %4397 = vmatpush1.msra.mxu0 0.0
  %4398 = vmatprep.subr.mxu0 0.0
  %4399 = vmatpush1.msra.mxu0 0.0
  %4400 = vmatprep.subr.mxu0 0.0
  %4401 = vmatpush1.msra.mxu0 0.0
  %4402 = vmatprep.subr.mxu0 0.0
  %4403 = vmatpush1.msra.mxu0 0.0
  %4404 = vmatprep.subr.mxu0 0.0
  %4405 = vmatpush1.msra.mxu0 0.0
  %4406 = vmatprep.subr.mxu0 0.0
  %4407 = vmatpush1.msra.mxu0 0.0
  %4408 = vmatprep.subr.mxu0 0.0
  %4409 = vmatpush1.msra.mxu0 0.0
  %4410 = vmatprep.subr.mxu0 0.0
  %4411 = vmatpush1.msra.mxu0 0.0
  %4412 = vmatprep.subr.mxu0 0.0
  %4413 = vmatpush1.msra.mxu0 0.0
  %4414 = vmatprep.subr.mxu0 0.0
  %4415 = vmatpush1.msra.mxu0 0.0
  %4416 = vmatprep.subr.mxu0 0.0
  %4417 = vmatpush1.msra.mxu0 0.0
  %4418 = vmatprep.subr.mxu0 0.0
  %4419 = vmatpush1.msra.mxu0 0.0
  %4420 = vmatprep.subr.mxu0 0.0
  %4421 = vmatpush1.msra.mxu0 0.0
  %4422 = vmatprep.subr.mxu0 0.0
  %4423 = vmatpush1.msra.mxu0 0.0
  %4424 = vmatprep.subr.mxu0 0.0
  %4425 = vmatpush1.msra.mxu0 0.0
  %4426 = vmatprep.subr.mxu0 0.0
  %4427 = vmatpush1.msra.mxu0 0.0
  %4428 = vmatprep.subr.mxu0 0.0
  %4429 = vmatpush1.msra.mxu0 0.0
  %4430 = vmatprep.subr.mxu0 0.0
  %4431 = vmatpush1.msra.mxu0 0.0
  %4432 = vmatprep.subr.mxu0 0.0
  %4433 = vmatpush1.msra.mxu0 0.0
  %4434 = vmatprep.mubr.f32.mxu0 0.0
  %4435 = vmatmul.mubr.f32.gmra.mrb[0].mxu0 %v4368
  %v4436 = vpop.f32.mrb[0].mxu0
  %v4437 = vadd.f32 0.0, %v4436
  %v4438 = vpop.f32.mrb[0].mxu0
  %4439 = vdwg.mxu0
  %v4441 = vcombine.high %v4437, %v4437
  %v4443 = vunpack.c.l.s4 1966171168
  %v4444 = vunpack.c.0.s8 %v4443
  %v4445 = vlaneseq
  %v4446 = vshrl.u32 %v4445, 7
  %v4447 = vsub.s32 %v4444, %v4446
  %v4448 = vrot.slane %v4437, %v4447
  %v4450 = vunpack.c.l.s4 1966171168
  %v4451 = vunpack.c.0.s8 %v4450
  %v4452 = vlaneseq
  %v4453 = vshrl.u32 %v4452, 7
  %v4454 = vsub.s32 %v4451, %v4453
  %v4455 = vrot.slane %v4441, %v4454
  %v4456 = vcombine.high %v4448, %v4448
  %v4457 = vcombine.high %v4455, %v4455
  %v4459 = vunpack.c.l.s4 1966171168
  %v4460 = vunpack.c.0.s8 %v4459
  %v4461 = vlaneseq
  %v4462 = vshrl.u32 %v4461, 7
  %v4463 = vsub.s32 %v4460, %v4462
  %v4464 = vrot.slane %v4448, %v4463
  %v4466 = vunpack.c.l.s4 1966171168
  %v4467 = vunpack.c.0.s8 %v4466
  %v4468 = vlaneseq
  %v4469 = vshrl.u32 %v4468, 7
  %v4470 = vsub.s32 %v4467, %v4469
  %v4471 = vrot.slane %v4455, %v4470
  %v4473 = vunpack.c.l.s4 1966171168
  %v4474 = vunpack.c.0.s8 %v4473
  %v4475 = vlaneseq
  %v4476 = vshrl.u32 %v4475, 7
  %v4477 = vsub.s32 %v4474, %v4476
  %v4478 = vrot.slane %v4456, %v4477
  %v4480 = vunpack.c.l.s4 1966171168
  %v4481 = vunpack.c.0.s8 %v4480
  %v4482 = vlaneseq
  %v4483 = vshrl.u32 %v4482, 7
  %v4484 = vsub.s32 %v4481, %v4483
  %v4485 = vrot.slane %v4457, %v4484
  %v4486 = vcombine.high %v4464, %v4464
  %v4487 = vcombine.high %v4471, %v4471
  %v4488 = vcombine.high %v4478, %v4478
  %v4489 = vcombine.high %v4485, %v4485
  %v4490 = vlaneseq
  %v4491 = vshrl.u32 %v4490, 7
  %v4492 = vsub.s32 0, %v4491
  %v4493 = vrot.slane %v4464, %v4492
  %v4494 = vlaneseq
  %v4495 = vshrl.u32 %v4494, 7
  %v4496 = vsub.s32 0, %v4495
  %v4497 = vrot.slane %v4478, %v4496
  %v4498 = vlaneseq
  %v4499 = vshrl.u32 %v4498, 7
  %v4500 = vsub.s32 0, %v4499
  %v4501 = vrot.slane %v4486, %v4500
  %v4502 = vlaneseq
  %v4503 = vshrl.u32 %v4502, 7
  %v4504 = vsub.s32 0, %v4503
  %v4505 = vrot.slane %v4488, %v4504
  %v4506 = vlaneseq
  %v4507 = vshrl.u32 %v4506, 7
  %v4508 = vsub.s32 0, %v4507
  %v4509 = vrot.slane %v4471, %v4508
  %v4510 = vlaneseq
  %v4511 = vshrl.u32 %v4510, 7
  %v4512 = vsub.s32 0, %v4511
  %v4513 = vrot.slane %v4485, %v4512
  %v4514 = vlaneseq
  %v4515 = vshrl.u32 %v4514, 7
  %v4516 = vsub.s32 0, %v4515
  %v4517 = vrot.slane %v4487, %v4516
  %v4518 = vlaneseq
  %v4519 = vshrl.u32 %v4518, 7
  %v4520 = vsub.s32 0, %v4519
  %v4521 = vrot.slane %v4489, %v4520
  %v4530 = vadd.f32 %v53, %v4493
  %v4531 = vadd.f32 %v54, %v4497
  %v4532 = vadd.f32 %v55, %v4501
  %v4533 = vadd.f32 %v56, %v4505
  %v4534 = vadd.f32 %v57, %v4509
  %v4535 = vadd.f32 %v58, %v4513
  %v4536 = vadd.f32 %v59, %v4517
  %v4537 = vadd.f32 %v60, %v4521
  %v4538 = vtanh.pop %v4530
  %v4539 = vtanh.pop %v4531
  %v4540 = vtanh.pop %v4532
  %v4541 = vtanh.pop %v4533
  %v4542 = vtanh.pop %v4534
  %v4543 = vtanh.pop %v4535
  %v4544 = vtanh.pop %v4536
  %v4545 = vtanh.pop %v4537
  %v4546 = vmul.f32 %v4538, %v641
  %v4547 = vmul.f32 %v4539, %v641
  %v4548 = vmul.f32 %v4540, %v641
  %v4549 = vmul.f32 %v4541, %v641
  %v4550 = vmul.f32 %v4542, %v641
  %v4551 = vmul.f32 %v4543, %v641
  %v4552 = vmul.f32 %v4544, %v641
  %v4553 = vmul.f32 %v4545, %v641
  %v4554 = vsel %vm77, %v4546, 0.0
  %4555 = vadd.xlane.f32.xlu0 %v4554
  %v4556 = vpop.xlane.xlu0 %4555
  %v4557 = vsel %vm77, %v4547, 0.0
  %4558 = vadd.xlane.f32.xlu0 %v4557
  %v4559 = vpop.xlane.xlu0 %4558
  %v4560 = vsel %vm77, %v4548, 0.0
  %4561 = vadd.xlane.f32.xlu0 %v4560
  %v4562 = vpop.xlane.xlu0 %4561
  %v4563 = vsel %vm77, %v4549, 0.0
  %4564 = vadd.xlane.f32.xlu0 %v4563
  %v4565 = vpop.xlane.xlu0 %4564
  %v4566 = vsel %vm77, %v4550, 0.0
  %4567 = vadd.xlane.f32.xlu0 %v4566
  %v4568 = vpop.xlane.xlu0 %4567
  %v4569 = vsel %vm77, %v4551, 0.0
  %4570 = vadd.xlane.f32.xlu0 %v4569
  %v4571 = vpop.xlane.xlu0 %4570
  %v4572 = vsel %vm77, %v4552, 0.0
  %4573 = vadd.xlane.f32.xlu0 %v4572
  %v4574 = vpop.xlane.xlu0 %4573
  %v4575 = vsel %vm77, %v4553, 0.0
  %4576 = vadd.xlane.f32.xlu0 %v4575
  %v4577 = vpop.xlane.xlu0 %4576
  %v4578 = vadd.f32 %v4556, %v682
  %v4579 = vadd.f32 %v4559, %v689
  %v4580 = vadd.f32 %v4562, %v696
  %v4581 = vadd.f32 %v4565, %v703
  %v4582 = vadd.f32 %v4568, %v710
  %v4583 = vadd.f32 %v4571, %v717
  %v4584 = vadd.f32 %v4574, %v724
  %v4585 = vadd.f32 %v4577, %v731
  %v4586 = vmul.f32 %v4578, 1.442695
  %v4587 = vpow.pop %v4586
  %v4588 = vmul.f32 %v4579, 1.442695
  %v4589 = vpow.pop %v4588
  %v4590 = vmul.f32 %v4580, 1.442695
  %v4591 = vpow.pop %v4590
  %v4592 = vmul.f32 %v4581, 1.442695
  %v4593 = vpow.pop %v4592
  %v4594 = vmul.f32 %v4582, 1.442695
  %v4595 = vpow.pop %v4594
  %v4596 = vmul.f32 %v4583, 1.442695
  %v4597 = vpow.pop %v4596
  %v4598 = vmul.f32 %v4584, 1.442695
  %v4599 = vpow.pop %v4598
  %v4600 = vmul.f32 %v4585, 1.442695
  %v4601 = vpow.pop %v4600
  %4610 = vset.pattern.permute.xlu0 0
  %4611 = vperm.xlu0 %4610, %v4587
  %v4612 = vpop.permute.xlu0 %4611
  %4613 = vset.pattern.permute.xlu0 0
  %4614 = vperm.xlu0 %4613, %v4589
  %v4615 = vpop.permute.xlu0 %4614
  %4616 = vset.pattern.permute.xlu0 0
  %4617 = vperm.xlu0 %4616, %v4591
  %v4618 = vpop.permute.xlu0 %4617
  %4619 = vset.pattern.permute.xlu0 0
  %4620 = vperm.xlu0 %4619, %v4593
  %v4621 = vpop.permute.xlu0 %4620
  %4622 = vset.pattern.permute.xlu0 0
  %4623 = vperm.xlu0 %4622, %v4595
  %v4624 = vpop.permute.xlu0 %4623
  %4625 = vset.pattern.permute.xlu0 0
  %4626 = vperm.xlu0 %4625, %v4597
  %v4627 = vpop.permute.xlu0 %4626
  %4628 = vset.pattern.permute.xlu0 0
  %4629 = vperm.xlu0 %4628, %v4599
  %v4630 = vpop.permute.xlu0 %4629
  %4631 = vset.pattern.permute.xlu0 0
  %4632 = vperm.xlu0 %4631, %v4601
  %v4633 = vpop.permute.xlu0 %4632
  %v4634 = vlaneseq
  %v4635 = vshrl.u32 %v4634, 7
  %v4636 = vsub.s32 %v797, %v4635
  %v4637 = vrot.slane %v4612, %v4636
  %v4638 = vlaneseq
  %v4639 = vshrl.u32 %v4638, 7
  %v4640 = vsub.s32 %v797, %v4639
  %v4641 = vrot.slane %v4615, %v4640
  %v4642 = vlaneseq
  %v4643 = vshrl.u32 %v4642, 7
  %v4644 = vsub.s32 %v797, %v4643
  %v4645 = vrot.slane %v4618, %v4644
  %v4646 = vlaneseq
  %v4647 = vshrl.u32 %v4646, 7
  %v4648 = vsub.s32 %v797, %v4647
  %v4649 = vrot.slane %v4621, %v4648
  %v4650 = vlaneseq
  %v4651 = vshrl.u32 %v4650, 7
  %v4652 = vsub.s32 %v797, %v4651
  %v4653 = vrot.slane %v4624, %v4652
  %v4654 = vlaneseq
  %v4655 = vshrl.u32 %v4654, 7
  %v4656 = vsub.s32 %v797, %v4655
  %v4657 = vrot.slane %v4627, %v4656
  %v4658 = vlaneseq
  %v4659 = vshrl.u32 %v4658, 7
  %v4660 = vsub.s32 %v797, %v4659
  %v4661 = vrot.slane %v4630, %v4660
  %v4662 = vlaneseq
  %v4663 = vshrl.u32 %v4662, 7
  %v4664 = vsub.s32 %v797, %v4663
  %v4665 = vrot.slane %v4633, %v4664
  %v4666 = vsel %vm830, %v4641, %v4637
  %v4667 = vsel %vm832, %v4645, %v4666
  %v4668 = vsel %vm834, %v4649, %v4667
  %v4669 = vsel %vm836, %v4653, %v4668
  %v4670 = vsel %vm838, %v4657, %v4669
  %v4671 = vsel %vm840, %v4661, %v4670
  %v4672 = vsel %vm842, %v4665, %v4671
  %v4674 = vsel %vm845, %v4672, 0.0
  %4675 = vadd.xlane.f32.xlu0 %v4674
  %v4676 = vpop.xlane.xlu0 %4675
  %v4677 = vrcp.pop %v4676
  %v4679 = vlaneseq
  %v4680 = vshrl.u32 %v4679, 7
  %v4681 = vsub.s32 0, %v4680
  %v4682 = vrot.slane %v4677, %v4681
  %v4683 = vlaneseq
  %v4684 = vshrl.u32 %v4683, 7
  %v4685 = vsub.s32 1, %v4684
  %v4686 = vrot.slane %v4677, %v4685
  %v4687 = vlaneseq
  %v4688 = vshrl.u32 %v4687, 7
  %v4689 = vsub.s32 2, %v4688
  %v4690 = vrot.slane %v4677, %v4689
  %v4691 = vlaneseq
  %v4692 = vshrl.u32 %v4691, 7
  %v4693 = vsub.s32 3, %v4692
  %v4694 = vrot.slane %v4677, %v4693
  %v4695 = vlaneseq
  %v4696 = vshrl.u32 %v4695, 7
  %v4697 = vsub.s32 4, %v4696
  %v4698 = vrot.slane %v4677, %v4697
  %v4699 = vlaneseq
  %v4700 = vshrl.u32 %v4699, 7
  %v4701 = vsub.s32 5, %v4700
  %v4702 = vrot.slane %v4677, %v4701
  %v4703 = vlaneseq
  %v4704 = vshrl.u32 %v4703, 7
  %v4705 = vsub.s32 6, %v4704
  %v4706 = vrot.slane %v4677, %v4705
  %v4707 = vlaneseq
  %v4708 = vshrl.u32 %v4707, 7
  %v4709 = vsub.s32 7, %v4708
  %v4710 = vrot.slane %v4677, %v4709
  %v4719 = vmul.f32 %v4587, %v4682
  %v4720 = vmul.f32 %v4589, %v4686
  %v4721 = vmul.f32 %v4591, %v4690
  %v4722 = vmul.f32 %v4593, %v4694
  %v4723 = vmul.f32 %v4595, %v4698
  %v4724 = vmul.f32 %v4597, %v4702
  %v4725 = vmul.f32 %v4599, %v4706
  %v4726 = vmul.f32 %v4601, %v4710
  %4728 = vset.pattern.permute.xlu0 0
  %4729 = vperm.xlu0 %4728, %v4719
  %v4730 = vpop.permute.xlu0 %4729
  %4733 = vset.pattern.permute.xlu0 0
  %4734 = vperm.xlu0 %4733, %v4720
  %v4735 = vpop.permute.xlu0 %4734
  %4738 = vset.pattern.permute.xlu0 0
  %4739 = vperm.xlu0 %4738, %v4721
  %v4740 = vpop.permute.xlu0 %4739
  %4743 = vset.pattern.permute.xlu0 0
  %4744 = vperm.xlu0 %4743, %v4722
  %v4745 = vpop.permute.xlu0 %4744
  %4748 = vset.pattern.permute.xlu0 0
  %4749 = vperm.xlu0 %4748, %v4723
  %v4750 = vpop.permute.xlu0 %4749
  %4753 = vset.pattern.permute.xlu0 0
  %4754 = vperm.xlu0 %4753, %v4724
  %v4755 = vpop.permute.xlu0 %4754
  %4758 = vset.pattern.permute.xlu0 0
  %4759 = vperm.xlu0 %4758, %v4725
  %v4760 = vpop.permute.xlu0 %4759
  %4763 = vset.pattern.permute.xlu0 0
  %4764 = vperm.xlu0 %4763, %v4726
  %v4765 = vpop.permute.xlu0 %4764
  %v4767 = vmul.f32 %v4730, %v62
  %v4768 = vmul.f32 %v4735, %v63
  %v4769 = vmul.f32 %v4740, %v64
  %v4770 = vmul.f32 %v4745, %v65
  %v4771 = vmul.f32 %v4750, %v66
  %v4772 = vmul.f32 %v4755, %v67
  %v4773 = vmul.f32 %v4760, %v68
  %v4774 = vmul.f32 %v4765, %v69
  %v4775 = vsel %vm77, %v4767, 0.0
  %v4776 = vrot.slane %v4775, 4
  %v4777 = vadd.f32 %v4775, %v4776
  %v4778 = vrot.slane %v4777, 2
  %v4779 = vadd.f32 %v4777, %v4778
  %v4780 = vrot.slane %v4779, 1
  %v4781 = vadd.f32 %v4779, %v4780
  %v4782 = vsel %vm77, %v4768, 0.0
  %v4783 = vrot.slane %v4782, 4
  %v4784 = vadd.f32 %v4782, %v4783
  %v4785 = vrot.slane %v4784, 2
  %v4786 = vadd.f32 %v4784, %v4785
  %v4787 = vrot.slane %v4786, 1
  %v4788 = vadd.f32 %v4786, %v4787
  %v4789 = vsel %vm77, %v4769, 0.0
  %v4790 = vrot.slane %v4789, 4
  %v4791 = vadd.f32 %v4789, %v4790
  %v4792 = vrot.slane %v4791, 2
  %v4793 = vadd.f32 %v4791, %v4792
  %v4794 = vrot.slane %v4793, 1
  %v4795 = vadd.f32 %v4793, %v4794
  %v4796 = vsel %vm77, %v4770, 0.0
  %v4797 = vrot.slane %v4796, 4
  %v4798 = vadd.f32 %v4796, %v4797
  %v4799 = vrot.slane %v4798, 2
  %v4800 = vadd.f32 %v4798, %v4799
  %v4801 = vrot.slane %v4800, 1
  %v4802 = vadd.f32 %v4800, %v4801
  %v4803 = vsel %vm77, %v4771, 0.0
  %v4804 = vrot.slane %v4803, 4
  %v4805 = vadd.f32 %v4803, %v4804
  %v4806 = vrot.slane %v4805, 2
  %v4807 = vadd.f32 %v4805, %v4806
  %v4808 = vrot.slane %v4807, 1
  %v4809 = vadd.f32 %v4807, %v4808
  %v4810 = vsel %vm77, %v4772, 0.0
  %v4811 = vrot.slane %v4810, 4
  %v4812 = vadd.f32 %v4810, %v4811
  %v4813 = vrot.slane %v4812, 2
  %v4814 = vadd.f32 %v4812, %v4813
  %v4815 = vrot.slane %v4814, 1
  %v4816 = vadd.f32 %v4814, %v4815
  %v4817 = vsel %vm77, %v4773, 0.0
  %v4818 = vrot.slane %v4817, 4
  %v4819 = vadd.f32 %v4817, %v4818
  %v4820 = vrot.slane %v4819, 2
  %v4821 = vadd.f32 %v4819, %v4820
  %v4822 = vrot.slane %v4821, 1
  %v4823 = vadd.f32 %v4821, %v4822
  %v4824 = vsel %vm77, %v4774, 0.0
  %v4825 = vrot.slane %v4824, 4
  %v4826 = vadd.f32 %v4824, %v4825
  %v4827 = vrot.slane %v4826, 2
  %v4828 = vadd.f32 %v4826, %v4827
  %v4829 = vrot.slane %v4828, 1
  %v4830 = vadd.f32 %v4828, %v4829
  %v4839 = vsel %vm830, %v4788, %v4781
  %v4840 = vsel %vm832, %v4795, %v4839
  %v4841 = vsel %vm834, %v4802, %v4840
  %v4842 = vsel %vm836, %v4809, %v4841
  %v4843 = vsel %vm838, %v4816, %v4842
  %v4844 = vsel %vm840, %v4823, %v4843
  %v4845 = vsel %vm842, %v4830, %v4844
  %v4846 = vsel %vm77, %v4845, 0
  %4848 = vmatprep.subr.mxu0 %v39
  %4849 = vmatpush1.msra.mxu0 %v38
  %4850 = vmatprep.subr.mxu0 %v41
  %4851 = vmatpush1.msra.mxu0 %v40
  %4852 = vmatprep.subr.mxu0 %v43
  %4853 = vmatpush1.msra.mxu0 %v42
  %4854 = vmatprep.subr.mxu0 %v45
  %4855 = vmatpush1.msra.mxu0 %v44
  %4856 = vmatprep.subr.mxu0 0.0
  %4857 = vmatpush1.msra.mxu0 0.0
  %4858 = vmatprep.subr.mxu0 0.0
  %4859 = vmatpush1.msra.mxu0 0.0
  %4860 = vmatprep.subr.mxu0 0.0
  %4861 = vmatpush1.msra.mxu0 0.0
  %4862 = vmatprep.subr.mxu0 0.0
  %4863 = vmatpush1.msra.mxu0 0.0
  %4864 = vmatprep.subr.mxu0 0.0
  %4865 = vmatpush1.msra.mxu0 0.0
  %4866 = vmatprep.subr.mxu0 0.0
  %4867 = vmatpush1.msra.mxu0 0.0
  %4868 = vmatprep.subr.mxu0 0.0
  %4869 = vmatpush1.msra.mxu0 0.0
  %4870 = vmatprep.subr.mxu0 0.0
  %4871 = vmatpush1.msra.mxu0 0.0
  %4872 = vmatprep.subr.mxu0 0.0
  %4873 = vmatpush1.msra.mxu0 0.0
  %4874 = vmatprep.subr.mxu0 0.0
  %4875 = vmatpush1.msra.mxu0 0.0
  %4876 = vmatprep.subr.mxu0 0.0
  %4877 = vmatpush1.msra.mxu0 0.0
  %4878 = vmatprep.subr.mxu0 0.0
  %4879 = vmatpush1.msra.mxu0 0.0
  %4880 = vmatprep.subr.mxu0 0.0
  %4881 = vmatpush1.msra.mxu0 0.0
  %4882 = vmatprep.subr.mxu0 0.0
  %4883 = vmatpush1.msra.mxu0 0.0
  %4884 = vmatprep.subr.mxu0 0.0
  %4885 = vmatpush1.msra.mxu0 0.0
  %4886 = vmatprep.subr.mxu0 0.0
  %4887 = vmatpush1.msra.mxu0 0.0
  %4888 = vmatprep.subr.mxu0 0.0
  %4889 = vmatpush1.msra.mxu0 0.0
  %4890 = vmatprep.subr.mxu0 0.0
  %4891 = vmatpush1.msra.mxu0 0.0
  %4892 = vmatprep.subr.mxu0 0.0
  %4893 = vmatpush1.msra.mxu0 0.0
  %4894 = vmatprep.subr.mxu0 0.0
  %4895 = vmatpush1.msra.mxu0 0.0
  %4896 = vmatprep.subr.mxu0 0.0
  %4897 = vmatpush1.msra.mxu0 0.0
  %4898 = vmatprep.subr.mxu0 0.0
  %4899 = vmatpush1.msra.mxu0 0.0
  %4900 = vmatprep.subr.mxu0 0.0
  %4901 = vmatpush1.msra.mxu0 0.0
  %4902 = vmatprep.subr.mxu0 0.0
  %4903 = vmatpush1.msra.mxu0 0.0
  %4904 = vmatprep.subr.mxu0 0.0
  %4905 = vmatpush1.msra.mxu0 0.0
  %4906 = vmatprep.subr.mxu0 0.0
  %4907 = vmatpush1.msra.mxu0 0.0
  %4908 = vmatprep.subr.mxu0 0.0
  %4909 = vmatpush1.msra.mxu0 0.0
  %4910 = vmatprep.subr.mxu0 0.0
  %4911 = vmatpush1.msra.mxu0 0.0
  %4912 = vmatprep.mubr.f32.mxu0 0.0
  %4913 = vmatmul.mubr.f32.gmra.mrb[0].mxu0 %v4846
  %v4914 = vpop.f32.mrb[0].mxu0
  %v4915 = vpop.f32.mrb[0].mxu0
  %v4916 = vadd.f32 0.0, %v4915
  %4917 = vdwg.mxu0
  %v4918 = vadd.f32 %v4233, %v4437
  %v4919 = vadd.f32 %v4918, %v4916
  %4921 = vrot.lane.b32.xlu0 %v4919, 112
  %v4922 = vpop.permute.xlu0 %4921
  %v4924 = vmax.f32 %v4919, %v4922
  %v4925 = vxor.u32 %v4919, 2147483648
  %v4926 = vmul.f32 %v4925, 1.442695
  %v4927 = vpow.pop %v4926
  %v4928 = vadd.f32 %v4927, 1.0
  %v4929 = vrcp.pop %v4928
  %v4930 = vmul.f32 1.0, %v4929
  %4932 = vrot.lane.b32.xlu0 %v4924, 96
  %v4933 = vpop.permute.xlu0 %4932
  %v4935 = vlaneseq
  %v4936 = vshrl.u32 %v4935, 7
  %v4937 = vsub.s32 %v1108, %v4936
  %v4938 = vrot.slane %v4730, %v4937
  %v4939 = vlaneseq
  %v4940 = vshrl.u32 %v4939, 7
  %v4941 = vsub.s32 %v1108, %v4940
  %v4942 = vrot.slane %v4735, %v4941
  %v4943 = vlaneseq
  %v4944 = vshrl.u32 %v4943, 7
  %v4945 = vsub.s32 %v1108, %v4944
  %v4946 = vrot.slane %v4740, %v4945
  %v4947 = vlaneseq
  %v4948 = vshrl.u32 %v4947, 7
  %v4949 = vsub.s32 %v1108, %v4948
  %v4950 = vrot.slane %v4745, %v4949
  %v4951 = vlaneseq
  %v4952 = vshrl.u32 %v4951, 7
  %v4953 = vsub.s32 %v1108, %v4952
  %v4954 = vrot.slane %v4750, %v4953
  %v4955 = vlaneseq
  %v4956 = vshrl.u32 %v4955, 7
  %v4957 = vsub.s32 %v1108, %v4956
  %v4958 = vrot.slane %v4755, %v4957
  %v4959 = vlaneseq
  %v4960 = vshrl.u32 %v4959, 7
  %v4961 = vsub.s32 %v1108, %v4960
  %v4962 = vrot.slane %v4760, %v4961
  %v4963 = vlaneseq
  %v4964 = vshrl.u32 %v4963, 7
  %v4965 = vsub.s32 %v1108, %v4964
  %v4966 = vrot.slane %v4765, %v4965
  %v4967 = vsel %vm830, %v4942, %v4938
  %v4968 = vsel %vm832, %v4946, %v4967
  %v4969 = vsel %vm834, %v4950, %v4968
  %v4970 = vsel %vm836, %v4954, %v4969
  %v4971 = vsel %vm838, %v4958, %v4970
  %v4972 = vsel %vm840, %v4962, %v4971
  %v4973 = vsel %vm842, %v4966, %v4972
  %4976 = vrot.lane.b32.xlu0 %v4930, 88
  %v4977 = vpop.permute.xlu0 %4976
  %4979 = vrot.lane.b32.xlu0 %v4364, 32
  %v4980 = vpop.permute.xlu0 %4979
  %4982 = vrot.lane.b32.xlu0 %v4845, 96
  %v4983 = vpop.permute.xlu0 %4982
  %v4985 = vsel %vm1159, %v4933, %v4973
  %v4986 = vsel %vm1161, %v4985, %v4977
  %v4987 = vsel %vm1163, %v4986, 0.0
  %v4988 = vsel %vm77, %v4987, %v4261
  %v4989 = vsel %vm1166, %v4988, %v4980
  %v4990 = vsel %vm1168, %v4989, %v4983
  %s4991 = scalar_lea.vmem %s5, 40
  %4992 = vst [vmem:[%s4991] sm:$0xff] %v4990
  // Predicated region
  $region22: #{decoder_forward.1} parent=0 // pred_check
    _
  $region23: #{decoder_forward.1} parent=0 // pred_check_branch
    %4994 = sbr.rel (0) target = $region25
  $region24: #{decoder_forward.1} parent=0 // pred_region
    _
  $region25: #{decoder_forward.1} parent=0 // pred_fallthru
    _
  // Predicated region
  $region26: #{decoder_forward.1} parent=0 // pred_check
    _
  $region27: #{decoder_forward.1} parent=0 // pred_check_branch
    %4996 = sbr.rel (0) target = $region29
  $region28: #{decoder_forward.1} parent=0 // pred_region
    _
  $region29: #{decoder_forward.1} parent=0 // pred_fallthru
    _

</llo_original>
